<compile_context>
chip_gen: v7x
topology: tpu7x:2x2x1
jax: 0.10.0
libtpu: 0.0.40
codegen_flags: <defaults>
</compile_context>

<pallas_src>
import functools

import jax
import jax.numpy as jnp
from jax.experimental import pallas as pl
from jax.experimental.pallas import tpu as pltpu


# ------------------------------ Pallas kernel --------------------------------
def seq2seq_kernel(num_layers, t_src, t_trg, src_ref, trg_ref, *rest):
    """Whole Seq2Seq forward for one batch block (everything resident in VMEM).

    rest layout (refs):
      encoder stack : a0 (1,H), c0 (1,H), Whh0 (H,H),
                      then per layer l>=1: Wih_l (H,H), Whh_l (H,H), b_l (1,H)
      decoder stack : same layout
      fc_w (H,O), fc_b (1,O),
      out_ref (T_trg, bb, O),
      tops_ref scratch (T_trg*bb, H) f32

    a0 = emb_w @ Wih0 and c0 = emb_b @ Wih0 + bih0 + bhh0 are precomputed from
    the params (rank-1 embedding -> the layer-0 input matmul is eliminated);
    b_l = bih_l + bhh_l.
    """
    rest = list(rest)
    tops_ref = rest.pop()                    # VMEM scratch (T_trg*bb, H) f32
    out_ref = rest.pop()                     # output block (T_trg, bb, O) f32

    n_stack = 3 + 3 * (num_layers - 1)
    enc_refs = rest[:n_stack]
    dec_refs = rest[n_stack:2 * n_stack]
    fc_w_ref = rest[2 * n_stack]
    fc_b_ref = rest[2 * n_stack + 1]

    f32 = jnp.float32
    src = src_ref[...]                       # (bb, T_src) f32
    trg = trg_ref[...]                       # (bb, T_trg) f32
    bb = src.shape[0]

    # Hoist all weight / bias loads out of the time loops (read exactly once).
    def load_stack(refs):
        a = refs[0][...]                     # (1, H) f32
        c = refs[1][...]                     # (1, H) f32
        whh0 = refs[2][...]                  # (H, H) compute dtype
        hi = [(refs[3 + 3 * l][...],         # Wih_l (H, H)
               refs[4 + 3 * l][...],         # Whh_l (H, H)
               refs[5 + 3 * l][...])         # b_l   (1, H) f32
              for l in range(num_layers - 1)]
        return a, c, whh0, hi

    enc_a, enc_c, enc_whh0, enc_hi = load_stack(enc_refs)
    dec_a, dec_c, dec_whh0, dec_hi = load_stack(dec_refs)
    fc_w = fc_w_ref[...]                     # (H, O) compute dtype
    fc_b = fc_b_ref[...]                     # (1, O) f32

    hdim = enc_whh0.shape[0]
    cdt = enc_whh0.dtype                     # MXU operand dtype (bf16 or f32)

    # Hidden state carried encoder -> decoder, kept in f32.
    h = [jnp.zeros((bb, hdim), f32) for _ in range(num_layers)]

    def run_stack(seq, n_steps, a, c, whh0, hi, collect):
        # NOTE: the time loop is statically unrolled (T is small here).
        # TODO(synk): for long sequences switch to lax.fori_loop(unroll=small)
        # with h carried in VMEM scratch (the tops slab already makes the loop
        # body state-free).
        for t in range(n_steps):
            # Layer 0: the folded-embedding pre-activation is a single VPU
            # broadcast-mult-add; only the recurrent matmul remains.
            pre0 = seq[:, t:t + 1] * a + c
            h[0] = jnp.tanh(
                pre0 + jnp.dot(h[0].astype(cdt), whh0,
                               preferred_element_type=f32))
            x = h[0]
            # Layers 1..L-1: two dots sharing one f32 accumulator (no per-step
            # concatenate / repack on the serial critical path).
            for l in range(1, num_layers):
                wih, whh, bias = hi[l - 1]
                h[l] = jnp.tanh(
                    jnp.dot(x.astype(cdt), wih, preferred_element_type=f32)
                    + jnp.dot(h[l].astype(cdt), whh, preferred_element_type=f32)
                    + bias)
                x = h[l]
            if collect:
                # Stream the top hidden state straight into the scratch slab
                # (static slice -> no live Python-list values across steps).
                tops_ref[t * bb:(t + 1) * bb, :] = x

    # Encoder: only the final hidden state is kept.
    run_stack(src, t_src, enc_a, enc_c, enc_whh0, enc_hi, collect=False)
    # Decoder: continues from the encoder hidden state.
    run_stack(trg, t_trg, dec_a, dec_c, dec_whh0, dec_hi, collect=True)

    # Deferred output projection: one (T*bb, H) @ (H, O) matmul and a single
    # lane/sublane-dense store of the whole (T_trg, bb, O) slab.
    tops_all = tops_ref[...].astype(cdt)                      # (T_trg*bb, H)
    out = jnp.dot(tops_all, fc_w, preferred_element_type=f32) + fc_b
    out_ref[...] = out.reshape(t_trg, bb, out.shape[-1])


# ------------------------------ param prep -----------------------------------
def prepare_params(params, compute_dtype):
    """Algebraic / layout restructuring of the raw params for the kernel."""
    f32 = jnp.float32
    hi = jax.lax.Precision.HIGHEST

    def stack_prep(emb_w, emb_b, layers):
        wih0, whh0, bih0, bhh0 = layers[0]
        # Rank-1 embedding folded into layer 0:
        #   (s*emb_w + emb_b) @ Wih0 + bih0 + bhh0 == s*a + c
        a = jnp.dot(emb_w, wih0, precision=hi).astype(f32)
        c = (jnp.dot(emb_b, wih0, precision=hi) + bih0 + bhh0).astype(f32)
        flat = [a, c, whh0.astype(compute_dtype)]
        for (wih, whh, bih, bhh) in layers[1:]:
            flat += [wih.astype(compute_dtype), whh.astype(compute_dtype),
                     (bih + bhh).astype(f32)]
        return flat

    flat = []
    flat += stack_prep(params["enc_emb_w"], params["enc_emb_b"],
                       params["enc_rnn"])
    flat += stack_prep(params["dec_emb_w"], params["dec_emb_b"],
                       params["dec_rnn"])
    flat += [params["fc_w"].astype(compute_dtype),
             params["fc_b"].astype(f32)]
    return flat


# --------------------------- device-aware defaults ----------------------------
def _device_kind():
    try:
        return jax.devices()[0].device_kind.lower()
    except Exception:
        return ""


def _default_num_batch_blocks(batch):
    # v5e / v6e have a single TensorCore per chip: splitting the batch over a
    # "parallel" grid axis only re-runs the serial recurrence per block and
    # wastes MXU M-fill, so use one block.  v7x has 2 TCs: split in exactly 2
    # when the batch is big enough.
    kind = _device_kind()
    if "v7" in kind and batch >= 16 and batch % 2 == 0:
        return 2
    return 1


def _default_compute_dtype():
    # v5e has no bf16 VPU/EUP and a 128-deep MXU: f32 already maps cleanly.
    kind = _device_kind()
    if "v5" in kind and ("lite" in kind or "5e" in kind):
        return jnp.float32
    return jnp.bfloat16


# ------------------------------ forward wrapper -------------------------------
def seq2seq_forward(src, trg, params, compute_dtype=None, num_batch_blocks=None):
    B, T_src = src.shape
    _, T_trg = trg.shape
    num_layers = len(params["enc_rnn"])
    H = params["enc_rnn"][0][1].shape[0]
    O = params["fc_b"].shape[-1]

    if compute_dtype is None:
        compute_dtype = _default_compute_dtype()

    # (As in the PyTorch module, the decoder's Linear(1, input_size) embedding
    # feeds an RNN declared with input dim output_size, so input_size must
    # equal output_size.)
    prep = prepare_params(params, compute_dtype)
    flat = [src.astype(jnp.float32), trg.astype(jnp.float32)] + prep

    # Batch blocking: 1 block (bb = B) on single-TC chips, 2 blocks on v7x.
    nb = num_batch_blocks if num_batch_blocks is not None else \
        _default_num_batch_blocks(B)
    assert B % nb == 0, "batch must be divisible by the number of blocks"
    bb = B // nb
    if nb > 1:
        assert bb % 8 == 0, "per-block batch must be a multiple of 8"

    # VMEM budget from the actual requirement (weights + I/O blocks + scratch),
    # capped so it also fits v7x's 64 MiB VMEM.
    weight_bytes = sum(int(p.size) * jnp.dtype(p.dtype).itemsize for p in prep)
    io_bytes = 4 * bb * (T_src + T_trg) + 4 * T_trg * bb * O
    scratch_bytes = 4 * T_trg * bb * H
    # Weights with large footprints on v7x: single-buffer them (constant index
    # map, so no pipelining is lost).  Default/off elsewhere & for small nets.
    single_buffer_weights = ("v7" in _device_kind()) and weight_bytes > (8 << 20)
    need = (weight_bytes * (1 if single_buffer_weights else 2)
            + 2 * io_bytes + scratch_bytes)
    vmem_limit_bytes = min(need + (12 << 20), 48 << 20)
    # TODO(synk): stream weights from HBM (pl.ANY + make_async_copy) once the
    # weight footprint itself no longer fits VMEM (very large H on v7x).

    if single_buffer_weights:
        w_specs = [pl.BlockSpec(p.shape, lambda i: (0, 0),
                                pipeline_mode=pl.Buffered(1)) for p in prep]
    else:
        w_specs = [pl.BlockSpec(p.shape, lambda i: (0, 0)) for p in prep]

    in_specs = ([pl.BlockSpec((bb, T_src), lambda i: (i, 0)),
                 pl.BlockSpec((bb, T_trg), lambda i: (i, 0))]
                + w_specs)
    out_specs = pl.BlockSpec((T_trg, bb, O), lambda i: (0, i, 0))

    kernel = functools.partial(seq2seq_kernel, num_layers, T_src, T_trg)
    out_tbo = pl.pallas_call(
        kernel,
        out_shape=jax.ShapeDtypeStruct((T_trg, B, O), jnp.float32),
        grid=(nb,),
        in_specs=in_specs,
        out_specs=out_specs,
        scratch_shapes=[pltpu.VMEM((T_trg * bb, H), jnp.float32)],
        compiler_params=pltpu.CompilerParams(
            dimension_semantics=("parallel",),
            vmem_limit_bytes=vmem_limit_bytes,
        ),
    )(*flat)
    # The kernel writes (T_trg, B, O) so its store is lane/sublane-dense;
    # transpose back to the module's (B, T_trg, O) layout outside the kernel
    # (negligible at these sizes; revisit only if B*T_trg*O becomes large).
    return jnp.transpose(out_tbo, (1, 0, 2))


# ------------------------------ parameter init --------------------------------
def init_params(key, input_size, hidden_size, output_size, num_layers):
    k_h = 1.0 / jnp.sqrt(hidden_size)

    def unif(k, shape, bound):
        return jax.random.uniform(k, shape, jnp.float32, -bound, bound)

    keys = iter(jax.random.split(key, 8 + 8 * num_layers))

    def rnn_layers(in0):
        layers = []
        for l in range(num_layers):
            in_l = in0 if l == 0 else hidden_size
            wih = unif(next(keys), (in_l, hidden_size), k_h)         # W_ih^T
            whh = unif(next(keys), (hidden_size, hidden_size), k_h)  # W_hh^T
            bih = unif(next(keys), (1, hidden_size), k_h)
            bhh = unif(next(keys), (1, hidden_size), k_h)
            layers.append((wih, whh, bih, bhh))
        return layers

    return {
        # Linear(1, input_size): weight (I,1) stored as (1,I), bias (1,I)
        "enc_emb_w": unif(next(keys), (1, input_size), 1.0),
        "enc_emb_b": unif(next(keys), (1, input_size), 1.0),
        "enc_rnn": rnn_layers(input_size),
        "dec_emb_w": unif(next(keys), (1, input_size), 1.0),
        "dec_emb_b": unif(next(keys), (1, input_size), 1.0),
        # decoder rnn input dim is output_size (== input_size, as in the
        # reference module's config)
        "dec_rnn": rnn_layers(output_size),
        # Linear(H, O): weight (O,H) stored as (H,O)
        "fc_w": unif(next(keys), (hidden_size, output_size), k_h),
        "fc_b": unif(next(keys), (1, output_size), k_h),
    }


# --------------------- pure-JAX reference (semantic check) --------------------
def seq2seq_ref(src, trg, params):
    """Straightforward f32 port of the PyTorch module (no restructuring)."""
    hi = jax.lax.Precision.HIGHEST
    num_layers = len(params["enc_rnn"])
    B = src.shape[0]
    H = params["enc_rnn"][0][1].shape[0]
    h = [jnp.zeros((B, H), jnp.float32) for _ in range(num_layers)]

    def dot(x, w):
        return jnp.dot(x, w, precision=hi)

    def step(x, layers):
        for l, (wih, whh, bih, bhh) in enumerate(layers):
            h[l] = jnp.tanh(dot(x, wih) + bih + dot(h[l], whh) + bhh)
            x = h[l]
        return x

    for t in range(src.shape[1]):
        x = src[:, t:t + 1] * params["enc_emb_w"] + params["enc_emb_b"]
        step(x, params["enc_rnn"])

    outs = []
    for t in range(trg.shape[1]):
        x = trg[:, t:t + 1] * params["dec_emb_w"] + params["dec_emb_b"]
        top = step(x, params["dec_rnn"])
        outs.append(dot(top, params["fc_w"]) + params["fc_b"])
    return jnp.stack(outs, axis=1)


if __name__ == "__main__":
    # Small config consistent with the module's shape relations
    # (input_size == output_size required by the decoder wiring).
    B, T_SRC, T_TRG = 8, 8, 8
    INPUT_SIZE = OUTPUT_SIZE = 256
    HIDDEN_SIZE = 128
    NUM_LAYERS = 2

    key = jax.random.PRNGKey(0)
    kp, ks, kt = jax.random.split(key, 3)
    params = init_params(kp, INPUT_SIZE, HIDDEN_SIZE, OUTPUT_SIZE, NUM_LAYERS)
    src = jax.random.uniform(ks, (B, T_SRC), jnp.float32)
    trg = jax.random.uniform(kt, (B, T_TRG), jnp.float32)

    ref = seq2seq_ref(src, trg, params)
    ref_scale = float(jnp.max(jnp.abs(ref)))

    # f32 compute path: tight semantic check against the plain reference.
    out_f32 = seq2seq_forward(src, trg, params, compute_dtype=jnp.float32)
    out_f32 = jax.block_until_ready(out_f32)
    assert out_f32.shape == (B, T_TRG, OUTPUT_SIZE)
    err_f32 = float(jnp.max(jnp.abs(out_f32 - ref)))
    # (in-kernel f32 dots use default MXU precision, not precision=HIGHEST)
    assert jnp.allclose(out_f32, ref, atol=5e-3, rtol=5e-3), err_f32

    # bf16-weight path (v6e/v7x MXU recommendation): loose-tolerance check
    # against the same reference (bf16 rounding compounds through the
    # tanh-bounded recurrence, so the tolerance is coarse but meaningful).
    out_bf16 = seq2seq_forward(src, trg, params, compute_dtype=jnp.bfloat16)
    out_bf16 = jax.block_until_ready(out_bf16)
    assert out_bf16.shape == (B, T_TRG, OUTPUT_SIZE)
    assert bool(jnp.isfinite(out_bf16).all())
    err_bf16 = float(jnp.max(jnp.abs(out_bf16 - ref)))
    assert err_bf16 <= 0.1 * ref_scale + 0.1, err_bf16

    # Default (device-aware dtype / blocking) path.
    out_auto = seq2seq_forward(src, trg, params)
    out_auto = jax.block_until_ready(out_auto)
    assert out_auto.shape == (B, T_TRG, OUTPUT_SIZE)

    print("KERNEL_OK")
</pallas_src>

<mosaic_0001>
module attributes {stable_mosaic.version = 11 : i64} {
  func.func @seq2seq_kernel(%arg0: i32, %arg1: memref<8x8xf32, #tpu.memory_space<vmem>>, %arg2: memref<8x8xf32, #tpu.memory_space<vmem>>, %arg3: memref<1x128xf32, #tpu.memory_space<vmem>>, %arg4: memref<1x128xf32, #tpu.memory_space<vmem>>, %arg5: memref<128x128xf32, #tpu.memory_space<vmem>>, %arg6: memref<128x128xf32, #tpu.memory_space<vmem>>, %arg7: memref<128x128xf32, #tpu.memory_space<vmem>>, %arg8: memref<1x128xf32, #tpu.memory_space<vmem>>, %arg9: memref<1x128xf32, #tpu.memory_space<vmem>>, %arg10: memref<1x128xf32, #tpu.memory_space<vmem>>, %arg11: memref<128x128xf32, #tpu.memory_space<vmem>>, %arg12: memref<128x128xf32, #tpu.memory_space<vmem>>, %arg13: memref<128x128xf32, #tpu.memory_space<vmem>>, %arg14: memref<1x128xf32, #tpu.memory_space<vmem>>, %arg15: memref<128x256xf32, #tpu.memory_space<vmem>>, %arg16: memref<1x256xf32, #tpu.memory_space<vmem>>, %arg17: memref<8x8x256xf32, #tpu.memory_space<vmem>>, %arg18: memref<64x128xf32, #tpu.memory_space<vmem>>) attributes {dimension_semantics = [#tpu.dimension_semantics<parallel>], iteration_bounds = array<i64: 1>, scalar_prefetch = 0 : i64, scratch_operands = 1 : i64, tpu.core_type = #tpu.core_type<tc>, window_params = [{transform_indices = @transform_0, window_bounds = array<i64: 8, 8>}, {transform_indices = @transform_1, window_bounds = array<i64: 8, 8>}, {pipeline_mode = #tpu.pipeline_mode<synchronous>, transform_indices = @transform_2, window_bounds = array<i64: 1, 128>}, {pipeline_mode = #tpu.pipeline_mode<synchronous>, transform_indices = @transform_3, window_bounds = array<i64: 1, 128>}, {pipeline_mode = #tpu.pipeline_mode<synchronous>, transform_indices = @transform_4, window_bounds = array<i64: 128, 128>}, {pipeline_mode = #tpu.pipeline_mode<synchronous>, transform_indices = @transform_5, window_bounds = array<i64: 128, 128>}, {pipeline_mode = #tpu.pipeline_mode<synchronous>, transform_indices = @transform_6, window_bounds = array<i64: 128, 128>}, {pipeline_mode = #tpu.pipeline_mode<synchronous>, transform_indices = @transform_7, window_bounds = array<i64: 1, 128>}, {pipeline_mode = #tpu.pipeline_mode<synchronous>, transform_indices = @transform_8, window_bounds = array<i64: 1, 128>}, {pipeline_mode = #tpu.pipeline_mode<synchronous>, transform_indices = @transform_9, window_bounds = array<i64: 1, 128>}, {pipeline_mode = #tpu.pipeline_mode<synchronous>, transform_indices = @transform_10, window_bounds = array<i64: 128, 128>}, {pipeline_mode = #tpu.pipeline_mode<synchronous>, transform_indices = @transform_11, window_bounds = array<i64: 128, 128>}, {pipeline_mode = #tpu.pipeline_mode<synchronous>, transform_indices = @transform_12, window_bounds = array<i64: 128, 128>}, {pipeline_mode = #tpu.pipeline_mode<synchronous>, transform_indices = @transform_13, window_bounds = array<i64: 1, 128>}, {pipeline_mode = #tpu.pipeline_mode<synchronous>, transform_indices = @transform_14, window_bounds = array<i64: 128, 256>}, {pipeline_mode = #tpu.pipeline_mode<synchronous>, transform_indices = @transform_15, window_bounds = array<i64: 1, 256>}, {transform_indices = @transform_16, window_bounds = array<i64: 8, 8, 256>}]} {
    %c0 = arith.constant 0 : index
    %c0_0 = arith.constant 0 : index
    %0 = vector.load %arg1[%c0, %c0_0] : memref<8x8xf32, #tpu.memory_space<vmem>>, vector<8x8xf32>
    %c0_1 = arith.constant 0 : index
    %c0_2 = arith.constant 0 : index
    %1 = vector.load %arg2[%c0_1, %c0_2] : memref<8x8xf32, #tpu.memory_space<vmem>>, vector<8x8xf32>
    %c0_3 = arith.constant 0 : index
    %c0_4 = arith.constant 0 : index
    %2 = vector.load %arg3[%c0_3, %c0_4] : memref<1x128xf32, #tpu.memory_space<vmem>>, vector<1x128xf32>
    %c0_5 = arith.constant 0 : index
    %c0_6 = arith.constant 0 : index
    %3 = vector.load %arg4[%c0_5, %c0_6] : memref<1x128xf32, #tpu.memory_space<vmem>>, vector<1x128xf32>
    %c0_7 = arith.constant 0 : index
    %c0_8 = arith.constant 0 : index
    %4 = vector.load %arg5[%c0_7, %c0_8] : memref<128x128xf32, #tpu.memory_space<vmem>>, vector<128x128xf32>
    %c0_9 = arith.constant 0 : index
    %c0_10 = arith.constant 0 : index
    %5 = vector.load %arg6[%c0_9, %c0_10] : memref<128x128xf32, #tpu.memory_space<vmem>>, vector<128x128xf32>
    %c0_11 = arith.constant 0 : index
    %c0_12 = arith.constant 0 : index
    %6 = vector.load %arg7[%c0_11, %c0_12] : memref<128x128xf32, #tpu.memory_space<vmem>>, vector<128x128xf32>
    %c0_13 = arith.constant 0 : index
    %c0_14 = arith.constant 0 : index
    %7 = vector.load %arg8[%c0_13, %c0_14] : memref<1x128xf32, #tpu.memory_space<vmem>>, vector<1x128xf32>
    %c0_15 = arith.constant 0 : index
    %c0_16 = arith.constant 0 : index
    %8 = vector.load %arg9[%c0_15, %c0_16] : memref<1x128xf32, #tpu.memory_space<vmem>>, vector<1x128xf32>
    %c0_17 = arith.constant 0 : index
    %c0_18 = arith.constant 0 : index
    %9 = vector.load %arg10[%c0_17, %c0_18] : memref<1x128xf32, #tpu.memory_space<vmem>>, vector<1x128xf32>
    %c0_19 = arith.constant 0 : index
    %c0_20 = arith.constant 0 : index
    %10 = vector.load %arg11[%c0_19, %c0_20] : memref<128x128xf32, #tpu.memory_space<vmem>>, vector<128x128xf32>
    %c0_21 = arith.constant 0 : index
    %c0_22 = arith.constant 0 : index
    %11 = vector.load %arg12[%c0_21, %c0_22] : memref<128x128xf32, #tpu.memory_space<vmem>>, vector<128x128xf32>
    %c0_23 = arith.constant 0 : index
    %c0_24 = arith.constant 0 : index
    %12 = vector.load %arg13[%c0_23, %c0_24] : memref<128x128xf32, #tpu.memory_space<vmem>>, vector<128x128xf32>
    %c0_25 = arith.constant 0 : index
    %c0_26 = arith.constant 0 : index
    %13 = vector.load %arg14[%c0_25, %c0_26] : memref<1x128xf32, #tpu.memory_space<vmem>>, vector<1x128xf32>
    %c0_27 = arith.constant 0 : index
    %c0_28 = arith.constant 0 : index
    %14 = vector.load %arg15[%c0_27, %c0_28] : memref<128x256xf32, #tpu.memory_space<vmem>>, vector<128x256xf32>
    %c0_29 = arith.constant 0 : index
    %c0_30 = arith.constant 0 : index
    %15 = vector.load %arg16[%c0_29, %c0_30] : memref<1x256xf32, #tpu.memory_space<vmem>>, vector<1x256xf32>
    %cst = arith.constant 0.000000e+00 : f32
    %16 = vector.broadcast %cst : f32 to vector<8x128xf32>
    %cst_31 = arith.constant 0.000000e+00 : f32
    %17 = vector.broadcast %cst_31 : f32 to vector<8x128xf32>
    %18 = vector.extract_strided_slice %0 {offsets = [0, 0], sizes = [8, 1], strides = [1, 1]} : vector<8x8xf32> to vector<8x1xf32>
    %19 = vector.broadcast %18 : vector<8x1xf32> to vector<8x128xf32>
    %20 = vector.broadcast %2 : vector<1x128xf32> to vector<8x128xf32>
    %21 = arith.mulf %19, %20 : vector<8x128xf32>
    %22 = vector.broadcast %3 : vector<1x128xf32> to vector<8x128xf32>
    %23 = arith.addf %21, %22 : vector<8x128xf32>
    %cst_32 = arith.constant dense<0.000000e+00> : vector<8x128xf32>
    %24 = tpu.matmul %16, %4, %cst_32 {dimension_numbers = #tpu.dot_dimension_numbers<[1], [0], [0], [1], [0, 0, 1, 1], [], []>} : vector<8x128xf32>, vector<128x128xf32>, vector<8x128xf32> -> vector<8x128xf32>
    %25 = arith.addf %23, %24 : vector<8x128xf32>
    %26 = math.tanh %25 : vector<8x128xf32>
    %cst_33 = arith.constant dense<0.000000e+00> : vector<8x128xf32>
    %27 = tpu.matmul %26, %5, %cst_33 {dimension_numbers = #tpu.dot_dimension_numbers<[1], [0], [0], [1], [0, 0, 1, 1], [], []>} : vector<8x128xf32>, vector<128x128xf32>, vector<8x128xf32> -> vector<8x128xf32>
    %cst_34 = arith.constant dense<0.000000e+00> : vector<8x128xf32>
    %28 = tpu.matmul %17, %6, %cst_34 {dimension_numbers = #tpu.dot_dimension_numbers<[1], [0], [0], [1], [0, 0, 1, 1], [], []>} : vector<8x128xf32>, vector<128x128xf32>, vector<8x128xf32> -> vector<8x128xf32>
    %29 = arith.addf %27, %28 : vector<8x128xf32>
    %30 = vector.broadcast %7 : vector<1x128xf32> to vector<8x128xf32>
    %31 = arith.addf %29, %30 : vector<8x128xf32>
    %32 = math.tanh %31 : vector<8x128xf32>
    %33 = vector.extract_strided_slice %0 {offsets = [0, 1], sizes = [8, 1], strides = [1, 1]} : vector<8x8xf32> to vector<8x1xf32>
    %34 = vector.broadcast %33 : vector<8x1xf32> to vector<8x128xf32>
    %35 = vector.broadcast %2 : vector<1x128xf32> to vector<8x128xf32>
    %36 = arith.mulf %34, %35 : vector<8x128xf32>
    %37 = vector.broadcast %3 : vector<1x128xf32> to vector<8x128xf32>
    %38 = arith.addf %36, %37 : vector<8x128xf32>
    %cst_35 = arith.constant dense<0.000000e+00> : vector<8x128xf32>
    %39 = tpu.matmul %26, %4, %cst_35 {dimension_numbers = #tpu.dot_dimension_numbers<[1], [0], [0], [1], [0, 0, 1, 1], [], []>} : vector<8x128xf32>, vector<128x128xf32>, vector<8x128xf32> -> vector<8x128xf32>
    %40 = arith.addf %38, %39 : vector<8x128xf32>
    %41 = math.tanh %40 : vector<8x128xf32>
    %cst_36 = arith.constant dense<0.000000e+00> : vector<8x128xf32>
    %42 = tpu.matmul %41, %5, %cst_36 {dimension_numbers = #tpu.dot_dimension_numbers<[1], [0], [0], [1], [0, 0, 1, 1], [], []>} : vector<8x128xf32>, vector<128x128xf32>, vector<8x128xf32> -> vector<8x128xf32>
    %cst_37 = arith.constant dense<0.000000e+00> : vector<8x128xf32>
    %43 = tpu.matmul %32, %6, %cst_37 {dimension_numbers = #tpu.dot_dimension_numbers<[1], [0], [0], [1], [0, 0, 1, 1], [], []>} : vector<8x128xf32>, vector<128x128xf32>, vector<8x128xf32> -> vector<8x128xf32>
    %44 = arith.addf %42, %43 : vector<8x128xf32>
    %45 = vector.broadcast %7 : vector<1x128xf32> to vector<8x128xf32>
    %46 = arith.addf %44, %45 : vector<8x128xf32>
    %47 = math.tanh %46 : vector<8x128xf32>
    %48 = vector.extract_strided_slice %0 {offsets = [0, 2], sizes = [8, 1], strides = [1, 1]} : vector<8x8xf32> to vector<8x1xf32>
    %49 = vector.broadcast %48 : vector<8x1xf32> to vector<8x128xf32>
    %50 = vector.broadcast %2 : vector<1x128xf32> to vector<8x128xf32>
    %51 = arith.mulf %49, %50 : vector<8x128xf32>
    %52 = vector.broadcast %3 : vector<1x128xf32> to vector<8x128xf32>
    %53 = arith.addf %51, %52 : vector<8x128xf32>
    %cst_38 = arith.constant dense<0.000000e+00> : vector<8x128xf32>
    %54 = tpu.matmul %41, %4, %cst_38 {dimension_numbers = #tpu.dot_dimension_numbers<[1], [0], [0], [1], [0, 0, 1, 1], [], []>} : vector<8x128xf32>, vector<128x128xf32>, vector<8x128xf32> -> vector<8x128xf32>
    %55 = arith.addf %53, %54 : vector<8x128xf32>
    %56 = math.tanh %55 : vector<8x128xf32>
    %cst_39 = arith.constant dense<0.000000e+00> : vector<8x128xf32>
    %57 = tpu.matmul %56, %5, %cst_39 {dimension_numbers = #tpu.dot_dimension_numbers<[1], [0], [0], [1], [0, 0, 1, 1], [], []>} : vector<8x128xf32>, vector<128x128xf32>, vector<8x128xf32> -> vector<8x128xf32>
    %cst_40 = arith.constant dense<0.000000e+00> : vector<8x128xf32>
    %58 = tpu.matmul %47, %6, %cst_40 {dimension_numbers = #tpu.dot_dimension_numbers<[1], [0], [0], [1], [0, 0, 1, 1], [], []>} : vector<8x128xf32>, vector<128x128xf32>, vector<8x128xf32> -> vector<8x128xf32>
    %59 = arith.addf %57, %58 : vector<8x128xf32>
    %60 = vector.broadcast %7 : vector<1x128xf32> to vector<8x128xf32>
    %61 = arith.addf %59, %60 : vector<8x128xf32>
    %62 = math.tanh %61 : vector<8x128xf32>
    %63 = vector.extract_strided_slice %0 {offsets = [0, 3], sizes = [8, 1], strides = [1, 1]} : vector<8x8xf32> to vector<8x1xf32>
    %64 = vector.broadcast %63 : vector<8x1xf32> to vector<8x128xf32>
    %65 = vector.broadcast %2 : vector<1x128xf32> to vector<8x128xf32>
    %66 = arith.mulf %64, %65 : vector<8x128xf32>
    %67 = vector.broadcast %3 : vector<1x128xf32> to vector<8x128xf32>
    %68 = arith.addf %66, %67 : vector<8x128xf32>
    %cst_41 = arith.constant dense<0.000000e+00> : vector<8x128xf32>
    %69 = tpu.matmul %56, %4, %cst_41 {dimension_numbers = #tpu.dot_dimension_numbers<[1], [0], [0], [1], [0, 0, 1, 1], [], []>} : vector<8x128xf32>, vector<128x128xf32>, vector<8x128xf32> -> vector<8x128xf32>
    %70 = arith.addf %68, %69 : vector<8x128xf32>
    %71 = math.tanh %70 : vector<8x128xf32>
    %cst_42 = arith.constant dense<0.000000e+00> : vector<8x128xf32>
    %72 = tpu.matmul %71, %5, %cst_42 {dimension_numbers = #tpu.dot_dimension_numbers<[1], [0], [0], [1], [0, 0, 1, 1], [], []>} : vector<8x128xf32>, vector<128x128xf32>, vector<8x128xf32> -> vector<8x128xf32>
    %cst_43 = arith.constant dense<0.000000e+00> : vector<8x128xf32>
    %73 = tpu.matmul %62, %6, %cst_43 {dimension_numbers = #tpu.dot_dimension_numbers<[1], [0], [0], [1], [0, 0, 1, 1], [], []>} : vector<8x128xf32>, vector<128x128xf32>, vector<8x128xf32> -> vector<8x128xf32>
    %74 = arith.addf %72, %73 : vector<8x128xf32>
    %75 = vector.broadcast %7 : vector<1x128xf32> to vector<8x128xf32>
    %76 = arith.addf %74, %75 : vector<8x128xf32>
    %77 = math.tanh %76 : vector<8x128xf32>
    %78 = vector.extract_strided_slice %0 {offsets = [0, 4], sizes = [8, 1], strides = [1, 1]} : vector<8x8xf32> to vector<8x1xf32>
    %79 = vector.broadcast %78 : vector<8x1xf32> to vector<8x128xf32>
    %80 = vector.broadcast %2 : vector<1x128xf32> to vector<8x128xf32>
    %81 = arith.mulf %79, %80 : vector<8x128xf32>
    %82 = vector.broadcast %3 : vector<1x128xf32> to vector<8x128xf32>
    %83 = arith.addf %81, %82 : vector<8x128xf32>
    %cst_44 = arith.constant dense<0.000000e+00> : vector<8x128xf32>
    %84 = tpu.matmul %71, %4, %cst_44 {dimension_numbers = #tpu.dot_dimension_numbers<[1], [0], [0], [1], [0, 0, 1, 1], [], []>} : vector<8x128xf32>, vector<128x128xf32>, vector<8x128xf32> -> vector<8x128xf32>
    %85 = arith.addf %83, %84 : vector<8x128xf32>
    %86 = math.tanh %85 : vector<8x128xf32>
    %cst_45 = arith.constant dense<0.000000e+00> : vector<8x128xf32>
    %87 = tpu.matmul %86, %5, %cst_45 {dimension_numbers = #tpu.dot_dimension_numbers<[1], [0], [0], [1], [0, 0, 1, 1], [], []>} : vector<8x128xf32>, vector<128x128xf32>, vector<8x128xf32> -> vector<8x128xf32>
    %cst_46 = arith.constant dense<0.000000e+00> : vector<8x128xf32>
    %88 = tpu.matmul %77, %6, %cst_46 {dimension_numbers = #tpu.dot_dimension_numbers<[1], [0], [0], [1], [0, 0, 1, 1], [], []>} : vector<8x128xf32>, vector<128x128xf32>, vector<8x128xf32> -> vector<8x128xf32>
    %89 = arith.addf %87, %88 : vector<8x128xf32>
    %90 = vector.broadcast %7 : vector<1x128xf32> to vector<8x128xf32>
    %91 = arith.addf %89, %90 : vector<8x128xf32>
    %92 = math.tanh %91 : vector<8x128xf32>
    %93 = vector.extract_strided_slice %0 {offsets = [0, 5], sizes = [8, 1], strides = [1, 1]} : vector<8x8xf32> to vector<8x1xf32>
    %94 = vector.broadcast %93 : vector<8x1xf32> to vector<8x128xf32>
    %95 = vector.broadcast %2 : vector<1x128xf32> to vector<8x128xf32>
    %96 = arith.mulf %94, %95 : vector<8x128xf32>
    %97 = vector.broadcast %3 : vector<1x128xf32> to vector<8x128xf32>
    %98 = arith.addf %96, %97 : vector<8x128xf32>
    %cst_47 = arith.constant dense<0.000000e+00> : vector<8x128xf32>
    %99 = tpu.matmul %86, %4, %cst_47 {dimension_numbers = #tpu.dot_dimension_numbers<[1], [0], [0], [1], [0, 0, 1, 1], [], []>} : vector<8x128xf32>, vector<128x128xf32>, vector<8x128xf32> -> vector<8x128xf32>
    %100 = arith.addf %98, %99 : vector<8x128xf32>
    %101 = math.tanh %100 : vector<8x128xf32>
    %cst_48 = arith.constant dense<0.000000e+00> : vector<8x128xf32>
    %102 = tpu.matmul %101, %5, %cst_48 {dimension_numbers = #tpu.dot_dimension_numbers<[1], [0], [0], [1], [0, 0, 1, 1], [], []>} : vector<8x128xf32>, vector<128x128xf32>, vector<8x128xf32> -> vector<8x128xf32>
    %cst_49 = arith.constant dense<0.000000e+00> : vector<8x128xf32>
    %103 = tpu.matmul %92, %6, %cst_49 {dimension_numbers = #tpu.dot_dimension_numbers<[1], [0], [0], [1], [0, 0, 1, 1], [], []>} : vector<8x128xf32>, vector<128x128xf32>, vector<8x128xf32> -> vector<8x128xf32>
    %104 = arith.addf %102, %103 : vector<8x128xf32>
    %105 = vector.broadcast %7 : vector<1x128xf32> to vector<8x128xf32>
    %106 = arith.addf %104, %105 : vector<8x128xf32>
    %107 = math.tanh %106 : vector<8x128xf32>
    %108 = vector.extract_strided_slice %0 {offsets = [0, 6], sizes = [8, 1], strides = [1, 1]} : vector<8x8xf32> to vector<8x1xf32>
    %109 = vector.broadcast %108 : vector<8x1xf32> to vector<8x128xf32>
    %110 = vector.broadcast %2 : vector<1x128xf32> to vector<8x128xf32>
    %111 = arith.mulf %109, %110 : vector<8x128xf32>
    %112 = vector.broadcast %3 : vector<1x128xf32> to vector<8x128xf32>
    %113 = arith.addf %111, %112 : vector<8x128xf32>
    %cst_50 = arith.constant dense<0.000000e+00> : vector<8x128xf32>
    %114 = tpu.matmul %101, %4, %cst_50 {dimension_numbers = #tpu.dot_dimension_numbers<[1], [0], [0], [1], [0, 0, 1, 1], [], []>} : vector<8x128xf32>, vector<128x128xf32>, vector<8x128xf32> -> vector<8x128xf32>
    %115 = arith.addf %113, %114 : vector<8x128xf32>
    %116 = math.tanh %115 : vector<8x128xf32>
    %cst_51 = arith.constant dense<0.000000e+00> : vector<8x128xf32>
    %117 = tpu.matmul %116, %5, %cst_51 {dimension_numbers = #tpu.dot_dimension_numbers<[1], [0], [0], [1], [0, 0, 1, 1], [], []>} : vector<8x128xf32>, vector<128x128xf32>, vector<8x128xf32> -> vector<8x128xf32>
    %cst_52 = arith.constant dense<0.000000e+00> : vector<8x128xf32>
    %118 = tpu.matmul %107, %6, %cst_52 {dimension_numbers = #tpu.dot_dimension_numbers<[1], [0], [0], [1], [0, 0, 1, 1], [], []>} : vector<8x128xf32>, vector<128x128xf32>, vector<8x128xf32> -> vector<8x128xf32>
    %119 = arith.addf %117, %118 : vector<8x128xf32>
    %120 = vector.broadcast %7 : vector<1x128xf32> to vector<8x128xf32>
    %121 = arith.addf %119, %120 : vector<8x128xf32>
    %122 = math.tanh %121 : vector<8x128xf32>
    %123 = vector.extract_strided_slice %0 {offsets = [0, 7], sizes = [8, 1], strides = [1, 1]} : vector<8x8xf32> to vector<8x1xf32>
    %124 = vector.broadcast %123 : vector<8x1xf32> to vector<8x128xf32>
    %125 = vector.broadcast %2 : vector<1x128xf32> to vector<8x128xf32>
    %126 = arith.mulf %124, %125 : vector<8x128xf32>
    %127 = vector.broadcast %3 : vector<1x128xf32> to vector<8x128xf32>
    %128 = arith.addf %126, %127 : vector<8x128xf32>
    %cst_53 = arith.constant dense<0.000000e+00> : vector<8x128xf32>
    %129 = tpu.matmul %116, %4, %cst_53 {dimension_numbers = #tpu.dot_dimension_numbers<[1], [0], [0], [1], [0, 0, 1, 1], [], []>} : vector<8x128xf32>, vector<128x128xf32>, vector<8x128xf32> -> vector<8x128xf32>
    %130 = arith.addf %128, %129 : vector<8x128xf32>
    %131 = math.tanh %130 : vector<8x128xf32>
    %cst_54 = arith.constant dense<0.000000e+00> : vector<8x128xf32>
    %132 = tpu.matmul %131, %5, %cst_54 {dimension_numbers = #tpu.dot_dimension_numbers<[1], [0], [0], [1], [0, 0, 1, 1], [], []>} : vector<8x128xf32>, vector<128x128xf32>, vector<8x128xf32> -> vector<8x128xf32>
    %cst_55 = arith.constant dense<0.000000e+00> : vector<8x128xf32>
    %133 = tpu.matmul %122, %6, %cst_55 {dimension_numbers = #tpu.dot_dimension_numbers<[1], [0], [0], [1], [0, 0, 1, 1], [], []>} : vector<8x128xf32>, vector<128x128xf32>, vector<8x128xf32> -> vector<8x128xf32>
    %134 = arith.addf %132, %133 : vector<8x128xf32>
    %135 = vector.broadcast %7 : vector<1x128xf32> to vector<8x128xf32>
    %136 = arith.addf %134, %135 : vector<8x128xf32>
    %137 = math.tanh %136 : vector<8x128xf32>
    %138 = vector.extract_strided_slice %1 {offsets = [0, 0], sizes = [8, 1], strides = [1, 1]} : vector<8x8xf32> to vector<8x1xf32>
    %139 = vector.broadcast %138 : vector<8x1xf32> to vector<8x128xf32>
    %140 = vector.broadcast %8 : vector<1x128xf32> to vector<8x128xf32>
    %141 = arith.mulf %139, %140 : vector<8x128xf32>
    %142 = vector.broadcast %9 : vector<1x128xf32> to vector<8x128xf32>
    %143 = arith.addf %141, %142 : vector<8x128xf32>
    %cst_56 = arith.constant dense<0.000000e+00> : vector<8x128xf32>
    %144 = tpu.matmul %131, %10, %cst_56 {dimension_numbers = #tpu.dot_dimension_numbers<[1], [0], [0], [1], [0, 0, 1, 1], [], []>} : vector<8x128xf32>, vector<128x128xf32>, vector<8x128xf32> -> vector<8x128xf32>
    %145 = arith.addf %143, %144 : vector<8x128xf32>
    %146 = math.tanh %145 : vector<8x128xf32>
    %cst_57 = arith.constant dense<0.000000e+00> : vector<8x128xf32>
    %147 = tpu.matmul %146, %11, %cst_57 {dimension_numbers = #tpu.dot_dimension_numbers<[1], [0], [0], [1], [0, 0, 1, 1], [], []>} : vector<8x128xf32>, vector<128x128xf32>, vector<8x128xf32> -> vector<8x128xf32>
    %cst_58 = arith.constant dense<0.000000e+00> : vector<8x128xf32>
    %148 = tpu.matmul %137, %12, %cst_58 {dimension_numbers = #tpu.dot_dimension_numbers<[1], [0], [0], [1], [0, 0, 1, 1], [], []>} : vector<8x128xf32>, vector<128x128xf32>, vector<8x128xf32> -> vector<8x128xf32>
    %149 = arith.addf %147, %148 : vector<8x128xf32>
    %150 = vector.broadcast %13 : vector<1x128xf32> to vector<8x128xf32>
    %151 = arith.addf %149, %150 : vector<8x128xf32>
    %152 = math.tanh %151 : vector<8x128xf32>
    %c0_59 = arith.constant 0 : index
    %c0_60 = arith.constant 0 : index
    %153 = vector.load %arg18[%c0_59, %c0_60] : memref<64x128xf32, #tpu.memory_space<vmem>>, vector<8x128xf32>
    tpu.vector_store %arg18[%c0_59, %c0_60], %152 {strides = array<i32>} : memref<64x128xf32, #tpu.memory_space<vmem>>, vector<8x128xf32>,
    %154 = vector.extract_strided_slice %1 {offsets = [0, 1], sizes = [8, 1], strides = [1, 1]} : vector<8x8xf32> to vector<8x1xf32>
    %155 = vector.broadcast %154 : vector<8x1xf32> to vector<8x128xf32>
    %156 = vector.broadcast %8 : vector<1x128xf32> to vector<8x128xf32>
    %157 = arith.mulf %155, %156 : vector<8x128xf32>
    %158 = vector.broadcast %9 : vector<1x128xf32> to vector<8x128xf32>
    %159 = arith.addf %157, %158 : vector<8x128xf32>
    %cst_61 = arith.constant dense<0.000000e+00> : vector<8x128xf32>
    %160 = tpu.matmul %146, %10, %cst_61 {dimension_numbers = #tpu.dot_dimension_numbers<[1], [0], [0], [1], [0, 0, 1, 1], [], []>} : vector<8x128xf32>, vector<128x128xf32>, vector<8x128xf32> -> vector<8x128xf32>
    %161 = arith.addf %159, %160 : vector<8x128xf32>
    %162 = math.tanh %161 : vector<8x128xf32>
    %cst_62 = arith.constant dense<0.000000e+00> : vector<8x128xf32>
    %163 = tpu.matmul %162, %11, %cst_62 {dimension_numbers = #tpu.dot_dimension_numbers<[1], [0], [0], [1], [0, 0, 1, 1], [], []>} : vector<8x128xf32>, vector<128x128xf32>, vector<8x128xf32> -> vector<8x128xf32>
    %cst_63 = arith.constant dense<0.000000e+00> : vector<8x128xf32>
    %164 = tpu.matmul %152, %12, %cst_63 {dimension_numbers = #tpu.dot_dimension_numbers<[1], [0], [0], [1], [0, 0, 1, 1], [], []>} : vector<8x128xf32>, vector<128x128xf32>, vector<8x128xf32> -> vector<8x128xf32>
    %165 = arith.addf %163, %164 : vector<8x128xf32>
    %166 = vector.broadcast %13 : vector<1x128xf32> to vector<8x128xf32>
    %167 = arith.addf %165, %166 : vector<8x128xf32>
    %168 = math.tanh %167 : vector<8x128xf32>
    %c8 = arith.constant 8 : index
    %c0_64 = arith.constant 0 : index
    %169 = vector.load %arg18[%c8, %c0_64] : memref<64x128xf32, #tpu.memory_space<vmem>>, vector<8x128xf32>
    tpu.vector_store %arg18[%c8, %c0_64], %168 {strides = array<i32>} : memref<64x128xf32, #tpu.memory_space<vmem>>, vector<8x128xf32>,
    %170 = vector.extract_strided_slice %1 {offsets = [0, 2], sizes = [8, 1], strides = [1, 1]} : vector<8x8xf32> to vector<8x1xf32>
    %171 = vector.broadcast %170 : vector<8x1xf32> to vector<8x128xf32>
    %172 = vector.broadcast %8 : vector<1x128xf32> to vector<8x128xf32>
    %173 = arith.mulf %171, %172 : vector<8x128xf32>
    %174 = vector.broadcast %9 : vector<1x128xf32> to vector<8x128xf32>
    %175 = arith.addf %173, %174 : vector<8x128xf32>
    %cst_65 = arith.constant dense<0.000000e+00> : vector<8x128xf32>
    %176 = tpu.matmul %162, %10, %cst_65 {dimension_numbers = #tpu.dot_dimension_numbers<[1], [0], [0], [1], [0, 0, 1, 1], [], []>} : vector<8x128xf32>, vector<128x128xf32>, vector<8x128xf32> -> vector<8x128xf32>
    %177 = arith.addf %175, %176 : vector<8x128xf32>
    %178 = math.tanh %177 : vector<8x128xf32>
    %cst_66 = arith.constant dense<0.000000e+00> : vector<8x128xf32>
    %179 = tpu.matmul %178, %11, %cst_66 {dimension_numbers = #tpu.dot_dimension_numbers<[1], [0], [0], [1], [0, 0, 1, 1], [], []>} : vector<8x128xf32>, vector<128x128xf32>, vector<8x128xf32> -> vector<8x128xf32>
    %cst_67 = arith.constant dense<0.000000e+00> : vector<8x128xf32>
    %180 = tpu.matmul %168, %12, %cst_67 {dimension_numbers = #tpu.dot_dimension_numbers<[1], [0], [0], [1], [0, 0, 1, 1], [], []>} : vector<8x128xf32>, vector<128x128xf32>, vector<8x128xf32> -> vector<8x128xf32>
    %181 = arith.addf %179, %180 : vector<8x128xf32>
    %182 = vector.broadcast %13 : vector<1x128xf32> to vector<8x128xf32>
    %183 = arith.addf %181, %182 : vector<8x128xf32>
    %184 = math.tanh %183 : vector<8x128xf32>
    %c16 = arith.constant 16 : index
    %c0_68 = arith.constant 0 : index
    %185 = vector.load %arg18[%c16, %c0_68] : memref<64x128xf32, #tpu.memory_space<vmem>>, vector<8x128xf32>
    tpu.vector_store %arg18[%c16, %c0_68], %184 {strides = array<i32>} : memref<64x128xf32, #tpu.memory_space<vmem>>, vector<8x128xf32>,
    %186 = vector.extract_strided_slice %1 {offsets = [0, 3], sizes = [8, 1], strides = [1, 1]} : vector<8x8xf32> to vector<8x1xf32>
    %187 = vector.broadcast %186 : vector<8x1xf32> to vector<8x128xf32>
    %188 = vector.broadcast %8 : vector<1x128xf32> to vector<8x128xf32>
    %189 = arith.mulf %187, %188 : vector<8x128xf32>
    %190 = vector.broadcast %9 : vector<1x128xf32> to vector<8x128xf32>
    %191 = arith.addf %189, %190 : vector<8x128xf32>
    %cst_69 = arith.constant dense<0.000000e+00> : vector<8x128xf32>
    %192 = tpu.matmul %178, %10, %cst_69 {dimension_numbers = #tpu.dot_dimension_numbers<[1], [0], [0], [1], [0, 0, 1, 1], [], []>} : vector<8x128xf32>, vector<128x128xf32>, vector<8x128xf32> -> vector<8x128xf32>
    %193 = arith.addf %191, %192 : vector<8x128xf32>
    %194 = math.tanh %193 : vector<8x128xf32>
    %cst_70 = arith.constant dense<0.000000e+00> : vector<8x128xf32>
    %195 = tpu.matmul %194, %11, %cst_70 {dimension_numbers = #tpu.dot_dimension_numbers<[1], [0], [0], [1], [0, 0, 1, 1], [], []>} : vector<8x128xf32>, vector<128x128xf32>, vector<8x128xf32> -> vector<8x128xf32>
    %cst_71 = arith.constant dense<0.000000e+00> : vector<8x128xf32>
    %196 = tpu.matmul %184, %12, %cst_71 {dimension_numbers = #tpu.dot_dimension_numbers<[1], [0], [0], [1], [0, 0, 1, 1], [], []>} : vector<8x128xf32>, vector<128x128xf32>, vector<8x128xf32> -> vector<8x128xf32>
    %197 = arith.addf %195, %196 : vector<8x128xf32>
    %198 = vector.broadcast %13 : vector<1x128xf32> to vector<8x128xf32>
    %199 = arith.addf %197, %198 : vector<8x128xf32>
    %200 = math.tanh %199 : vector<8x128xf32>
    %c24 = arith.constant 24 : index
    %c0_72 = arith.constant 0 : index
    %201 = vector.load %arg18[%c24, %c0_72] : memref<64x128xf32, #tpu.memory_space<vmem>>, vector<8x128xf32>
    tpu.vector_store %arg18[%c24, %c0_72], %200 {strides = array<i32>} : memref<64x128xf32, #tpu.memory_space<vmem>>, vector<8x128xf32>,
    %202 = vector.extract_strided_slice %1 {offsets = [0, 4], sizes = [8, 1], strides = [1, 1]} : vector<8x8xf32> to vector<8x1xf32>
    %203 = vector.broadcast %202 : vector<8x1xf32> to vector<8x128xf32>
    %204 = vector.broadcast %8 : vector<1x128xf32> to vector<8x128xf32>
    %205 = arith.mulf %203, %204 : vector<8x128xf32>
    %206 = vector.broadcast %9 : vector<1x128xf32> to vector<8x128xf32>
    %207 = arith.addf %205, %206 : vector<8x128xf32>
    %cst_73 = arith.constant dense<0.000000e+00> : vector<8x128xf32>
    %208 = tpu.matmul %194, %10, %cst_73 {dimension_numbers = #tpu.dot_dimension_numbers<[1], [0], [0], [1], [0, 0, 1, 1], [], []>} : vector<8x128xf32>, vector<128x128xf32>, vector<8x128xf32> -> vector<8x128xf32>
    %209 = arith.addf %207, %208 : vector<8x128xf32>
    %210 = math.tanh %209 : vector<8x128xf32>
    %cst_74 = arith.constant dense<0.000000e+00> : vector<8x128xf32>
    %211 = tpu.matmul %210, %11, %cst_74 {dimension_numbers = #tpu.dot_dimension_numbers<[1], [0], [0], [1], [0, 0, 1, 1], [], []>} : vector<8x128xf32>, vector<128x128xf32>, vector<8x128xf32> -> vector<8x128xf32>
    %cst_75 = arith.constant dense<0.000000e+00> : vector<8x128xf32>
    %212 = tpu.matmul %200, %12, %cst_75 {dimension_numbers = #tpu.dot_dimension_numbers<[1], [0], [0], [1], [0, 0, 1, 1], [], []>} : vector<8x128xf32>, vector<128x128xf32>, vector<8x128xf32> -> vector<8x128xf32>
    %213 = arith.addf %211, %212 : vector<8x128xf32>
    %214 = vector.broadcast %13 : vector<1x128xf32> to vector<8x128xf32>
    %215 = arith.addf %213, %214 : vector<8x128xf32>
    %216 = math.tanh %215 : vector<8x128xf32>
    %c32 = arith.constant 32 : index
    %c0_76 = arith.constant 0 : index
    %217 = vector.load %arg18[%c32, %c0_76] : memref<64x128xf32, #tpu.memory_space<vmem>>, vector<8x128xf32>
    tpu.vector_store %arg18[%c32, %c0_76], %216 {strides = array<i32>} : memref<64x128xf32, #tpu.memory_space<vmem>>, vector<8x128xf32>,
    %218 = vector.extract_strided_slice %1 {offsets = [0, 5], sizes = [8, 1], strides = [1, 1]} : vector<8x8xf32> to vector<8x1xf32>
    %219 = vector.broadcast %218 : vector<8x1xf32> to vector<8x128xf32>
    %220 = vector.broadcast %8 : vector<1x128xf32> to vector<8x128xf32>
    %221 = arith.mulf %219, %220 : vector<8x128xf32>
    %222 = vector.broadcast %9 : vector<1x128xf32> to vector<8x128xf32>
    %223 = arith.addf %221, %222 : vector<8x128xf32>
    %cst_77 = arith.constant dense<0.000000e+00> : vector<8x128xf32>
    %224 = tpu.matmul %210, %10, %cst_77 {dimension_numbers = #tpu.dot_dimension_numbers<[1], [0], [0], [1], [0, 0, 1, 1], [], []>} : vector<8x128xf32>, vector<128x128xf32>, vector<8x128xf32> -> vector<8x128xf32>
    %225 = arith.addf %223, %224 : vector<8x128xf32>
    %226 = math.tanh %225 : vector<8x128xf32>
    %cst_78 = arith.constant dense<0.000000e+00> : vector<8x128xf32>
    %227 = tpu.matmul %226, %11, %cst_78 {dimension_numbers = #tpu.dot_dimension_numbers<[1], [0], [0], [1], [0, 0, 1, 1], [], []>} : vector<8x128xf32>, vector<128x128xf32>, vector<8x128xf32> -> vector<8x128xf32>
    %cst_79 = arith.constant dense<0.000000e+00> : vector<8x128xf32>
    %228 = tpu.matmul %216, %12, %cst_79 {dimension_numbers = #tpu.dot_dimension_numbers<[1], [0], [0], [1], [0, 0, 1, 1], [], []>} : vector<8x128xf32>, vector<128x128xf32>, vector<8x128xf32> -> vector<8x128xf32>
    %229 = arith.addf %227, %228 : vector<8x128xf32>
    %230 = vector.broadcast %13 : vector<1x128xf32> to vector<8x128xf32>
    %231 = arith.addf %229, %230 : vector<8x128xf32>
    %232 = math.tanh %231 : vector<8x128xf32>
    %c40 = arith.constant 40 : index
    %c0_80 = arith.constant 0 : index
    %233 = vector.load %arg18[%c40, %c0_80] : memref<64x128xf32, #tpu.memory_space<vmem>>, vector<8x128xf32>
    tpu.vector_store %arg18[%c40, %c0_80], %232 {strides = array<i32>} : memref<64x128xf32, #tpu.memory_space<vmem>>, vector<8x128xf32>,
    %234 = vector.extract_strided_slice %1 {offsets = [0, 6], sizes = [8, 1], strides = [1, 1]} : vector<8x8xf32> to vector<8x1xf32>
    %235 = vector.broadcast %234 : vector<8x1xf32> to vector<8x128xf32>
    %236 = vector.broadcast %8 : vector<1x128xf32> to vector<8x128xf32>
    %237 = arith.mulf %235, %236 : vector<8x128xf32>
    %238 = vector.broadcast %9 : vector<1x128xf32> to vector<8x128xf32>
    %239 = arith.addf %237, %238 : vector<8x128xf32>
    %cst_81 = arith.constant dense<0.000000e+00> : vector<8x128xf32>
    %240 = tpu.matmul %226, %10, %cst_81 {dimension_numbers = #tpu.dot_dimension_numbers<[1], [0], [0], [1], [0, 0, 1, 1], [], []>} : vector<8x128xf32>, vector<128x128xf32>, vector<8x128xf32> -> vector<8x128xf32>
    %241 = arith.addf %239, %240 : vector<8x128xf32>
    %242 = math.tanh %241 : vector<8x128xf32>
    %cst_82 = arith.constant dense<0.000000e+00> : vector<8x128xf32>
    %243 = tpu.matmul %242, %11, %cst_82 {dimension_numbers = #tpu.dot_dimension_numbers<[1], [0], [0], [1], [0, 0, 1, 1], [], []>} : vector<8x128xf32>, vector<128x128xf32>, vector<8x128xf32> -> vector<8x128xf32>
    %cst_83 = arith.constant dense<0.000000e+00> : vector<8x128xf32>
    %244 = tpu.matmul %232, %12, %cst_83 {dimension_numbers = #tpu.dot_dimension_numbers<[1], [0], [0], [1], [0, 0, 1, 1], [], []>} : vector<8x128xf32>, vector<128x128xf32>, vector<8x128xf32> -> vector<8x128xf32>
    %245 = arith.addf %243, %244 : vector<8x128xf32>
    %246 = vector.broadcast %13 : vector<1x128xf32> to vector<8x128xf32>
    %247 = arith.addf %245, %246 : vector<8x128xf32>
    %248 = math.tanh %247 : vector<8x128xf32>
    %c48 = arith.constant 48 : index
    %c0_84 = arith.constant 0 : index
    %249 = vector.load %arg18[%c48, %c0_84] : memref<64x128xf32, #tpu.memory_space<vmem>>, vector<8x128xf32>
    tpu.vector_store %arg18[%c48, %c0_84], %248 {strides = array<i32>} : memref<64x128xf32, #tpu.memory_space<vmem>>, vector<8x128xf32>,
    %250 = vector.extract_strided_slice %1 {offsets = [0, 7], sizes = [8, 1], strides = [1, 1]} : vector<8x8xf32> to vector<8x1xf32>
    %251 = vector.broadcast %250 : vector<8x1xf32> to vector<8x128xf32>
    %252 = vector.broadcast %8 : vector<1x128xf32> to vector<8x128xf32>
    %253 = arith.mulf %251, %252 : vector<8x128xf32>
    %254 = vector.broadcast %9 : vector<1x128xf32> to vector<8x128xf32>
    %255 = arith.addf %253, %254 : vector<8x128xf32>
    %cst_85 = arith.constant dense<0.000000e+00> : vector<8x128xf32>
    %256 = tpu.matmul %242, %10, %cst_85 {dimension_numbers = #tpu.dot_dimension_numbers<[1], [0], [0], [1], [0, 0, 1, 1], [], []>} : vector<8x128xf32>, vector<128x128xf32>, vector<8x128xf32> -> vector<8x128xf32>
    %257 = arith.addf %255, %256 : vector<8x128xf32>
    %258 = math.tanh %257 : vector<8x128xf32>
    %cst_86 = arith.constant dense<0.000000e+00> : vector<8x128xf32>
    %259 = tpu.matmul %258, %11, %cst_86 {dimension_numbers = #tpu.dot_dimension_numbers<[1], [0], [0], [1], [0, 0, 1, 1], [], []>} : vector<8x128xf32>, vector<128x128xf32>, vector<8x128xf32> -> vector<8x128xf32>
    %cst_87 = arith.constant dense<0.000000e+00> : vector<8x128xf32>
    %260 = tpu.matmul %248, %12, %cst_87 {dimension_numbers = #tpu.dot_dimension_numbers<[1], [0], [0], [1], [0, 0, 1, 1], [], []>} : vector<8x128xf32>, vector<128x128xf32>, vector<8x128xf32> -> vector<8x128xf32>
    %261 = arith.addf %259, %260 : vector<8x128xf32>
    %262 = vector.broadcast %13 : vector<1x128xf32> to vector<8x128xf32>
    %263 = arith.addf %261, %262 : vector<8x128xf32>
    %264 = math.tanh %263 : vector<8x128xf32>
    %c56 = arith.constant 56 : index
    %c0_88 = arith.constant 0 : index
    %265 = vector.load %arg18[%c56, %c0_88] : memref<64x128xf32, #tpu.memory_space<vmem>>, vector<8x128xf32>
    tpu.vector_store %arg18[%c56, %c0_88], %264 {strides = array<i32>} : memref<64x128xf32, #tpu.memory_space<vmem>>, vector<8x128xf32>,
    %c0_89 = arith.constant 0 : index
    %c0_90 = arith.constant 0 : index
    %266 = vector.load %arg18[%c0_89, %c0_90] : memref<64x128xf32, #tpu.memory_space<vmem>>, vector<64x128xf32>
    %cst_91 = arith.constant dense<0.000000e+00> : vector<64x256xf32>
    %267 = tpu.matmul %266, %14, %cst_91 {dimension_numbers = #tpu.dot_dimension_numbers<[1], [0], [0], [1], [0, 0, 1, 1], [], []>} : vector<64x128xf32>, vector<128x256xf32>, vector<64x256xf32> -> vector<64x256xf32>
    %268 = vector.broadcast %15 : vector<1x256xf32> to vector<64x256xf32>
    %269 = arith.addf %267, %268 : vector<64x256xf32>
    %270 = vector.shape_cast %269 : vector<64x256xf32> to vector<8x8x256xf32>
    %c0_92 = arith.constant 0 : index
    %c0_93 = arith.constant 0 : index
    %c0_94 = arith.constant 0 : index
    %271 = vector.load %arg17[%c0_92, %c0_93, %c0_94] : memref<8x8x256xf32, #tpu.memory_space<vmem>>, vector<8x8x256xf32>
    tpu.vector_store %arg17[%c0_92, %c0_93, %c0_94], %270 {strides = array<i32>} : memref<8x8x256xf32, #tpu.memory_space<vmem>>, vector<8x8x256xf32>,
    return
  }
  func.func @transform_0(%arg0: i32) -> (i32, i32) {
    %c0_i32 = arith.constant 0 : i32
    %c0_i32_0 = arith.constant 0 : i32
    return %arg0, %c0_i32 : i32, i32
  }
  func.func @transform_1(%arg0: i32) -> (i32, i32) {
    %c0_i32 = arith.constant 0 : i32
    %c0_i32_0 = arith.constant 0 : i32
    return %arg0, %c0_i32 : i32, i32
  }
  func.func @transform_2(%arg0: i32) -> (i32, i32) {
    %c0_i32 = arith.constant 0 : i32
    %c0_i32_0 = arith.constant 0 : i32
    %c0_i32_1 = arith.constant 0 : i32
    return %c0_i32, %c0_i32_0 : i32, i32
  }
  func.func @transform_3(%arg0: i32) -> (i32, i32) {
    %c0_i32 = arith.constant 0 : i32
    %c0_i32_0 = arith.constant 0 : i32
    %c0_i32_1 = arith.constant 0 : i32
    return %c0_i32, %c0_i32_0 : i32, i32
  }
  func.func @transform_4(%arg0: i32) -> (i32, i32) {
    %c0_i32 = arith.constant 0 : i32
    %c0_i32_0 = arith.constant 0 : i32
    %c0_i32_1 = arith.constant 0 : i32
    return %c0_i32, %c0_i32_0 : i32, i32
  }
  func.func @transform_5(%arg0: i32) -> (i32, i32) {
    %c0_i32 = arith.constant 0 : i32
    %c0_i32_0 = arith.constant 0 : i32
    %c0_i32_1 = arith.constant 0 : i32
    return %c0_i32, %c0_i32_0 : i32, i32
  }
  func.func @transform_6(%arg0: i32) -> (i32, i32) {
    %c0_i32 = arith.constant 0 : i32
    %c0_i32_0 = arith.constant 0 : i32
    %c0_i32_1 = arith.constant 0 : i32
    return %c0_i32, %c0_i32_0 : i32, i32
  }
  func.func @transform_7(%arg0: i32) -> (i32, i32) {
    %c0_i32 = arith.constant 0 : i32
    %c0_i32_0 = arith.constant 0 : i32
    %c0_i32_1 = arith.constant 0 : i32
    return %c0_i32, %c0_i32_0 : i32, i32
  }
  func.func @transform_8(%arg0: i32) -> (i32, i32) {
    %c0_i32 = arith.constant 0 : i32
    %c0_i32_0 = arith.constant 0 : i32
    %c0_i32_1 = arith.constant 0 : i32
    return %c0_i32, %c0_i32_0 : i32, i32
  }
  func.func @transform_9(%arg0: i32) -> (i32, i32) {
    %c0_i32 = arith.constant 0 : i32
    %c0_i32_0 = arith.constant 0 : i32
    %c0_i32_1 = arith.constant 0 : i32
    return %c0_i32, %c0_i32_0 : i32, i32
  }
  func.func @transform_10(%arg0: i32) -> (i32, i32) {
    %c0_i32 = arith.constant 0 : i32
    %c0_i32_0 = arith.constant 0 : i32
    %c0_i32_1 = arith.constant 0 : i32
    return %c0_i32, %c0_i32_0 : i32, i32
  }
  func.func @transform_11(%arg0: i32) -> (i32, i32) {
    %c0_i32 = arith.constant 0 : i32
    %c0_i32_0 = arith.constant 0 : i32
    %c0_i32_1 = arith.constant 0 : i32
    return %c0_i32, %c0_i32_0 : i32, i32
  }
  func.func @transform_12(%arg0: i32) -> (i32, i32) {
    %c0_i32 = arith.constant 0 : i32
    %c0_i32_0 = arith.constant 0 : i32
    %c0_i32_1 = arith.constant 0 : i32
    return %c0_i32, %c0_i32_0 : i32, i32
  }
  func.func @transform_13(%arg0: i32) -> (i32, i32) {
    %c0_i32 = arith.constant 0 : i32
    %c0_i32_0 = arith.constant 0 : i32
    %c0_i32_1 = arith.constant 0 : i32
    return %c0_i32, %c0_i32_0 : i32, i32
  }
  func.func @transform_14(%arg0: i32) -> (i32, i32) {
    %c0_i32 = arith.constant 0 : i32
    %c0_i32_0 = arith.constant 0 : i32
    %c0_i32_1 = arith.constant 0 : i32
    return %c0_i32, %c0_i32_0 : i32, i32
  }
  func.func @transform_15(%arg0: i32) -> (i32, i32) {
    %c0_i32 = arith.constant 0 : i32
    %c0_i32_0 = arith.constant 0 : i32
    %c0_i32_1 = arith.constant 0 : i32
    return %c0_i32, %c0_i32_0 : i32, i32
  }
  func.func @transform_16(%arg0: i32) -> (i32, i32, i32) {
    %c0_i32 = arith.constant 0 : i32
    %c0_i32_0 = arith.constant 0 : i32
    %c0_i32_1 = arith.constant 0 : i32
    return %c0_i32, %arg0, %c0_i32_0 : i32, i32, i32
  }
}

</mosaic_0001>

<llo_original>
// kernel: tpu_custom_call.1
$region0: #{tpu_custom_call.1}
  #allocation0 [shape = 'u32[]', space=smem, size = 0x4, offset = 0x4, fixed_abs, tag = 'smem constant byte address 0x4 - core index']
  #allocation1 [shape = 'u32[144,128]{1,0:T(1,128)}', space=vmem, size = 0x12000, scoped, tag = 'internal scratch']
  #allocation2 [shape = 'f32[64,128]{1,0:T(8,128)}', space=vmem, size = 0x8000, scoped, tag = 'scratch operand']
  %s0 = inlined_call_operand.hbm [shape: f32[8,8], index: 0, kind: input, shape index: {}]
  %s1 = inlined_call_operand.hbm [shape: f32[8,8], index: 1, kind: input, shape index: {}]
  %s2 = inlined_call_operand.vmem [shape: f32[1,128], index: 2, kind: input, shape index: {}]
  %s3 = inlined_call_operand.vmem [shape: f32[1,128], index: 3, kind: input, shape index: {}]
  %s4 = inlined_call_operand.hbm [shape: f32[128,128], index: 4, kind: input, shape index: {}]
  %s5 = inlined_call_operand.hbm [shape: f32[128,128], index: 5, kind: input, shape index: {}]
  %s6 = inlined_call_operand.hbm [shape: f32[128,128], index: 6, kind: input, shape index: {}]
  %s7 = inlined_call_operand.vmem [shape: f32[1,128], index: 7, kind: input, shape index: {}]
  %s8 = inlined_call_operand.vmem [shape: f32[1,128], index: 8, kind: input, shape index: {}]
  %s9 = inlined_call_operand.vmem [shape: f32[1,128], index: 9, kind: input, shape index: {}]
  %s10 = inlined_call_operand.hbm [shape: f32[128,128], index: 10, kind: input, shape index: {}]
  %s11 = inlined_call_operand.hbm [shape: f32[128,128], index: 11, kind: input, shape index: {}]
  %s12 = inlined_call_operand.hbm [shape: f32[128,128], index: 12, kind: input, shape index: {}]
  %s13 = inlined_call_operand.vmem [shape: f32[1,128], index: 13, kind: input, shape index: {}]
  %s14 = inlined_call_operand.hbm [shape: f32[128,256], index: 14, kind: input, shape index: {}]
  %s15 = inlined_call_operand.vmem [shape: f32[1,256], index: 15, kind: input, shape index: {}]
  %s16 = inlined_call_operand.hbm [shape: f32[8,8,256], index: 16, kind: output, shape index: {}]
  %s17 = sld [smem:[#allocation0]]
  $region110: #{tpu_custom_call.1} parent=0
    _
  %s19 = ssub.s32 1, %s17
  %s20 = scalar_select 0, %s19, %s17
  $region1: #{tpu_custom_call.1} parent=0
    #allocation3 [shape = 'u8[4096]{0}', space=vmem, size = 0x1000, scoped, tag = 'input window, operand 0, single buffered']
    #allocation4 [shape = 's32[1]{0}', space=sflag, size = 0x4, scoped, tag = 'scoped memory for tpu_custom_call.1']
    #allocation5 [shape = 's32[1]{0}', space=sflag, size = 0x4, scoped, tag = 'scoped memory for tpu_custom_call.1']
    #allocation6 [shape = 'u8[4096]{0}', space=vmem, size = 0x1000, scoped, tag = 'input window, operand 1, single buffered']
    #allocation7 [shape = 's32[1]{0}', space=sflag, size = 0x4, scoped, tag = 'scoped memory for tpu_custom_call.1']
    #allocation8 [shape = 'u8[65536]{0}', space=vmem, size = 0x10000, scoped, tag = 'input window, operand 4, single buffered']
    #allocation9 [shape = 'u8[65536]{0}', space=vmem, size = 0x10000, scoped, tag = 'input window, operand 5, single buffered']
    #allocation10 [shape = 's32[1]{0}', space=sflag, size = 0x4, scoped, tag = 'scoped memory for tpu_custom_call.1']
    #allocation11 [shape = 'u8[65536]{0}', space=vmem, size = 0x10000, scoped, tag = 'input window, operand 6, single buffered']
    #allocation12 [shape = 'u8[65536]{0}', space=vmem, size = 0x10000, scoped, tag = 'input window, operand 10, single buffered']
    #allocation13 [shape = 's32[1]{0}', space=sflag, size = 0x4, scoped, tag = 'scoped memory for tpu_custom_call.1']
    #allocation14 [shape = 'u8[65536]{0}', space=vmem, size = 0x10000, scoped, tag = 'input window, operand 11, single buffered']
    #allocation15 [shape = 'u8[65536]{0}', space=vmem, size = 0x10000, scoped, tag = 'input window, operand 12, single buffered']
    #allocation16 [shape = 's32[1]{0}', space=sflag, size = 0x4, scoped, tag = 'scoped memory for tpu_custom_call.1']
    #allocation17 [shape = 'u8[131072]{0}', space=vmem, size = 0x20000, scoped, tag = 'input window, operand 14, single buffered']
    #allocation18 [shape = 'u8[65536]{0}', space=vmem, size = 0x10000, scoped, tag = 'output window, operand 0, single buffered']
    %21 = vsyncpa [#allocation4], 0
    %22 = vsyncpa [#allocation7], 0
    %23 = vsyncpa [#allocation10], 0
    %24 = vsyncpa [#allocation13], 0
    %25 = vsyncpa [#allocation16], 0
    %26 = vsyncpa [#allocation5], 0
    // Predicated region
    $region2: #{tpu_custom_call.1} parent=1 // pred_check
      _
    $region3: #{tpu_custom_call.1} parent=1 // pred_check_branch
      %28 = sbr.rel (0) target = $region5
    $region4: #{tpu_custom_call.1} parent=1 // pred_region
      %s30 = ssub.s32 128, 128
      %31 = vsyncadd [#allocation4], %s30
      %s33 = sshll.u32 [#allocation3], 4
      %s34 = int_to_ptr.vmem [resolvable:$true] %s33
      %36 = dma.hbm_to_vmem [thread:$0]  %s0, 128, %s34, [#allocation4]
    $region5: #{tpu_custom_call.1} parent=1 // pred_fallthru
      _
    // Predicated region
    $region6: #{tpu_custom_call.1} parent=1 // pred_check
      _
    $region7: #{tpu_custom_call.1} parent=1 // pred_check_branch
      %38 = sbr.rel (0) target = $region9
    $region8: #{tpu_custom_call.1} parent=1 // pred_region
      %s40 = ssub.s32 128, 128
      %41 = vsyncadd [#allocation7], %s40
      %s43 = sshll.u32 [#allocation6], 4
      %s44 = int_to_ptr.vmem [resolvable:$true] %s43
      %46 = dma.hbm_to_vmem [thread:$0]  %s1, 128, %s44, [#allocation7]
    $region9: #{tpu_custom_call.1} parent=1 // pred_fallthru
      _
    // Predicated region
    $region10: #{tpu_custom_call.1} parent=1 // pred_check
      _
    $region11: #{tpu_custom_call.1} parent=1 // pred_check_branch
      %48 = sbr.rel (0) target = $region13
    $region12: #{tpu_custom_call.1} parent=1 // pred_region
      _
    $region13: #{tpu_custom_call.1} parent=1 // pred_fallthru
      _
    // Predicated region
    $region14: #{tpu_custom_call.1} parent=1 // pred_check
      _
    $region15: #{tpu_custom_call.1} parent=1 // pred_check_branch
      %50 = sbr.rel (0) target = $region17
    $region16: #{tpu_custom_call.1} parent=1 // pred_region
      _
    $region17: #{tpu_custom_call.1} parent=1 // pred_fallthru
      _
    // Predicated region
    $region18: #{tpu_custom_call.1} parent=1 // pred_check
      _
    $region19: #{tpu_custom_call.1} parent=1 // pred_check_branch
      %52 = sbr.rel (0) target = $region21
    $region20: #{tpu_custom_call.1} parent=1 // pred_region
      %s54 = ssub.s32 2048, 2048
      %55 = vsyncadd [#allocation7], %s54
      %s56 = sshll.u32 [#allocation8], 4
      %s57 = int_to_ptr.vmem [resolvable:$true] %s56
      %62 = dma.hbm_to_vmem [thread:$0]  %s4, 2048, %s57, [#allocation7], 128, 128, 8
    $region21: #{tpu_custom_call.1} parent=1 // pred_fallthru
      _
    // Predicated region
    $region22: #{tpu_custom_call.1} parent=1 // pred_check
      _
    $region23: #{tpu_custom_call.1} parent=1 // pred_check_branch
      %64 = sbr.rel (0) target = $region25
    $region24: #{tpu_custom_call.1} parent=1 // pred_region
      %s66 = ssub.s32 2048, 2048
      %67 = vsyncadd [#allocation10], %s66
      %s68 = sshll.u32 [#allocation9], 4
      %s69 = int_to_ptr.vmem [resolvable:$true] %s68
      %74 = dma.hbm_to_vmem [thread:$0]  %s5, 2048, %s69, [#allocation10], 128, 128, 8
    $region25: #{tpu_custom_call.1} parent=1 // pred_fallthru
      _
    // Predicated region
    $region26: #{tpu_custom_call.1} parent=1 // pred_check
      _
    $region27: #{tpu_custom_call.1} parent=1 // pred_check_branch
      %76 = sbr.rel (0) target = $region29
    $region28: #{tpu_custom_call.1} parent=1 // pred_region
      %s78 = ssub.s32 2048, 2048
      %79 = vsyncadd [#allocation10], %s78
      %s80 = sshll.u32 [#allocation11], 4
      %s81 = int_to_ptr.vmem [resolvable:$true] %s80
      %86 = dma.hbm_to_vmem [thread:$0]  %s6, 2048, %s81, [#allocation10], 128, 128, 8
    $region29: #{tpu_custom_call.1} parent=1 // pred_fallthru
      _
    // Predicated region
    $region30: #{tpu_custom_call.1} parent=1 // pred_check
      _
    $region31: #{tpu_custom_call.1} parent=1 // pred_check_branch
      %88 = sbr.rel (0) target = $region33
    $region32: #{tpu_custom_call.1} parent=1 // pred_region
      _
    $region33: #{tpu_custom_call.1} parent=1 // pred_fallthru
      _
    // Predicated region
    $region34: #{tpu_custom_call.1} parent=1 // pred_check
      _
    $region35: #{tpu_custom_call.1} parent=1 // pred_check_branch
      %90 = sbr.rel (0) target = $region37
    $region36: #{tpu_custom_call.1} parent=1 // pred_region
      _
    $region37: #{tpu_custom_call.1} parent=1 // pred_fallthru
      _
    // Predicated region
    $region38: #{tpu_custom_call.1} parent=1 // pred_check
      _
    $region39: #{tpu_custom_call.1} parent=1 // pred_check_branch
      %92 = sbr.rel (0) target = $region41
    $region40: #{tpu_custom_call.1} parent=1 // pred_region
      _
    $region41: #{tpu_custom_call.1} parent=1 // pred_fallthru
      _
    // Predicated region
    $region42: #{tpu_custom_call.1} parent=1 // pred_check
      _
    $region43: #{tpu_custom_call.1} parent=1 // pred_check_branch
      %94 = sbr.rel (0) target = $region45
    $region44: #{tpu_custom_call.1} parent=1 // pred_region
      %s96 = ssub.s32 2048, 2048
      %97 = vsyncadd [#allocation13], %s96
      %s98 = sshll.u32 [#allocation12], 4
      %s99 = int_to_ptr.vmem [resolvable:$true] %s98
      %104 = dma.hbm_to_vmem [thread:$0]  %s10, 2048, %s99, [#allocation13], 128, 128, 8
    $region45: #{tpu_custom_call.1} parent=1 // pred_fallthru
      _
    // Predicated region
    $region46: #{tpu_custom_call.1} parent=1 // pred_check
      _
    $region47: #{tpu_custom_call.1} parent=1 // pred_check_branch
      %106 = sbr.rel (0) target = $region49
    $region48: #{tpu_custom_call.1} parent=1 // pred_region
      %s108 = ssub.s32 2048, 2048
      %109 = vsyncadd [#allocation13], %s108
      %s110 = sshll.u32 [#allocation14], 4
      %s111 = int_to_ptr.vmem [resolvable:$true] %s110
      %116 = dma.hbm_to_vmem [thread:$0]  %s11, 2048, %s111, [#allocation13], 128, 128, 8
    $region49: #{tpu_custom_call.1} parent=1 // pred_fallthru
      _
    // Predicated region
    $region50: #{tpu_custom_call.1} parent=1 // pred_check
      _
    $region51: #{tpu_custom_call.1} parent=1 // pred_check_branch
      %118 = sbr.rel (0) target = $region53
    $region52: #{tpu_custom_call.1} parent=1 // pred_region
      %s120 = ssub.s32 2048, 2048
      %121 = vsyncadd [#allocation16], %s120
      %s122 = sshll.u32 [#allocation15], 4
      %s123 = int_to_ptr.vmem [resolvable:$true] %s122
      %128 = dma.hbm_to_vmem [thread:$0]  %s12, 2048, %s123, [#allocation16], 128, 128, 8
    $region53: #{tpu_custom_call.1} parent=1 // pred_fallthru
      _
    // Predicated region
    $region54: #{tpu_custom_call.1} parent=1 // pred_check
      _
    $region55: #{tpu_custom_call.1} parent=1 // pred_check_branch
      %130 = sbr.rel (0) target = $region57
    $region56: #{tpu_custom_call.1} parent=1 // pred_region
      _
    $region57: #{tpu_custom_call.1} parent=1 // pred_fallthru
      _
    // Predicated region
    $region58: #{tpu_custom_call.1} parent=1 // pred_check
      _
    $region59: #{tpu_custom_call.1} parent=1 // pred_check_branch
      %132 = sbr.rel (0) target = $region61
    $region60: #{tpu_custom_call.1} parent=1 // pred_region
      %s134 = ssub.s32 4096, 4096
      %135 = vsyncadd [#allocation16], %s134
      %s136 = sshll.u32 [#allocation17], 4
      %s137 = int_to_ptr.vmem [resolvable:$true] %s136
      %142 = dma.hbm_to_vmem [thread:$0]  %s14, 4096, %s137, [#allocation16], 256, 256, 16
    $region61: #{tpu_custom_call.1} parent=1 // pred_fallthru
      _
    // Predicated region
    $region62: #{tpu_custom_call.1} parent=1 // pred_check
      _
    $region63: #{tpu_custom_call.1} parent=1 // pred_check_branch
      %144 = sbr.rel (0) target = $region65
    $region64: #{tpu_custom_call.1} parent=1 // pred_region
      _
    $region65: #{tpu_custom_call.1} parent=1 // pred_fallthru
      _
    // Predicated region
    $region66: #{tpu_custom_call.1} parent=1 // pred_check
      _
    $region67: #{tpu_custom_call.1} parent=1 // pred_check_branch
      %146 = sbr.rel (0) target = $region69
    $region68: #{tpu_custom_call.1} parent=1 // pred_region
      %147 = dma.done [#allocation4], 128
    $region69: #{tpu_custom_call.1} parent=1 // pred_fallthru
      _
    // Predicated region
    $region70: #{tpu_custom_call.1} parent=1 // pred_check
      _
    $region71: #{tpu_custom_call.1} parent=1 // pred_check_branch
      %149 = sbr.rel (0) target = $region73
    $region72: #{tpu_custom_call.1} parent=1 // pred_region
      %150 = dma.done [#allocation7], 128
    $region73: #{tpu_custom_call.1} parent=1 // pred_fallthru
      _
    // Predicated region
    $region74: #{tpu_custom_call.1} parent=1 // pred_check
      _
    $region75: #{tpu_custom_call.1} parent=1 // pred_check_branch
      %152 = sbr.rel (0) target = $region77
    $region76: #{tpu_custom_call.1} parent=1 // pred_region
      %153 = dma.done [#allocation7], 2048
    $region77: #{tpu_custom_call.1} parent=1 // pred_fallthru
      _
    // Predicated region
    $region78: #{tpu_custom_call.1} parent=1 // pred_check
      _
    $region79: #{tpu_custom_call.1} parent=1 // pred_check_branch
      %155 = sbr.rel (0) target = $region81
    $region80: #{tpu_custom_call.1} parent=1 // pred_region
      %156 = dma.done [#allocation10], 2048
    $region81: #{tpu_custom_call.1} parent=1 // pred_fallthru
      _
    // Predicated region
    $region82: #{tpu_custom_call.1} parent=1 // pred_check
      _
    $region83: #{tpu_custom_call.1} parent=1 // pred_check_branch
      %158 = sbr.rel (0) target = $region85
    $region84: #{tpu_custom_call.1} parent=1 // pred_region
      %159 = dma.done [#allocation10], 2048
    $region85: #{tpu_custom_call.1} parent=1 // pred_fallthru
      _
    // Predicated region
    $region86: #{tpu_custom_call.1} parent=1 // pred_check
      _
    $region87: #{tpu_custom_call.1} parent=1 // pred_check_branch
      %161 = sbr.rel (0) target = $region89
    $region88: #{tpu_custom_call.1} parent=1 // pred_region
      %162 = dma.done [#allocation13], 2048
    $region89: #{tpu_custom_call.1} parent=1 // pred_fallthru
      _
    // Predicated region
    $region90: #{tpu_custom_call.1} parent=1 // pred_check
      _
    $region91: #{tpu_custom_call.1} parent=1 // pred_check_branch
      %164 = sbr.rel (0) target = $region93
    $region92: #{tpu_custom_call.1} parent=1 // pred_region
      %165 = dma.done [#allocation13], 2048
    $region93: #{tpu_custom_call.1} parent=1 // pred_fallthru
      _
    // Predicated region
    $region94: #{tpu_custom_call.1} parent=1 // pred_check
      _
    $region95: #{tpu_custom_call.1} parent=1 // pred_check_branch
      %167 = sbr.rel (0) target = $region97
    $region96: #{tpu_custom_call.1} parent=1 // pred_region
      %168 = dma.done [#allocation16], 2048
    $region97: #{tpu_custom_call.1} parent=1 // pred_fallthru
      _
    // Predicated region
    $region98: #{tpu_custom_call.1} parent=1 // pred_check
      _
    $region99: #{tpu_custom_call.1} parent=1 // pred_check_branch
      %170 = sbr.rel (0) target = $region101
    $region100: #{tpu_custom_call.1} parent=1 // pred_region
      %171 = dma.done [#allocation16], 4096
    $region101: #{tpu_custom_call.1} parent=1 // pred_fallthru
      _
    %v172 = vld [vmem:[#allocation3] sm:$0xff]
    %v173 = vld [vmem:[#allocation6] sm:$0xff]
    %v174 = vld [vmem:[%s2] sm:$0x1]
    %v175 = vld [vmem:[%s3] sm:$0x1]
    %v176 = vld [vmem:[#allocation8] sm:$0xff]
    %v177 = vld [vmem:[#allocation8 + $0x8] sm:$0xff]
    %v178 = vld [vmem:[#allocation8 + $0x10] sm:$0xff]
    %v179 = vld [vmem:[#allocation8 + $0x18] sm:$0xff]
    %v180 = vld [vmem:[#allocation8 + $0x20] sm:$0xff]
    %v181 = vld [vmem:[#allocation8 + $0x28] sm:$0xff]
    %v182 = vld [vmem:[#allocation8 + $0x30] sm:$0xff]
    %v183 = vld [vmem:[#allocation8 + $0x38] sm:$0xff]
    %v184 = vld [vmem:[#allocation8 + $0x40] sm:$0xff]
    %v185 = vld [vmem:[#allocation8 + $0x48] sm:$0xff]
    %v186 = vld [vmem:[#allocation8 + $0x50] sm:$0xff]
    %v187 = vld [vmem:[#allocation8 + $0x58] sm:$0xff]
    %v188 = vld [vmem:[#allocation8 + $0x60] sm:$0xff]
    %v189 = vld [vmem:[#allocation8 + $0x68] sm:$0xff]
    %v190 = vld [vmem:[#allocation8 + $0x70] sm:$0xff]
    %v191 = vld [vmem:[#allocation8 + $0x78] sm:$0xff]
    %v192 = vld [vmem:[#allocation9] sm:$0xff]
    %v193 = vld [vmem:[#allocation9 + $0x8] sm:$0xff]
    %v194 = vld [vmem:[#allocation9 + $0x10] sm:$0xff]
    %v195 = vld [vmem:[#allocation9 + $0x18] sm:$0xff]
    %v196 = vld [vmem:[#allocation9 + $0x20] sm:$0xff]
    %v197 = vld [vmem:[#allocation9 + $0x28] sm:$0xff]
    %v198 = vld [vmem:[#allocation9 + $0x30] sm:$0xff]
    %v199 = vld [vmem:[#allocation9 + $0x38] sm:$0xff]
    %v200 = vld [vmem:[#allocation9 + $0x40] sm:$0xff]
    %v201 = vld [vmem:[#allocation9 + $0x48] sm:$0xff]
    %v202 = vld [vmem:[#allocation9 + $0x50] sm:$0xff]
    %v203 = vld [vmem:[#allocation9 + $0x58] sm:$0xff]
    %v204 = vld [vmem:[#allocation9 + $0x60] sm:$0xff]
    %v205 = vld [vmem:[#allocation9 + $0x68] sm:$0xff]
    %v206 = vld [vmem:[#allocation9 + $0x70] sm:$0xff]
    %v207 = vld [vmem:[#allocation9 + $0x78] sm:$0xff]
    %v208 = vld [vmem:[#allocation11] sm:$0xff]
    %v209 = vld [vmem:[#allocation11 + $0x8] sm:$0xff]
    %v210 = vld [vmem:[#allocation11 + $0x10] sm:$0xff]
    %v211 = vld [vmem:[#allocation11 + $0x18] sm:$0xff]
    %v212 = vld [vmem:[#allocation11 + $0x20] sm:$0xff]
    %v213 = vld [vmem:[#allocation11 + $0x28] sm:$0xff]
    %v214 = vld [vmem:[#allocation11 + $0x30] sm:$0xff]
    %v215 = vld [vmem:[#allocation11 + $0x38] sm:$0xff]
    %v216 = vld [vmem:[#allocation11 + $0x40] sm:$0xff]
    %v217 = vld [vmem:[#allocation11 + $0x48] sm:$0xff]
    %v218 = vld [vmem:[#allocation11 + $0x50] sm:$0xff]
    %v219 = vld [vmem:[#allocation11 + $0x58] sm:$0xff]
    %v220 = vld [vmem:[#allocation11 + $0x60] sm:$0xff]
    %v221 = vld [vmem:[#allocation11 + $0x68] sm:$0xff]
    %v222 = vld [vmem:[#allocation11 + $0x70] sm:$0xff]
    %v223 = vld [vmem:[#allocation11 + $0x78] sm:$0xff]
    %v224 = vld [vmem:[%s7] sm:$0x1]
    %v225 = vld [vmem:[%s8] sm:$0x1]
    %v226 = vld [vmem:[%s9] sm:$0x1]
    %v227 = vld [vmem:[#allocation12] sm:$0xff]
    %v228 = vld [vmem:[#allocation12 + $0x8] sm:$0xff]
    %v229 = vld [vmem:[#allocation12 + $0x10] sm:$0xff]
    %v230 = vld [vmem:[#allocation12 + $0x18] sm:$0xff]
    %v231 = vld [vmem:[#allocation12 + $0x20] sm:$0xff]
    %v232 = vld [vmem:[#allocation12 + $0x28] sm:$0xff]
    %v233 = vld [vmem:[#allocation12 + $0x30] sm:$0xff]
    %v234 = vld [vmem:[#allocation12 + $0x38] sm:$0xff]
    %v235 = vld [vmem:[#allocation12 + $0x40] sm:$0xff]
    %v236 = vld [vmem:[#allocation12 + $0x48] sm:$0xff]
    %v237 = vld [vmem:[#allocation12 + $0x50] sm:$0xff]
    %v238 = vld [vmem:[#allocation12 + $0x58] sm:$0xff]
    %v239 = vld [vmem:[#allocation12 + $0x60] sm:$0xff]
    %v240 = vld [vmem:[#allocation12 + $0x68] sm:$0xff]
    %v241 = vld [vmem:[#allocation12 + $0x70] sm:$0xff]
    %v242 = vld [vmem:[#allocation12 + $0x78] sm:$0xff]
    %v243 = vld [vmem:[#allocation14] sm:$0xff]
    %v244 = vld [vmem:[#allocation14 + $0x8] sm:$0xff]
    %v245 = vld [vmem:[#allocation14 + $0x10] sm:$0xff]
    %v246 = vld [vmem:[#allocation14 + $0x18] sm:$0xff]
    %v247 = vld [vmem:[#allocation14 + $0x20] sm:$0xff]
    %v248 = vld [vmem:[#allocation14 + $0x28] sm:$0xff]
    %v249 = vld [vmem:[#allocation14 + $0x30] sm:$0xff]
    %v250 = vld [vmem:[#allocation14 + $0x38] sm:$0xff]
    %v251 = vld [vmem:[#allocation14 + $0x40] sm:$0xff]
    %v252 = vld [vmem:[#allocation14 + $0x48] sm:$0xff]
    %v253 = vld [vmem:[#allocation14 + $0x50] sm:$0xff]
    %v254 = vld [vmem:[#allocation14 + $0x58] sm:$0xff]
    %v255 = vld [vmem:[#allocation14 + $0x60] sm:$0xff]
    %v256 = vld [vmem:[#allocation14 + $0x68] sm:$0xff]
    %v257 = vld [vmem:[#allocation14 + $0x70] sm:$0xff]
    %v258 = vld [vmem:[#allocation14 + $0x78] sm:$0xff]
    %v259 = vld [vmem:[#allocation15] sm:$0xff]
    %v260 = vld [vmem:[#allocation15 + $0x8] sm:$0xff]
    %v261 = vld [vmem:[#allocation15 + $0x10] sm:$0xff]
    %v262 = vld [vmem:[#allocation15 + $0x18] sm:$0xff]
    %v263 = vld [vmem:[#allocation15 + $0x20] sm:$0xff]
    %v264 = vld [vmem:[#allocation15 + $0x28] sm:$0xff]
    %v265 = vld [vmem:[#allocation15 + $0x30] sm:$0xff]
    %v266 = vld [vmem:[#allocation15 + $0x38] sm:$0xff]
    %v267 = vld [vmem:[#allocation15 + $0x40] sm:$0xff]
    %v268 = vld [vmem:[#allocation15 + $0x48] sm:$0xff]
    %v269 = vld [vmem:[#allocation15 + $0x50] sm:$0xff]
    %v270 = vld [vmem:[#allocation15 + $0x58] sm:$0xff]
    %v271 = vld [vmem:[#allocation15 + $0x60] sm:$0xff]
    %v272 = vld [vmem:[#allocation15 + $0x68] sm:$0xff]
    %v273 = vld [vmem:[#allocation15 + $0x70] sm:$0xff]
    %v274 = vld [vmem:[#allocation15 + $0x78] sm:$0xff]
    %v275 = vld [vmem:[%s13] sm:$0x1]
    %v276 = vld [vmem:[#allocation17] sm:$0xff]
    %v277 = vld [vmem:[#allocation17 + $0x8] sm:$0xff]
    %v278 = vld [vmem:[#allocation17 + $0x10] sm:$0xff]
    %v279 = vld [vmem:[#allocation17 + $0x18] sm:$0xff]
    %v280 = vld [vmem:[#allocation17 + $0x20] sm:$0xff]
    %v281 = vld [vmem:[#allocation17 + $0x28] sm:$0xff]
    %v282 = vld [vmem:[#allocation17 + $0x30] sm:$0xff]
    %v283 = vld [vmem:[#allocation17 + $0x38] sm:$0xff]
    %v284 = vld [vmem:[#allocation17 + $0x40] sm:$0xff]
    %v285 = vld [vmem:[#allocation17 + $0x48] sm:$0xff]
    %v286 = vld [vmem:[#allocation17 + $0x50] sm:$0xff]
    %v287 = vld [vmem:[#allocation17 + $0x58] sm:$0xff]
    %v288 = vld [vmem:[#allocation17 + $0x60] sm:$0xff]
    %v289 = vld [vmem:[#allocation17 + $0x68] sm:$0xff]
    %v290 = vld [vmem:[#allocation17 + $0x70] sm:$0xff]
    %v291 = vld [vmem:[#allocation17 + $0x78] sm:$0xff]
    %v292 = vld [vmem:[#allocation17 + $0x80] sm:$0xff]
    %v293 = vld [vmem:[#allocation17 + $0x88] sm:$0xff]
    %v294 = vld [vmem:[#allocation17 + $0x90] sm:$0xff]
    %v295 = vld [vmem:[#allocation17 + $0x98] sm:$0xff]
    %v296 = vld [vmem:[#allocation17 + $0xa0] sm:$0xff]
    %v297 = vld [vmem:[#allocation17 + $0xa8] sm:$0xff]
    %v298 = vld [vmem:[#allocation17 + $0xb0] sm:$0xff]
    %v299 = vld [vmem:[#allocation17 + $0xb8] sm:$0xff]
    %v300 = vld [vmem:[#allocation17 + $0xc0] sm:$0xff]
    %v301 = vld [vmem:[#allocation17 + $0xc8] sm:$0xff]
    %v302 = vld [vmem:[#allocation17 + $0xd0] sm:$0xff]
    %v303 = vld [vmem:[#allocation17 + $0xd8] sm:$0xff]
    %v304 = vld [vmem:[#allocation17 + $0xe0] sm:$0xff]
    %v305 = vld [vmem:[#allocation17 + $0xe8] sm:$0xff]
    %v306 = vld [vmem:[#allocation17 + $0xf0] sm:$0xff]
    %v307 = vld [vmem:[#allocation17 + $0xf8] sm:$0xff]
    %v308 = vld [vmem:[%s15] sm:$0x3]
    %310 = vset.pattern.permute.xlu0 0
    %311 = vperm.xlu0 %310, %v172
    %v312 = vpop.permute.xlu0 %311
    %v315 = vlaneseq
    %v316 = vshrl.u32 %v315, 7
    %v317 = vsub.s32 0, %v316
    %v318 = vrot.slane %v174, %v317
    %v320 = vmul.f32 %v312, %v318
    %v322 = vlaneseq
    %v323 = vshrl.u32 %v322, 7
    %v324 = vsub.s32 0, %v323
    %v325 = vrot.slane %v175, %v324
    %v327 = vadd.f32 %v320, %v325
    %328 = vmatprep.subr.mxu0 0.0
    %329 = vmatpush1.msra.mxu0 %v176
    %330 = vmatprep.subr.mxu0 0.0
    %331 = vmatpush1.msra.mxu0 %v177
    %332 = vmatprep.subr.mxu0 0.0
    %333 = vmatpush1.msra.mxu0 %v178
    %334 = vmatprep.subr.mxu0 0.0
    %335 = vmatpush1.msra.mxu0 %v179
    %336 = vmatprep.subr.mxu0 0.0
    %337 = vmatpush1.msra.mxu0 %v180
    %338 = vmatprep.subr.mxu0 0.0
    %339 = vmatpush1.msra.mxu0 %v181
    %340 = vmatprep.subr.mxu0 0.0
    %341 = vmatpush1.msra.mxu0 %v182
    %342 = vmatprep.subr.mxu0 0.0
    %343 = vmatpush1.msra.mxu0 %v183
    %344 = vmatprep.subr.mxu0 0.0
    %345 = vmatpush1.msra.mxu0 %v184
    %346 = vmatprep.subr.mxu0 0.0
    %347 = vmatpush1.msra.mxu0 %v185
    %348 = vmatprep.subr.mxu0 0.0
    %349 = vmatpush1.msra.mxu0 %v186
    %350 = vmatprep.subr.mxu0 0.0
    %351 = vmatpush1.msra.mxu0 %v187
    %352 = vmatprep.subr.mxu0 0.0
    %353 = vmatpush1.msra.mxu0 %v188
    %354 = vmatprep.subr.mxu0 0.0
    %355 = vmatpush1.msra.mxu0 %v189
    %356 = vmatprep.subr.mxu0 0.0
    %357 = vmatpush1.msra.mxu0 %v190
    %358 = vmatprep.subr.mxu0 0.0
    %359 = vmatpush1.msra.mxu0 %v191
    %360 = vmatprep.subr.mxu0 0.0
    %361 = vmatpush1.msra.mxu0 0.0
    %362 = vmatprep.subr.mxu0 0.0
    %363 = vmatpush1.msra.mxu0 0.0
    %364 = vmatprep.subr.mxu0 0.0
    %365 = vmatpush1.msra.mxu0 0.0
    %366 = vmatprep.subr.mxu0 0.0
    %367 = vmatpush1.msra.mxu0 0.0
    %368 = vmatprep.subr.mxu0 0.0
    %369 = vmatpush1.msra.mxu0 0.0
    %370 = vmatprep.subr.mxu0 0.0
    %371 = vmatpush1.msra.mxu0 0.0
    %372 = vmatprep.subr.mxu0 0.0
    %373 = vmatpush1.msra.mxu0 0.0
    %374 = vmatprep.subr.mxu0 0.0
    %375 = vmatpush1.msra.mxu0 0.0
    %376 = vmatprep.subr.mxu0 0.0
    %377 = vmatpush1.msra.mxu0 0.0
    %378 = vmatprep.subr.mxu0 0.0
    %379 = vmatpush1.msra.mxu0 0.0
    %380 = vmatprep.subr.mxu0 0.0
    %381 = vmatpush1.msra.mxu0 0.0
    %382 = vmatprep.subr.mxu0 0.0
    %383 = vmatpush1.msra.mxu0 0.0
    %384 = vmatprep.subr.mxu0 0.0
    %385 = vmatpush1.msra.mxu0 0.0
    %386 = vmatprep.subr.mxu0 0.0
    %387 = vmatpush1.msra.mxu0 0.0
    %388 = vmatprep.subr.mxu0 0.0
    %389 = vmatpush1.msra.mxu0 0.0
    %390 = vmatprep.subr.mxu0 0.0
    %391 = vmatpush1.msra.mxu0 0.0
    %392 = vmatprep.mubr.f32.mxu0 0.0
    %393 = vmatmul.mubr.f32.gmra.mrb[0].mxu0 0.0
    %v394 = vpop.f32.mrb[0].mxu0
    %v395 = vadd.f32 0.0, %v394
    %v396 = vpop.f32.mrb[0].mxu0
    %397 = vdwg.mxu0
    %v398 = vadd.f32 %v327, %v395
    %v399 = vtanh.pop %v398
    %400 = vmatprep.subr.mxu0 0.0
    %401 = vmatpush1.msra.mxu0 %v208
    %402 = vmatprep.subr.mxu0 0.0
    %403 = vmatpush1.msra.mxu0 %v209
    %404 = vmatprep.subr.mxu0 0.0
    %405 = vmatpush1.msra.mxu0 %v210
    %406 = vmatprep.subr.mxu0 0.0
    %407 = vmatpush1.msra.mxu0 %v211
    %408 = vmatprep.subr.mxu0 0.0
    %409 = vmatpush1.msra.mxu0 %v212
    %410 = vmatprep.subr.mxu0 0.0
    %411 = vmatpush1.msra.mxu0 %v213
    %412 = vmatprep.subr.mxu0 0.0
    %413 = vmatpush1.msra.mxu0 %v214
    %414 = vmatprep.subr.mxu0 0.0
    %415 = vmatpush1.msra.mxu0 %v215
    %416 = vmatprep.subr.mxu0 0.0
    %417 = vmatpush1.msra.mxu0 %v216
    %418 = vmatprep.subr.mxu0 0.0
    %419 = vmatpush1.msra.mxu0 %v217
    %420 = vmatprep.subr.mxu0 0.0
    %421 = vmatpush1.msra.mxu0 %v218
    %422 = vmatprep.subr.mxu0 0.0
    %423 = vmatpush1.msra.mxu0 %v219
    %424 = vmatprep.subr.mxu0 0.0
    %425 = vmatpush1.msra.mxu0 %v220
    %426 = vmatprep.subr.mxu0 0.0
    %427 = vmatpush1.msra.mxu0 %v221
    %428 = vmatprep.subr.mxu0 0.0
    %429 = vmatpush1.msra.mxu0 %v222
    %430 = vmatprep.subr.mxu0 0.0
    %431 = vmatpush1.msra.mxu0 %v223
    %432 = vmatprep.subr.mxu0 0.0
    %433 = vmatpush1.msra.mxu0 0.0
    %434 = vmatprep.subr.mxu0 0.0
    %435 = vmatpush1.msra.mxu0 0.0
    %436 = vmatprep.subr.mxu0 0.0
    %437 = vmatpush1.msra.mxu0 0.0
    %438 = vmatprep.subr.mxu0 0.0
    %439 = vmatpush1.msra.mxu0 0.0
    %440 = vmatprep.subr.mxu0 0.0
    %441 = vmatpush1.msra.mxu0 0.0
    %442 = vmatprep.subr.mxu0 0.0
    %443 = vmatpush1.msra.mxu0 0.0
    %444 = vmatprep.subr.mxu0 0.0
    %445 = vmatpush1.msra.mxu0 0.0
    %446 = vmatprep.subr.mxu0 0.0
    %447 = vmatpush1.msra.mxu0 0.0
    %448 = vmatprep.subr.mxu0 0.0
    %449 = vmatpush1.msra.mxu0 0.0
    %450 = vmatprep.subr.mxu0 0.0
    %451 = vmatpush1.msra.mxu0 0.0
    %452 = vmatprep.subr.mxu0 0.0
    %453 = vmatpush1.msra.mxu0 0.0
    %454 = vmatprep.subr.mxu0 0.0
    %455 = vmatpush1.msra.mxu0 0.0
    %456 = vmatprep.subr.mxu0 0.0
    %457 = vmatpush1.msra.mxu0 0.0
    %458 = vmatprep.subr.mxu0 0.0
    %459 = vmatpush1.msra.mxu0 0.0
    %460 = vmatprep.subr.mxu0 0.0
    %461 = vmatpush1.msra.mxu0 0.0
    %462 = vmatprep.subr.mxu0 0.0
    %463 = vmatpush1.msra.mxu0 0.0
    %464 = vmatprep.mubr.f32.mxu0 0.0
    %465 = vmatmul.mubr.f32.gmra.mrb[0].mxu0 0.0
    %v466 = vpop.f32.mrb[0].mxu0
    %v467 = vadd.f32 0.0, %v466
    %v468 = vpop.f32.mrb[0].mxu0
    %469 = vdwg.mxu0
    %470 = vmatprep.subr.mxu0 0.0
    %471 = vmatpush1.msra.mxu0 %v192
    %472 = vmatprep.subr.mxu0 0.0
    %473 = vmatpush1.msra.mxu0 %v193
    %474 = vmatprep.subr.mxu0 0.0
    %475 = vmatpush1.msra.mxu0 %v194
    %476 = vmatprep.subr.mxu0 0.0
    %477 = vmatpush1.msra.mxu0 %v195
    %478 = vmatprep.subr.mxu0 0.0
    %479 = vmatpush1.msra.mxu0 %v196
    %480 = vmatprep.subr.mxu0 0.0
    %481 = vmatpush1.msra.mxu0 %v197
    %482 = vmatprep.subr.mxu0 0.0
    %483 = vmatpush1.msra.mxu0 %v198
    %484 = vmatprep.subr.mxu0 0.0
    %485 = vmatpush1.msra.mxu0 %v199
    %486 = vmatprep.subr.mxu0 0.0
    %487 = vmatpush1.msra.mxu0 %v200
    %488 = vmatprep.subr.mxu0 0.0
    %489 = vmatpush1.msra.mxu0 %v201
    %490 = vmatprep.subr.mxu0 0.0
    %491 = vmatpush1.msra.mxu0 %v202
    %492 = vmatprep.subr.mxu0 0.0
    %493 = vmatpush1.msra.mxu0 %v203
    %494 = vmatprep.subr.mxu0 0.0
    %495 = vmatpush1.msra.mxu0 %v204
    %496 = vmatprep.subr.mxu0 0.0
    %497 = vmatpush1.msra.mxu0 %v205
    %498 = vmatprep.subr.mxu0 0.0
    %499 = vmatpush1.msra.mxu0 %v206
    %500 = vmatprep.subr.mxu0 0.0
    %501 = vmatpush1.msra.mxu0 %v207
    %502 = vmatprep.subr.mxu0 0.0
    %503 = vmatpush1.msra.mxu0 0.0
    %504 = vmatprep.subr.mxu0 0.0
    %505 = vmatpush1.msra.mxu0 0.0
    %506 = vmatprep.subr.mxu0 0.0
    %507 = vmatpush1.msra.mxu0 0.0
    %508 = vmatprep.subr.mxu0 0.0
    %509 = vmatpush1.msra.mxu0 0.0
    %510 = vmatprep.subr.mxu0 0.0
    %511 = vmatpush1.msra.mxu0 0.0
    %512 = vmatprep.subr.mxu0 0.0
    %513 = vmatpush1.msra.mxu0 0.0
    %514 = vmatprep.subr.mxu0 0.0
    %515 = vmatpush1.msra.mxu0 0.0
    %516 = vmatprep.subr.mxu0 0.0
    %517 = vmatpush1.msra.mxu0 0.0
    %518 = vmatprep.subr.mxu0 0.0
    %519 = vmatpush1.msra.mxu0 0.0
    %520 = vmatprep.subr.mxu0 0.0
    %521 = vmatpush1.msra.mxu0 0.0
    %522 = vmatprep.subr.mxu0 0.0
    %523 = vmatpush1.msra.mxu0 0.0
    %524 = vmatprep.subr.mxu0 0.0
    %525 = vmatpush1.msra.mxu0 0.0
    %526 = vmatprep.subr.mxu0 0.0
    %527 = vmatpush1.msra.mxu0 0.0
    %528 = vmatprep.subr.mxu0 0.0
    %529 = vmatpush1.msra.mxu0 0.0
    %530 = vmatprep.subr.mxu0 0.0
    %531 = vmatpush1.msra.mxu0 0.0
    %532 = vmatprep.subr.mxu0 0.0
    %533 = vmatpush1.msra.mxu0 0.0
    %534 = vmatprep.mubr.f32.mxu0 0.0
    %535 = vmatmul.mubr.f32.gmra.mrb[0].mxu0 %v399
    %v536 = vpop.f32.mrb[0].mxu0
    %v537 = vadd.f32 %v467, %v536
    %v538 = vpop.f32.mrb[0].mxu0
    %539 = vdwg.mxu0
    %v541 = vlaneseq
    %v542 = vshrl.u32 %v541, 7
    %v543 = vsub.s32 0, %v542
    %v544 = vrot.slane %v224, %v543
    %v546 = vadd.f32 %v537, %v544
    %v547 = vtanh.pop %v546
    %548 = vset.pattern.permute.xlu0 1
    %549 = vperm.xlu0 %548, %v172
    %v550 = vpop.permute.xlu0 %549
    %v552 = vmul.f32 %v550, %v318
    %v553 = vadd.f32 %v552, %v325
    %554 = vmatprep.subr.mxu0 0.0
    %555 = vmatpush1.msra.mxu0 %v176
    %556 = vmatprep.subr.mxu0 0.0
    %557 = vmatpush1.msra.mxu0 %v177
    %558 = vmatprep.subr.mxu0 0.0
    %559 = vmatpush1.msra.mxu0 %v178
    %560 = vmatprep.subr.mxu0 0.0
    %561 = vmatpush1.msra.mxu0 %v179
    %562 = vmatprep.subr.mxu0 0.0
    %563 = vmatpush1.msra.mxu0 %v180
    %564 = vmatprep.subr.mxu0 0.0
    %565 = vmatpush1.msra.mxu0 %v181
    %566 = vmatprep.subr.mxu0 0.0
    %567 = vmatpush1.msra.mxu0 %v182
    %568 = vmatprep.subr.mxu0 0.0
    %569 = vmatpush1.msra.mxu0 %v183
    %570 = vmatprep.subr.mxu0 0.0
    %571 = vmatpush1.msra.mxu0 %v184
    %572 = vmatprep.subr.mxu0 0.0
    %573 = vmatpush1.msra.mxu0 %v185
    %574 = vmatprep.subr.mxu0 0.0
    %575 = vmatpush1.msra.mxu0 %v186
    %576 = vmatprep.subr.mxu0 0.0
    %577 = vmatpush1.msra.mxu0 %v187
    %578 = vmatprep.subr.mxu0 0.0
    %579 = vmatpush1.msra.mxu0 %v188
    %580 = vmatprep.subr.mxu0 0.0
    %581 = vmatpush1.msra.mxu0 %v189
    %582 = vmatprep.subr.mxu0 0.0
    %583 = vmatpush1.msra.mxu0 %v190
    %584 = vmatprep.subr.mxu0 0.0
    %585 = vmatpush1.msra.mxu0 %v191
    %586 = vmatprep.subr.mxu0 0.0
    %587 = vmatpush1.msra.mxu0 0.0
    %588 = vmatprep.subr.mxu0 0.0
    %589 = vmatpush1.msra.mxu0 0.0
    %590 = vmatprep.subr.mxu0 0.0
    %591 = vmatpush1.msra.mxu0 0.0
    %592 = vmatprep.subr.mxu0 0.0
    %593 = vmatpush1.msra.mxu0 0.0
    %594 = vmatprep.subr.mxu0 0.0
    %595 = vmatpush1.msra.mxu0 0.0
    %596 = vmatprep.subr.mxu0 0.0
    %597 = vmatpush1.msra.mxu0 0.0
    %598 = vmatprep.subr.mxu0 0.0
    %599 = vmatpush1.msra.mxu0 0.0
    %600 = vmatprep.subr.mxu0 0.0
    %601 = vmatpush1.msra.mxu0 0.0
    %602 = vmatprep.subr.mxu0 0.0
    %603 = vmatpush1.msra.mxu0 0.0
    %604 = vmatprep.subr.mxu0 0.0
    %605 = vmatpush1.msra.mxu0 0.0
    %606 = vmatprep.subr.mxu0 0.0
    %607 = vmatpush1.msra.mxu0 0.0
    %608 = vmatprep.subr.mxu0 0.0
    %609 = vmatpush1.msra.mxu0 0.0
    %610 = vmatprep.subr.mxu0 0.0
    %611 = vmatpush1.msra.mxu0 0.0
    %612 = vmatprep.subr.mxu0 0.0
    %613 = vmatpush1.msra.mxu0 0.0
    %614 = vmatprep.subr.mxu0 0.0
    %615 = vmatpush1.msra.mxu0 0.0
    %616 = vmatprep.subr.mxu0 0.0
    %617 = vmatpush1.msra.mxu0 0.0
    %618 = vmatprep.mubr.f32.mxu0 0.0
    %619 = vmatmul.mubr.f32.gmra.mrb[0].mxu0 %v399
    %v620 = vpop.f32.mrb[0].mxu0
    %v621 = vadd.f32 0.0, %v620
    %v622 = vpop.f32.mrb[0].mxu0
    %623 = vdwg.mxu0
    %v624 = vadd.f32 %v553, %v621
    %v625 = vtanh.pop %v624
    %626 = vmatprep.subr.mxu0 0.0
    %627 = vmatpush1.msra.mxu0 %v208
    %628 = vmatprep.subr.mxu0 0.0
    %629 = vmatpush1.msra.mxu0 %v209
    %630 = vmatprep.subr.mxu0 0.0
    %631 = vmatpush1.msra.mxu0 %v210
    %632 = vmatprep.subr.mxu0 0.0
    %633 = vmatpush1.msra.mxu0 %v211
    %634 = vmatprep.subr.mxu0 0.0
    %635 = vmatpush1.msra.mxu0 %v212
    %636 = vmatprep.subr.mxu0 0.0
    %637 = vmatpush1.msra.mxu0 %v213
    %638 = vmatprep.subr.mxu0 0.0
    %639 = vmatpush1.msra.mxu0 %v214
    %640 = vmatprep.subr.mxu0 0.0
    %641 = vmatpush1.msra.mxu0 %v215
    %642 = vmatprep.subr.mxu0 0.0
    %643 = vmatpush1.msra.mxu0 %v216
    %644 = vmatprep.subr.mxu0 0.0
    %645 = vmatpush1.msra.mxu0 %v217
    %646 = vmatprep.subr.mxu0 0.0
    %647 = vmatpush1.msra.mxu0 %v218
    %648 = vmatprep.subr.mxu0 0.0
    %649 = vmatpush1.msra.mxu0 %v219
    %650 = vmatprep.subr.mxu0 0.0
    %651 = vmatpush1.msra.mxu0 %v220
    %652 = vmatprep.subr.mxu0 0.0
    %653 = vmatpush1.msra.mxu0 %v221
    %654 = vmatprep.subr.mxu0 0.0
    %655 = vmatpush1.msra.mxu0 %v222
    %656 = vmatprep.subr.mxu0 0.0
    %657 = vmatpush1.msra.mxu0 %v223
    %658 = vmatprep.subr.mxu0 0.0
    %659 = vmatpush1.msra.mxu0 0.0
    %660 = vmatprep.subr.mxu0 0.0
    %661 = vmatpush1.msra.mxu0 0.0
    %662 = vmatprep.subr.mxu0 0.0
    %663 = vmatpush1.msra.mxu0 0.0
    %664 = vmatprep.subr.mxu0 0.0
    %665 = vmatpush1.msra.mxu0 0.0
    %666 = vmatprep.subr.mxu0 0.0
    %667 = vmatpush1.msra.mxu0 0.0
    %668 = vmatprep.subr.mxu0 0.0
    %669 = vmatpush1.msra.mxu0 0.0
    %670 = vmatprep.subr.mxu0 0.0
    %671 = vmatpush1.msra.mxu0 0.0
    %672 = vmatprep.subr.mxu0 0.0
    %673 = vmatpush1.msra.mxu0 0.0
    %674 = vmatprep.subr.mxu0 0.0
    %675 = vmatpush1.msra.mxu0 0.0
    %676 = vmatprep.subr.mxu0 0.0
    %677 = vmatpush1.msra.mxu0 0.0
    %678 = vmatprep.subr.mxu0 0.0
    %679 = vmatpush1.msra.mxu0 0.0
    %680 = vmatprep.subr.mxu0 0.0
    %681 = vmatpush1.msra.mxu0 0.0
    %682 = vmatprep.subr.mxu0 0.0
    %683 = vmatpush1.msra.mxu0 0.0
    %684 = vmatprep.subr.mxu0 0.0
    %685 = vmatpush1.msra.mxu0 0.0
    %686 = vmatprep.subr.mxu0 0.0
    %687 = vmatpush1.msra.mxu0 0.0
    %688 = vmatprep.subr.mxu0 0.0
    %689 = vmatpush1.msra.mxu0 0.0
    %690 = vmatprep.mubr.f32.mxu0 0.0
    %691 = vmatmul.mubr.f32.gmra.mrb[0].mxu0 %v547
    %v692 = vpop.f32.mrb[0].mxu0
    %v693 = vadd.f32 0.0, %v692
    %v694 = vpop.f32.mrb[0].mxu0
    %695 = vdwg.mxu0
    %696 = vmatprep.subr.mxu0 0.0
    %697 = vmatpush1.msra.mxu0 %v192
    %698 = vmatprep.subr.mxu0 0.0
    %699 = vmatpush1.msra.mxu0 %v193
    %700 = vmatprep.subr.mxu0 0.0
    %701 = vmatpush1.msra.mxu0 %v194
    %702 = vmatprep.subr.mxu0 0.0
    %703 = vmatpush1.msra.mxu0 %v195
    %704 = vmatprep.subr.mxu0 0.0
    %705 = vmatpush1.msra.mxu0 %v196
    %706 = vmatprep.subr.mxu0 0.0
    %707 = vmatpush1.msra.mxu0 %v197
    %708 = vmatprep.subr.mxu0 0.0
    %709 = vmatpush1.msra.mxu0 %v198
    %710 = vmatprep.subr.mxu0 0.0
    %711 = vmatpush1.msra.mxu0 %v199
    %712 = vmatprep.subr.mxu0 0.0
    %713 = vmatpush1.msra.mxu0 %v200
    %714 = vmatprep.subr.mxu0 0.0
    %715 = vmatpush1.msra.mxu0 %v201
    %716 = vmatprep.subr.mxu0 0.0
    %717 = vmatpush1.msra.mxu0 %v202
    %718 = vmatprep.subr.mxu0 0.0
    %719 = vmatpush1.msra.mxu0 %v203
    %720 = vmatprep.subr.mxu0 0.0
    %721 = vmatpush1.msra.mxu0 %v204
    %722 = vmatprep.subr.mxu0 0.0
    %723 = vmatpush1.msra.mxu0 %v205
    %724 = vmatprep.subr.mxu0 0.0
    %725 = vmatpush1.msra.mxu0 %v206
    %726 = vmatprep.subr.mxu0 0.0
    %727 = vmatpush1.msra.mxu0 %v207
    %728 = vmatprep.subr.mxu0 0.0
    %729 = vmatpush1.msra.mxu0 0.0
    %730 = vmatprep.subr.mxu0 0.0
    %731 = vmatpush1.msra.mxu0 0.0
    %732 = vmatprep.subr.mxu0 0.0
    %733 = vmatpush1.msra.mxu0 0.0
    %734 = vmatprep.subr.mxu0 0.0
    %735 = vmatpush1.msra.mxu0 0.0
    %736 = vmatprep.subr.mxu0 0.0
    %737 = vmatpush1.msra.mxu0 0.0
    %738 = vmatprep.subr.mxu0 0.0
    %739 = vmatpush1.msra.mxu0 0.0
    %740 = vmatprep.subr.mxu0 0.0
    %741 = vmatpush1.msra.mxu0 0.0
    %742 = vmatprep.subr.mxu0 0.0
    %743 = vmatpush1.msra.mxu0 0.0
    %744 = vmatprep.subr.mxu0 0.0
    %745 = vmatpush1.msra.mxu0 0.0
    %746 = vmatprep.subr.mxu0 0.0
    %747 = vmatpush1.msra.mxu0 0.0
    %748 = vmatprep.subr.mxu0 0.0
    %749 = vmatpush1.msra.mxu0 0.0
    %750 = vmatprep.subr.mxu0 0.0
    %751 = vmatpush1.msra.mxu0 0.0
    %752 = vmatprep.subr.mxu0 0.0
    %753 = vmatpush1.msra.mxu0 0.0
    %754 = vmatprep.subr.mxu0 0.0
    %755 = vmatpush1.msra.mxu0 0.0
    %756 = vmatprep.subr.mxu0 0.0
    %757 = vmatpush1.msra.mxu0 0.0
    %758 = vmatprep.subr.mxu0 0.0
    %759 = vmatpush1.msra.mxu0 0.0
    %760 = vmatprep.mubr.f32.mxu0 0.0
    %761 = vmatmul.mubr.f32.gmra.mrb[0].mxu0 %v625
    %v762 = vpop.f32.mrb[0].mxu0
    %v763 = vadd.f32 %v693, %v762
    %v764 = vpop.f32.mrb[0].mxu0
    %765 = vdwg.mxu0
    %v766 = vadd.f32 %v763, %v544
    %v767 = vtanh.pop %v766
    %768 = vset.pattern.permute.xlu0 2
    %769 = vperm.xlu0 %768, %v172
    %v770 = vpop.permute.xlu0 %769
    %v772 = vmul.f32 %v770, %v318
    %v773 = vadd.f32 %v772, %v325
    %774 = vmatprep.subr.mxu0 0.0
    %775 = vmatpush1.msra.mxu0 %v176
    %776 = vmatprep.subr.mxu0 0.0
    %777 = vmatpush1.msra.mxu0 %v177
    %778 = vmatprep.subr.mxu0 0.0
    %779 = vmatpush1.msra.mxu0 %v178
    %780 = vmatprep.subr.mxu0 0.0
    %781 = vmatpush1.msra.mxu0 %v179
    %782 = vmatprep.subr.mxu0 0.0
    %783 = vmatpush1.msra.mxu0 %v180
    %784 = vmatprep.subr.mxu0 0.0
    %785 = vmatpush1.msra.mxu0 %v181
    %786 = vmatprep.subr.mxu0 0.0
    %787 = vmatpush1.msra.mxu0 %v182
    %788 = vmatprep.subr.mxu0 0.0
    %789 = vmatpush1.msra.mxu0 %v183
    %790 = vmatprep.subr.mxu0 0.0
    %791 = vmatpush1.msra.mxu0 %v184
    %792 = vmatprep.subr.mxu0 0.0
    %793 = vmatpush1.msra.mxu0 %v185
    %794 = vmatprep.subr.mxu0 0.0
    %795 = vmatpush1.msra.mxu0 %v186
    %796 = vmatprep.subr.mxu0 0.0
    %797 = vmatpush1.msra.mxu0 %v187
    %798 = vmatprep.subr.mxu0 0.0
    %799 = vmatpush1.msra.mxu0 %v188
    %800 = vmatprep.subr.mxu0 0.0
    %801 = vmatpush1.msra.mxu0 %v189
    %802 = vmatprep.subr.mxu0 0.0
    %803 = vmatpush1.msra.mxu0 %v190
    %804 = vmatprep.subr.mxu0 0.0
    %805 = vmatpush1.msra.mxu0 %v191
    %806 = vmatprep.subr.mxu0 0.0
    %807 = vmatpush1.msra.mxu0 0.0
    %808 = vmatprep.subr.mxu0 0.0
    %809 = vmatpush1.msra.mxu0 0.0
    %810 = vmatprep.subr.mxu0 0.0
    %811 = vmatpush1.msra.mxu0 0.0
    %812 = vmatprep.subr.mxu0 0.0
    %813 = vmatpush1.msra.mxu0 0.0
    %814 = vmatprep.subr.mxu0 0.0
    %815 = vmatpush1.msra.mxu0 0.0
    %816 = vmatprep.subr.mxu0 0.0
    %817 = vmatpush1.msra.mxu0 0.0
    %818 = vmatprep.subr.mxu0 0.0
    %819 = vmatpush1.msra.mxu0 0.0
    %820 = vmatprep.subr.mxu0 0.0
    %821 = vmatpush1.msra.mxu0 0.0
    %822 = vmatprep.subr.mxu0 0.0
    %823 = vmatpush1.msra.mxu0 0.0
    %824 = vmatprep.subr.mxu0 0.0
    %825 = vmatpush1.msra.mxu0 0.0
    %826 = vmatprep.subr.mxu0 0.0
    %827 = vmatpush1.msra.mxu0 0.0
    %828 = vmatprep.subr.mxu0 0.0
    %829 = vmatpush1.msra.mxu0 0.0
    %830 = vmatprep.subr.mxu0 0.0
    %831 = vmatpush1.msra.mxu0 0.0
    %832 = vmatprep.subr.mxu0 0.0
    %833 = vmatpush1.msra.mxu0 0.0
    %834 = vmatprep.subr.mxu0 0.0
    %835 = vmatpush1.msra.mxu0 0.0
    %836 = vmatprep.subr.mxu0 0.0
    %837 = vmatpush1.msra.mxu0 0.0
    %838 = vmatprep.mubr.f32.mxu0 0.0
    %839 = vmatmul.mubr.f32.gmra.mrb[0].mxu0 %v625
    %v840 = vpop.f32.mrb[0].mxu0
    %v841 = vadd.f32 0.0, %v840
    %v842 = vpop.f32.mrb[0].mxu0
    %843 = vdwg.mxu0
    %v844 = vadd.f32 %v773, %v841
    %v845 = vtanh.pop %v844
    %846 = vmatprep.subr.mxu0 0.0
    %847 = vmatpush1.msra.mxu0 %v208
    %848 = vmatprep.subr.mxu0 0.0
    %849 = vmatpush1.msra.mxu0 %v209
    %850 = vmatprep.subr.mxu0 0.0
    %851 = vmatpush1.msra.mxu0 %v210
    %852 = vmatprep.subr.mxu0 0.0
    %853 = vmatpush1.msra.mxu0 %v211
    %854 = vmatprep.subr.mxu0 0.0
    %855 = vmatpush1.msra.mxu0 %v212
    %856 = vmatprep.subr.mxu0 0.0
    %857 = vmatpush1.msra.mxu0 %v213
    %858 = vmatprep.subr.mxu0 0.0
    %859 = vmatpush1.msra.mxu0 %v214
    %860 = vmatprep.subr.mxu0 0.0
    %861 = vmatpush1.msra.mxu0 %v215
    %862 = vmatprep.subr.mxu0 0.0
    %863 = vmatpush1.msra.mxu0 %v216
    %864 = vmatprep.subr.mxu0 0.0
    %865 = vmatpush1.msra.mxu0 %v217
    %866 = vmatprep.subr.mxu0 0.0
    %867 = vmatpush1.msra.mxu0 %v218
    %868 = vmatprep.subr.mxu0 0.0
    %869 = vmatpush1.msra.mxu0 %v219
    %870 = vmatprep.subr.mxu0 0.0
    %871 = vmatpush1.msra.mxu0 %v220
    %872 = vmatprep.subr.mxu0 0.0
    %873 = vmatpush1.msra.mxu0 %v221
    %874 = vmatprep.subr.mxu0 0.0
    %875 = vmatpush1.msra.mxu0 %v222
    %876 = vmatprep.subr.mxu0 0.0
    %877 = vmatpush1.msra.mxu0 %v223
    %878 = vmatprep.subr.mxu0 0.0
    %879 = vmatpush1.msra.mxu0 0.0
    %880 = vmatprep.subr.mxu0 0.0
    %881 = vmatpush1.msra.mxu0 0.0
    %882 = vmatprep.subr.mxu0 0.0
    %883 = vmatpush1.msra.mxu0 0.0
    %884 = vmatprep.subr.mxu0 0.0
    %885 = vmatpush1.msra.mxu0 0.0
    %886 = vmatprep.subr.mxu0 0.0
    %887 = vmatpush1.msra.mxu0 0.0
    %888 = vmatprep.subr.mxu0 0.0
    %889 = vmatpush1.msra.mxu0 0.0
    %890 = vmatprep.subr.mxu0 0.0
    %891 = vmatpush1.msra.mxu0 0.0
    %892 = vmatprep.subr.mxu0 0.0
    %893 = vmatpush1.msra.mxu0 0.0
    %894 = vmatprep.subr.mxu0 0.0
    %895 = vmatpush1.msra.mxu0 0.0
    %896 = vmatprep.subr.mxu0 0.0
    %897 = vmatpush1.msra.mxu0 0.0
    %898 = vmatprep.subr.mxu0 0.0
    %899 = vmatpush1.msra.mxu0 0.0
    %900 = vmatprep.subr.mxu0 0.0
    %901 = vmatpush1.msra.mxu0 0.0
    %902 = vmatprep.subr.mxu0 0.0
    %903 = vmatpush1.msra.mxu0 0.0
    %904 = vmatprep.subr.mxu0 0.0
    %905 = vmatpush1.msra.mxu0 0.0
    %906 = vmatprep.subr.mxu0 0.0
    %907 = vmatpush1.msra.mxu0 0.0
    %908 = vmatprep.subr.mxu0 0.0
    %909 = vmatpush1.msra.mxu0 0.0
    %910 = vmatprep.mubr.f32.mxu0 0.0
    %911 = vmatmul.mubr.f32.gmra.mrb[0].mxu0 %v767
    %v912 = vpop.f32.mrb[0].mxu0
    %v913 = vadd.f32 0.0, %v912
    %v914 = vpop.f32.mrb[0].mxu0
    %915 = vdwg.mxu0
    %916 = vmatprep.subr.mxu0 0.0
    %917 = vmatpush1.msra.mxu0 %v192
    %918 = vmatprep.subr.mxu0 0.0
    %919 = vmatpush1.msra.mxu0 %v193
    %920 = vmatprep.subr.mxu0 0.0
    %921 = vmatpush1.msra.mxu0 %v194
    %922 = vmatprep.subr.mxu0 0.0
    %923 = vmatpush1.msra.mxu0 %v195
    %924 = vmatprep.subr.mxu0 0.0
    %925 = vmatpush1.msra.mxu0 %v196
    %926 = vmatprep.subr.mxu0 0.0
    %927 = vmatpush1.msra.mxu0 %v197
    %928 = vmatprep.subr.mxu0 0.0
    %929 = vmatpush1.msra.mxu0 %v198
    %930 = vmatprep.subr.mxu0 0.0
    %931 = vmatpush1.msra.mxu0 %v199
    %932 = vmatprep.subr.mxu0 0.0
    %933 = vmatpush1.msra.mxu0 %v200
    %934 = vmatprep.subr.mxu0 0.0
    %935 = vmatpush1.msra.mxu0 %v201
    %936 = vmatprep.subr.mxu0 0.0
    %937 = vmatpush1.msra.mxu0 %v202
    %938 = vmatprep.subr.mxu0 0.0
    %939 = vmatpush1.msra.mxu0 %v203
    %940 = vmatprep.subr.mxu0 0.0
    %941 = vmatpush1.msra.mxu0 %v204
    %942 = vmatprep.subr.mxu0 0.0
    %943 = vmatpush1.msra.mxu0 %v205
    %944 = vmatprep.subr.mxu0 0.0
    %945 = vmatpush1.msra.mxu0 %v206
    %946 = vmatprep.subr.mxu0 0.0
    %947 = vmatpush1.msra.mxu0 %v207
    %948 = vmatprep.subr.mxu0 0.0
    %949 = vmatpush1.msra.mxu0 0.0
    %950 = vmatprep.subr.mxu0 0.0
    %951 = vmatpush1.msra.mxu0 0.0
    %952 = vmatprep.subr.mxu0 0.0
    %953 = vmatpush1.msra.mxu0 0.0
    %954 = vmatprep.subr.mxu0 0.0
    %955 = vmatpush1.msra.mxu0 0.0
    %956 = vmatprep.subr.mxu0 0.0
    %957 = vmatpush1.msra.mxu0 0.0
    %958 = vmatprep.subr.mxu0 0.0
    %959 = vmatpush1.msra.mxu0 0.0
    %960 = vmatprep.subr.mxu0 0.0
    %961 = vmatpush1.msra.mxu0 0.0
    %962 = vmatprep.subr.mxu0 0.0
    %963 = vmatpush1.msra.mxu0 0.0
    %964 = vmatprep.subr.mxu0 0.0
    %965 = vmatpush1.msra.mxu0 0.0
    %966 = vmatprep.subr.mxu0 0.0
    %967 = vmatpush1.msra.mxu0 0.0
    %968 = vmatprep.subr.mxu0 0.0
    %969 = vmatpush1.msra.mxu0 0.0
    %970 = vmatprep.subr.mxu0 0.0
    %971 = vmatpush1.msra.mxu0 0.0
    %972 = vmatprep.subr.mxu0 0.0
    %973 = vmatpush1.msra.mxu0 0.0
    %974 = vmatprep.subr.mxu0 0.0
    %975 = vmatpush1.msra.mxu0 0.0
    %976 = vmatprep.subr.mxu0 0.0
    %977 = vmatpush1.msra.mxu0 0.0
    %978 = vmatprep.subr.mxu0 0.0
    %979 = vmatpush1.msra.mxu0 0.0
    %980 = vmatprep.mubr.f32.mxu0 0.0
    %981 = vmatmul.mubr.f32.gmra.mrb[0].mxu0 %v845
    %v982 = vpop.f32.mrb[0].mxu0
    %v983 = vadd.f32 %v913, %v982
    %v984 = vpop.f32.mrb[0].mxu0
    %985 = vdwg.mxu0
    %v986 = vadd.f32 %v983, %v544
    %v987 = vtanh.pop %v986
    %988 = vset.pattern.permute.xlu0 3
    %989 = vperm.xlu0 %988, %v172
    %v990 = vpop.permute.xlu0 %989
    %v992 = vmul.f32 %v990, %v318
    %v993 = vadd.f32 %v992, %v325
    %994 = vmatprep.subr.mxu0 0.0
    %995 = vmatpush1.msra.mxu0 %v176
    %996 = vmatprep.subr.mxu0 0.0
    %997 = vmatpush1.msra.mxu0 %v177
    %998 = vmatprep.subr.mxu0 0.0
    %999 = vmatpush1.msra.mxu0 %v178
    %1000 = vmatprep.subr.mxu0 0.0
    %1001 = vmatpush1.msra.mxu0 %v179
    %1002 = vmatprep.subr.mxu0 0.0
    %1003 = vmatpush1.msra.mxu0 %v180
    %1004 = vmatprep.subr.mxu0 0.0
    %1005 = vmatpush1.msra.mxu0 %v181
    %1006 = vmatprep.subr.mxu0 0.0
    %1007 = vmatpush1.msra.mxu0 %v182
    %1008 = vmatprep.subr.mxu0 0.0
    %1009 = vmatpush1.msra.mxu0 %v183
    %1010 = vmatprep.subr.mxu0 0.0
    %1011 = vmatpush1.msra.mxu0 %v184
    %1012 = vmatprep.subr.mxu0 0.0
    %1013 = vmatpush1.msra.mxu0 %v185
    %1014 = vmatprep.subr.mxu0 0.0
    %1015 = vmatpush1.msra.mxu0 %v186
    %1016 = vmatprep.subr.mxu0 0.0
    %1017 = vmatpush1.msra.mxu0 %v187
    %1018 = vmatprep.subr.mxu0 0.0
    %1019 = vmatpush1.msra.mxu0 %v188
    %1020 = vmatprep.subr.mxu0 0.0
    %1021 = vmatpush1.msra.mxu0 %v189
    %1022 = vmatprep.subr.mxu0 0.0
    %1023 = vmatpush1.msra.mxu0 %v190
    %1024 = vmatprep.subr.mxu0 0.0
    %1025 = vmatpush1.msra.mxu0 %v191
    %1026 = vmatprep.subr.mxu0 0.0
    %1027 = vmatpush1.msra.mxu0 0.0
    %1028 = vmatprep.subr.mxu0 0.0
    %1029 = vmatpush1.msra.mxu0 0.0
    %1030 = vmatprep.subr.mxu0 0.0
    %1031 = vmatpush1.msra.mxu0 0.0
    %1032 = vmatprep.subr.mxu0 0.0
    %1033 = vmatpush1.msra.mxu0 0.0
    %1034 = vmatprep.subr.mxu0 0.0
    %1035 = vmatpush1.msra.mxu0 0.0
    %1036 = vmatprep.subr.mxu0 0.0
    %1037 = vmatpush1.msra.mxu0 0.0
    %1038 = vmatprep.subr.mxu0 0.0
    %1039 = vmatpush1.msra.mxu0 0.0
    %1040 = vmatprep.subr.mxu0 0.0
    %1041 = vmatpush1.msra.mxu0 0.0
    %1042 = vmatprep.subr.mxu0 0.0
    %1043 = vmatpush1.msra.mxu0 0.0
    %1044 = vmatprep.subr.mxu0 0.0
    %1045 = vmatpush1.msra.mxu0 0.0
    %1046 = vmatprep.subr.mxu0 0.0
    %1047 = vmatpush1.msra.mxu0 0.0
    %1048 = vmatprep.subr.mxu0 0.0
    %1049 = vmatpush1.msra.mxu0 0.0
    %1050 = vmatprep.subr.mxu0 0.0
    %1051 = vmatpush1.msra.mxu0 0.0
    %1052 = vmatprep.subr.mxu0 0.0
    %1053 = vmatpush1.msra.mxu0 0.0
    %1054 = vmatprep.subr.mxu0 0.0
    %1055 = vmatpush1.msra.mxu0 0.0
    %1056 = vmatprep.subr.mxu0 0.0
    %1057 = vmatpush1.msra.mxu0 0.0
    %1058 = vmatprep.mubr.f32.mxu0 0.0
    %1059 = vmatmul.mubr.f32.gmra.mrb[0].mxu0 %v845
    %v1060 = vpop.f32.mrb[0].mxu0
    %v1061 = vadd.f32 0.0, %v1060
    %v1062 = vpop.f32.mrb[0].mxu0
    %1063 = vdwg.mxu0
    %v1064 = vadd.f32 %v993, %v1061
    %v1065 = vtanh.pop %v1064
    %1066 = vmatprep.subr.mxu0 0.0
    %1067 = vmatpush1.msra.mxu0 %v208
    %1068 = vmatprep.subr.mxu0 0.0
    %1069 = vmatpush1.msra.mxu0 %v209
    %1070 = vmatprep.subr.mxu0 0.0
    %1071 = vmatpush1.msra.mxu0 %v210
    %1072 = vmatprep.subr.mxu0 0.0
    %1073 = vmatpush1.msra.mxu0 %v211
    %1074 = vmatprep.subr.mxu0 0.0
    %1075 = vmatpush1.msra.mxu0 %v212
    %1076 = vmatprep.subr.mxu0 0.0
    %1077 = vmatpush1.msra.mxu0 %v213
    %1078 = vmatprep.subr.mxu0 0.0
    %1079 = vmatpush1.msra.mxu0 %v214
    %1080 = vmatprep.subr.mxu0 0.0
    %1081 = vmatpush1.msra.mxu0 %v215
    %1082 = vmatprep.subr.mxu0 0.0
    %1083 = vmatpush1.msra.mxu0 %v216
    %1084 = vmatprep.subr.mxu0 0.0
    %1085 = vmatpush1.msra.mxu0 %v217
    %1086 = vmatprep.subr.mxu0 0.0
    %1087 = vmatpush1.msra.mxu0 %v218
    %1088 = vmatprep.subr.mxu0 0.0
    %1089 = vmatpush1.msra.mxu0 %v219
    %1090 = vmatprep.subr.mxu0 0.0
    %1091 = vmatpush1.msra.mxu0 %v220
    %1092 = vmatprep.subr.mxu0 0.0
    %1093 = vmatpush1.msra.mxu0 %v221
    %1094 = vmatprep.subr.mxu0 0.0
    %1095 = vmatpush1.msra.mxu0 %v222
    %1096 = vmatprep.subr.mxu0 0.0
    %1097 = vmatpush1.msra.mxu0 %v223
    %1098 = vmatprep.subr.mxu0 0.0
    %1099 = vmatpush1.msra.mxu0 0.0
    %1100 = vmatprep.subr.mxu0 0.0
    %1101 = vmatpush1.msra.mxu0 0.0
    %1102 = vmatprep.subr.mxu0 0.0
    %1103 = vmatpush1.msra.mxu0 0.0
    %1104 = vmatprep.subr.mxu0 0.0
    %1105 = vmatpush1.msra.mxu0 0.0
    %1106 = vmatprep.subr.mxu0 0.0
    %1107 = vmatpush1.msra.mxu0 0.0
    %1108 = vmatprep.subr.mxu0 0.0
    %1109 = vmatpush1.msra.mxu0 0.0
    %1110 = vmatprep.subr.mxu0 0.0
    %1111 = vmatpush1.msra.mxu0 0.0
    %1112 = vmatprep.subr.mxu0 0.0
    %1113 = vmatpush1.msra.mxu0 0.0
    %1114 = vmatprep.subr.mxu0 0.0
    %1115 = vmatpush1.msra.mxu0 0.0
    %1116 = vmatprep.subr.mxu0 0.0
    %1117 = vmatpush1.msra.mxu0 0.0
    %1118 = vmatprep.subr.mxu0 0.0
    %1119 = vmatpush1.msra.mxu0 0.0
    %1120 = vmatprep.subr.mxu0 0.0
    %1121 = vmatpush1.msra.mxu0 0.0
    %1122 = vmatprep.subr.mxu0 0.0
    %1123 = vmatpush1.msra.mxu0 0.0
    %1124 = vmatprep.subr.mxu0 0.0
    %1125 = vmatpush1.msra.mxu0 0.0
    %1126 = vmatprep.subr.mxu0 0.0
    %1127 = vmatpush1.msra.mxu0 0.0
    %1128 = vmatprep.subr.mxu0 0.0
    %1129 = vmatpush1.msra.mxu0 0.0
    %1130 = vmatprep.mubr.f32.mxu0 0.0
    %1131 = vmatmul.mubr.f32.gmra.mrb[0].mxu0 %v987
    %v1132 = vpop.f32.mrb[0].mxu0
    %v1133 = vadd.f32 0.0, %v1132
    %v1134 = vpop.f32.mrb[0].mxu0
    %1135 = vdwg.mxu0
    %1136 = vmatprep.subr.mxu0 0.0
    %1137 = vmatpush1.msra.mxu0 %v192
    %1138 = vmatprep.subr.mxu0 0.0
    %1139 = vmatpush1.msra.mxu0 %v193
    %1140 = vmatprep.subr.mxu0 0.0
    %1141 = vmatpush1.msra.mxu0 %v194
    %1142 = vmatprep.subr.mxu0 0.0
    %1143 = vmatpush1.msra.mxu0 %v195
    %1144 = vmatprep.subr.mxu0 0.0
    %1145 = vmatpush1.msra.mxu0 %v196
    %1146 = vmatprep.subr.mxu0 0.0
    %1147 = vmatpush1.msra.mxu0 %v197
    %1148 = vmatprep.subr.mxu0 0.0
    %1149 = vmatpush1.msra.mxu0 %v198
    %1150 = vmatprep.subr.mxu0 0.0
    %1151 = vmatpush1.msra.mxu0 %v199
    %1152 = vmatprep.subr.mxu0 0.0
    %1153 = vmatpush1.msra.mxu0 %v200
    %1154 = vmatprep.subr.mxu0 0.0
    %1155 = vmatpush1.msra.mxu0 %v201
    %1156 = vmatprep.subr.mxu0 0.0
    %1157 = vmatpush1.msra.mxu0 %v202
    %1158 = vmatprep.subr.mxu0 0.0
    %1159 = vmatpush1.msra.mxu0 %v203
    %1160 = vmatprep.subr.mxu0 0.0
    %1161 = vmatpush1.msra.mxu0 %v204
    %1162 = vmatprep.subr.mxu0 0.0
    %1163 = vmatpush1.msra.mxu0 %v205
    %1164 = vmatprep.subr.mxu0 0.0
    %1165 = vmatpush1.msra.mxu0 %v206
    %1166 = vmatprep.subr.mxu0 0.0
    %1167 = vmatpush1.msra.mxu0 %v207
    %1168 = vmatprep.subr.mxu0 0.0
    %1169 = vmatpush1.msra.mxu0 0.0
    %1170 = vmatprep.subr.mxu0 0.0
    %1171 = vmatpush1.msra.mxu0 0.0
    %1172 = vmatprep.subr.mxu0 0.0
    %1173 = vmatpush1.msra.mxu0 0.0
    %1174 = vmatprep.subr.mxu0 0.0
    %1175 = vmatpush1.msra.mxu0 0.0
    %1176 = vmatprep.subr.mxu0 0.0
    %1177 = vmatpush1.msra.mxu0 0.0
    %1178 = vmatprep.subr.mxu0 0.0
    %1179 = vmatpush1.msra.mxu0 0.0
    %1180 = vmatprep.subr.mxu0 0.0
    %1181 = vmatpush1.msra.mxu0 0.0
    %1182 = vmatprep.subr.mxu0 0.0
    %1183 = vmatpush1.msra.mxu0 0.0
    %1184 = vmatprep.subr.mxu0 0.0
    %1185 = vmatpush1.msra.mxu0 0.0
    %1186 = vmatprep.subr.mxu0 0.0
    %1187 = vmatpush1.msra.mxu0 0.0
    %1188 = vmatprep.subr.mxu0 0.0
    %1189 = vmatpush1.msra.mxu0 0.0
    %1190 = vmatprep.subr.mxu0 0.0
    %1191 = vmatpush1.msra.mxu0 0.0
    %1192 = vmatprep.subr.mxu0 0.0
    %1193 = vmatpush1.msra.mxu0 0.0
    %1194 = vmatprep.subr.mxu0 0.0
    %1195 = vmatpush1.msra.mxu0 0.0
    %1196 = vmatprep.subr.mxu0 0.0
    %1197 = vmatpush1.msra.mxu0 0.0
    %1198 = vmatprep.subr.mxu0 0.0
    %1199 = vmatpush1.msra.mxu0 0.0
    %1200 = vmatprep.mubr.f32.mxu0 0.0
    %1201 = vmatmul.mubr.f32.gmra.mrb[0].mxu0 %v1065
    %v1202 = vpop.f32.mrb[0].mxu0
    %v1203 = vadd.f32 %v1133, %v1202
    %v1204 = vpop.f32.mrb[0].mxu0
    %1205 = vdwg.mxu0
    %v1206 = vadd.f32 %v1203, %v544
    %v1207 = vtanh.pop %v1206
    %1208 = vset.pattern.permute.xlu0 4
    %1209 = vperm.xlu0 %1208, %v172
    %v1210 = vpop.permute.xlu0 %1209
    %v1212 = vmul.f32 %v1210, %v318
    %v1213 = vadd.f32 %v1212, %v325
    %1214 = vmatprep.subr.mxu0 0.0
    %1215 = vmatpush1.msra.mxu0 %v176
    %1216 = vmatprep.subr.mxu0 0.0
    %1217 = vmatpush1.msra.mxu0 %v177
    %1218 = vmatprep.subr.mxu0 0.0
    %1219 = vmatpush1.msra.mxu0 %v178
    %1220 = vmatprep.subr.mxu0 0.0
    %1221 = vmatpush1.msra.mxu0 %v179
    %1222 = vmatprep.subr.mxu0 0.0
    %1223 = vmatpush1.msra.mxu0 %v180
    %1224 = vmatprep.subr.mxu0 0.0
    %1225 = vmatpush1.msra.mxu0 %v181
    %1226 = vmatprep.subr.mxu0 0.0
    %1227 = vmatpush1.msra.mxu0 %v182
    %1228 = vmatprep.subr.mxu0 0.0
    %1229 = vmatpush1.msra.mxu0 %v183
    %1230 = vmatprep.subr.mxu0 0.0
    %1231 = vmatpush1.msra.mxu0 %v184
    %1232 = vmatprep.subr.mxu0 0.0
    %1233 = vmatpush1.msra.mxu0 %v185
    %1234 = vmatprep.subr.mxu0 0.0
    %1235 = vmatpush1.msra.mxu0 %v186
    %1236 = vmatprep.subr.mxu0 0.0
    %1237 = vmatpush1.msra.mxu0 %v187
    %1238 = vmatprep.subr.mxu0 0.0
    %1239 = vmatpush1.msra.mxu0 %v188
    %1240 = vmatprep.subr.mxu0 0.0
    %1241 = vmatpush1.msra.mxu0 %v189
    %1242 = vmatprep.subr.mxu0 0.0
    %1243 = vmatpush1.msra.mxu0 %v190
    %1244 = vmatprep.subr.mxu0 0.0
    %1245 = vmatpush1.msra.mxu0 %v191
    %1246 = vmatprep.subr.mxu0 0.0
    %1247 = vmatpush1.msra.mxu0 0.0
    %1248 = vmatprep.subr.mxu0 0.0
    %1249 = vmatpush1.msra.mxu0 0.0
    %1250 = vmatprep.subr.mxu0 0.0
    %1251 = vmatpush1.msra.mxu0 0.0
    %1252 = vmatprep.subr.mxu0 0.0
    %1253 = vmatpush1.msra.mxu0 0.0
    %1254 = vmatprep.subr.mxu0 0.0
    %1255 = vmatpush1.msra.mxu0 0.0
    %1256 = vmatprep.subr.mxu0 0.0
    %1257 = vmatpush1.msra.mxu0 0.0
    %1258 = vmatprep.subr.mxu0 0.0
    %1259 = vmatpush1.msra.mxu0 0.0
    %1260 = vmatprep.subr.mxu0 0.0
    %1261 = vmatpush1.msra.mxu0 0.0
    %1262 = vmatprep.subr.mxu0 0.0
    %1263 = vmatpush1.msra.mxu0 0.0
    %1264 = vmatprep.subr.mxu0 0.0
    %1265 = vmatpush1.msra.mxu0 0.0
    %1266 = vmatprep.subr.mxu0 0.0
    %1267 = vmatpush1.msra.mxu0 0.0
    %1268 = vmatprep.subr.mxu0 0.0
    %1269 = vmatpush1.msra.mxu0 0.0
    %1270 = vmatprep.subr.mxu0 0.0
    %1271 = vmatpush1.msra.mxu0 0.0
    %1272 = vmatprep.subr.mxu0 0.0
    %1273 = vmatpush1.msra.mxu0 0.0
    %1274 = vmatprep.subr.mxu0 0.0
    %1275 = vmatpush1.msra.mxu0 0.0
    %1276 = vmatprep.subr.mxu0 0.0
    %1277 = vmatpush1.msra.mxu0 0.0
    %1278 = vmatprep.mubr.f32.mxu0 0.0
    %1279 = vmatmul.mubr.f32.gmra.mrb[0].mxu0 %v1065
    %v1280 = vpop.f32.mrb[0].mxu0
    %v1281 = vadd.f32 0.0, %v1280
    %v1282 = vpop.f32.mrb[0].mxu0
    %1283 = vdwg.mxu0
    %v1284 = vadd.f32 %v1213, %v1281
    %v1285 = vtanh.pop %v1284
    %1286 = vmatprep.subr.mxu0 0.0
    %1287 = vmatpush1.msra.mxu0 %v208
    %1288 = vmatprep.subr.mxu0 0.0
    %1289 = vmatpush1.msra.mxu0 %v209
    %1290 = vmatprep.subr.mxu0 0.0
    %1291 = vmatpush1.msra.mxu0 %v210
    %1292 = vmatprep.subr.mxu0 0.0
    %1293 = vmatpush1.msra.mxu0 %v211
    %1294 = vmatprep.subr.mxu0 0.0
    %1295 = vmatpush1.msra.mxu0 %v212
    %1296 = vmatprep.subr.mxu0 0.0
    %1297 = vmatpush1.msra.mxu0 %v213
    %1298 = vmatprep.subr.mxu0 0.0
    %1299 = vmatpush1.msra.mxu0 %v214
    %1300 = vmatprep.subr.mxu0 0.0
    %1301 = vmatpush1.msra.mxu0 %v215
    %1302 = vmatprep.subr.mxu0 0.0
    %1303 = vmatpush1.msra.mxu0 %v216
    %1304 = vmatprep.subr.mxu0 0.0
    %1305 = vmatpush1.msra.mxu0 %v217
    %1306 = vmatprep.subr.mxu0 0.0
    %1307 = vmatpush1.msra.mxu0 %v218
    %1308 = vmatprep.subr.mxu0 0.0
    %1309 = vmatpush1.msra.mxu0 %v219
    %1310 = vmatprep.subr.mxu0 0.0
    %1311 = vmatpush1.msra.mxu0 %v220
    %1312 = vmatprep.subr.mxu0 0.0
    %1313 = vmatpush1.msra.mxu0 %v221
    %1314 = vmatprep.subr.mxu0 0.0
    %1315 = vmatpush1.msra.mxu0 %v222
    %1316 = vmatprep.subr.mxu0 0.0
    %1317 = vmatpush1.msra.mxu0 %v223
    %1318 = vmatprep.subr.mxu0 0.0
    %1319 = vmatpush1.msra.mxu0 0.0
    %1320 = vmatprep.subr.mxu0 0.0
    %1321 = vmatpush1.msra.mxu0 0.0
    %1322 = vmatprep.subr.mxu0 0.0
    %1323 = vmatpush1.msra.mxu0 0.0
    %1324 = vmatprep.subr.mxu0 0.0
    %1325 = vmatpush1.msra.mxu0 0.0
    %1326 = vmatprep.subr.mxu0 0.0
    %1327 = vmatpush1.msra.mxu0 0.0
    %1328 = vmatprep.subr.mxu0 0.0
    %1329 = vmatpush1.msra.mxu0 0.0
    %1330 = vmatprep.subr.mxu0 0.0
    %1331 = vmatpush1.msra.mxu0 0.0
    %1332 = vmatprep.subr.mxu0 0.0
    %1333 = vmatpush1.msra.mxu0 0.0
    %1334 = vmatprep.subr.mxu0 0.0
    %1335 = vmatpush1.msra.mxu0 0.0
    %1336 = vmatprep.subr.mxu0 0.0
    %1337 = vmatpush1.msra.mxu0 0.0
    %1338 = vmatprep.subr.mxu0 0.0
    %1339 = vmatpush1.msra.mxu0 0.0
    %1340 = vmatprep.subr.mxu0 0.0
    %1341 = vmatpush1.msra.mxu0 0.0
    %1342 = vmatprep.subr.mxu0 0.0
    %1343 = vmatpush1.msra.mxu0 0.0
    %1344 = vmatprep.subr.mxu0 0.0
    %1345 = vmatpush1.msra.mxu0 0.0
    %1346 = vmatprep.subr.mxu0 0.0
    %1347 = vmatpush1.msra.mxu0 0.0
    %1348 = vmatprep.subr.mxu0 0.0
    %1349 = vmatpush1.msra.mxu0 0.0
    %1350 = vmatprep.mubr.f32.mxu0 0.0
    %1351 = vmatmul.mubr.f32.gmra.mrb[0].mxu0 %v1207
    %v1352 = vpop.f32.mrb[0].mxu0
    %v1353 = vadd.f32 0.0, %v1352
    %v1354 = vpop.f32.mrb[0].mxu0
    %1355 = vdwg.mxu0
    %1356 = vmatprep.subr.mxu0 0.0
    %1357 = vmatpush1.msra.mxu0 %v192
    %1358 = vmatprep.subr.mxu0 0.0
    %1359 = vmatpush1.msra.mxu0 %v193
    %1360 = vmatprep.subr.mxu0 0.0
    %1361 = vmatpush1.msra.mxu0 %v194
    %1362 = vmatprep.subr.mxu0 0.0
    %1363 = vmatpush1.msra.mxu0 %v195
    %1364 = vmatprep.subr.mxu0 0.0
    %1365 = vmatpush1.msra.mxu0 %v196
    %1366 = vmatprep.subr.mxu0 0.0
    %1367 = vmatpush1.msra.mxu0 %v197
    %1368 = vmatprep.subr.mxu0 0.0
    %1369 = vmatpush1.msra.mxu0 %v198
    %1370 = vmatprep.subr.mxu0 0.0
    %1371 = vmatpush1.msra.mxu0 %v199
    %1372 = vmatprep.subr.mxu0 0.0
    %1373 = vmatpush1.msra.mxu0 %v200
    %1374 = vmatprep.subr.mxu0 0.0
    %1375 = vmatpush1.msra.mxu0 %v201
    %1376 = vmatprep.subr.mxu0 0.0
    %1377 = vmatpush1.msra.mxu0 %v202
    %1378 = vmatprep.subr.mxu0 0.0
    %1379 = vmatpush1.msra.mxu0 %v203
    %1380 = vmatprep.subr.mxu0 0.0
    %1381 = vmatpush1.msra.mxu0 %v204
    %1382 = vmatprep.subr.mxu0 0.0
    %1383 = vmatpush1.msra.mxu0 %v205
    %1384 = vmatprep.subr.mxu0 0.0
    %1385 = vmatpush1.msra.mxu0 %v206
    %1386 = vmatprep.subr.mxu0 0.0
    %1387 = vmatpush1.msra.mxu0 %v207
    %1388 = vmatprep.subr.mxu0 0.0
    %1389 = vmatpush1.msra.mxu0 0.0
    %1390 = vmatprep.subr.mxu0 0.0
    %1391 = vmatpush1.msra.mxu0 0.0
    %1392 = vmatprep.subr.mxu0 0.0
    %1393 = vmatpush1.msra.mxu0 0.0
    %1394 = vmatprep.subr.mxu0 0.0
    %1395 = vmatpush1.msra.mxu0 0.0
    %1396 = vmatprep.subr.mxu0 0.0
    %1397 = vmatpush1.msra.mxu0 0.0
    %1398 = vmatprep.subr.mxu0 0.0
    %1399 = vmatpush1.msra.mxu0 0.0
    %1400 = vmatprep.subr.mxu0 0.0
    %1401 = vmatpush1.msra.mxu0 0.0
    %1402 = vmatprep.subr.mxu0 0.0
    %1403 = vmatpush1.msra.mxu0 0.0
    %1404 = vmatprep.subr.mxu0 0.0
    %1405 = vmatpush1.msra.mxu0 0.0
    %1406 = vmatprep.subr.mxu0 0.0
    %1407 = vmatpush1.msra.mxu0 0.0
    %1408 = vmatprep.subr.mxu0 0.0
    %1409 = vmatpush1.msra.mxu0 0.0
    %1410 = vmatprep.subr.mxu0 0.0
    %1411 = vmatpush1.msra.mxu0 0.0
    %1412 = vmatprep.subr.mxu0 0.0
    %1413 = vmatpush1.msra.mxu0 0.0
    %1414 = vmatprep.subr.mxu0 0.0
    %1415 = vmatpush1.msra.mxu0 0.0
    %1416 = vmatprep.subr.mxu0 0.0
    %1417 = vmatpush1.msra.mxu0 0.0
    %1418 = vmatprep.subr.mxu0 0.0
    %1419 = vmatpush1.msra.mxu0 0.0
    %1420 = vmatprep.mubr.f32.mxu0 0.0
    %1421 = vmatmul.mubr.f32.gmra.mrb[0].mxu0 %v1285
    %v1422 = vpop.f32.mrb[0].mxu0
    %v1423 = vadd.f32 %v1353, %v1422
    %v1424 = vpop.f32.mrb[0].mxu0
    %1425 = vdwg.mxu0
    %v1426 = vadd.f32 %v1423, %v544
    %v1427 = vtanh.pop %v1426
    %1428 = vset.pattern.permute.xlu0 5
    %1429 = vperm.xlu0 %1428, %v172
    %v1430 = vpop.permute.xlu0 %1429
    %v1432 = vmul.f32 %v1430, %v318
    %v1433 = vadd.f32 %v1432, %v325
    %1434 = vmatprep.subr.mxu0 0.0
    %1435 = vmatpush1.msra.mxu0 %v176
    %1436 = vmatprep.subr.mxu0 0.0
    %1437 = vmatpush1.msra.mxu0 %v177
    %1438 = vmatprep.subr.mxu0 0.0
    %1439 = vmatpush1.msra.mxu0 %v178
    %1440 = vmatprep.subr.mxu0 0.0
    %1441 = vmatpush1.msra.mxu0 %v179
    %1442 = vmatprep.subr.mxu0 0.0
    %1443 = vmatpush1.msra.mxu0 %v180
    %1444 = vmatprep.subr.mxu0 0.0
    %1445 = vmatpush1.msra.mxu0 %v181
    %1446 = vmatprep.subr.mxu0 0.0
    %1447 = vmatpush1.msra.mxu0 %v182
    %1448 = vmatprep.subr.mxu0 0.0
    %1449 = vmatpush1.msra.mxu0 %v183
    %1450 = vmatprep.subr.mxu0 0.0
    %1451 = vmatpush1.msra.mxu0 %v184
    %1452 = vmatprep.subr.mxu0 0.0
    %1453 = vmatpush1.msra.mxu0 %v185
    %1454 = vmatprep.subr.mxu0 0.0
    %1455 = vmatpush1.msra.mxu0 %v186
    %1456 = vmatprep.subr.mxu0 0.0
    %1457 = vmatpush1.msra.mxu0 %v187
    %1458 = vmatprep.subr.mxu0 0.0
    %1459 = vmatpush1.msra.mxu0 %v188
    %1460 = vmatprep.subr.mxu0 0.0
    %1461 = vmatpush1.msra.mxu0 %v189
    %1462 = vmatprep.subr.mxu0 0.0
    %1463 = vmatpush1.msra.mxu0 %v190
    %1464 = vmatprep.subr.mxu0 0.0
    %1465 = vmatpush1.msra.mxu0 %v191
    %1466 = vmatprep.subr.mxu0 0.0
    %1467 = vmatpush1.msra.mxu0 0.0
    %1468 = vmatprep.subr.mxu0 0.0
    %1469 = vmatpush1.msra.mxu0 0.0
    %1470 = vmatprep.subr.mxu0 0.0
    %1471 = vmatpush1.msra.mxu0 0.0
    %1472 = vmatprep.subr.mxu0 0.0
    %1473 = vmatpush1.msra.mxu0 0.0
    %1474 = vmatprep.subr.mxu0 0.0
    %1475 = vmatpush1.msra.mxu0 0.0
    %1476 = vmatprep.subr.mxu0 0.0
    %1477 = vmatpush1.msra.mxu0 0.0
    %1478 = vmatprep.subr.mxu0 0.0
    %1479 = vmatpush1.msra.mxu0 0.0
    %1480 = vmatprep.subr.mxu0 0.0
    %1481 = vmatpush1.msra.mxu0 0.0
    %1482 = vmatprep.subr.mxu0 0.0
    %1483 = vmatpush1.msra.mxu0 0.0
    %1484 = vmatprep.subr.mxu0 0.0
    %1485 = vmatpush1.msra.mxu0 0.0
    %1486 = vmatprep.subr.mxu0 0.0
    %1487 = vmatpush1.msra.mxu0 0.0
    %1488 = vmatprep.subr.mxu0 0.0
    %1489 = vmatpush1.msra.mxu0 0.0
    %1490 = vmatprep.subr.mxu0 0.0
    %1491 = vmatpush1.msra.mxu0 0.0
    %1492 = vmatprep.subr.mxu0 0.0
    %1493 = vmatpush1.msra.mxu0 0.0
    %1494 = vmatprep.subr.mxu0 0.0
    %1495 = vmatpush1.msra.mxu0 0.0
    %1496 = vmatprep.subr.mxu0 0.0
    %1497 = vmatpush1.msra.mxu0 0.0
    %1498 = vmatprep.mubr.f32.mxu0 0.0
    %1499 = vmatmul.mubr.f32.gmra.mrb[0].mxu0 %v1285
    %v1500 = vpop.f32.mrb[0].mxu0
    %v1501 = vadd.f32 0.0, %v1500
    %v1502 = vpop.f32.mrb[0].mxu0
    %1503 = vdwg.mxu0
    %v1504 = vadd.f32 %v1433, %v1501
    %v1505 = vtanh.pop %v1504
    %1506 = vmatprep.subr.mxu0 0.0
    %1507 = vmatpush1.msra.mxu0 %v208
    %1508 = vmatprep.subr.mxu0 0.0
    %1509 = vmatpush1.msra.mxu0 %v209
    %1510 = vmatprep.subr.mxu0 0.0
    %1511 = vmatpush1.msra.mxu0 %v210
    %1512 = vmatprep.subr.mxu0 0.0
    %1513 = vmatpush1.msra.mxu0 %v211
    %1514 = vmatprep.subr.mxu0 0.0
    %1515 = vmatpush1.msra.mxu0 %v212
    %1516 = vmatprep.subr.mxu0 0.0
    %1517 = vmatpush1.msra.mxu0 %v213
    %1518 = vmatprep.subr.mxu0 0.0
    %1519 = vmatpush1.msra.mxu0 %v214
    %1520 = vmatprep.subr.mxu0 0.0
    %1521 = vmatpush1.msra.mxu0 %v215
    %1522 = vmatprep.subr.mxu0 0.0
    %1523 = vmatpush1.msra.mxu0 %v216
    %1524 = vmatprep.subr.mxu0 0.0
    %1525 = vmatpush1.msra.mxu0 %v217
    %1526 = vmatprep.subr.mxu0 0.0
    %1527 = vmatpush1.msra.mxu0 %v218
    %1528 = vmatprep.subr.mxu0 0.0
    %1529 = vmatpush1.msra.mxu0 %v219
    %1530 = vmatprep.subr.mxu0 0.0
    %1531 = vmatpush1.msra.mxu0 %v220
    %1532 = vmatprep.subr.mxu0 0.0
    %1533 = vmatpush1.msra.mxu0 %v221
    %1534 = vmatprep.subr.mxu0 0.0
    %1535 = vmatpush1.msra.mxu0 %v222
    %1536 = vmatprep.subr.mxu0 0.0
    %1537 = vmatpush1.msra.mxu0 %v223
    %1538 = vmatprep.subr.mxu0 0.0
    %1539 = vmatpush1.msra.mxu0 0.0
    %1540 = vmatprep.subr.mxu0 0.0
    %1541 = vmatpush1.msra.mxu0 0.0
    %1542 = vmatprep.subr.mxu0 0.0
    %1543 = vmatpush1.msra.mxu0 0.0
    %1544 = vmatprep.subr.mxu0 0.0
    %1545 = vmatpush1.msra.mxu0 0.0
    %1546 = vmatprep.subr.mxu0 0.0
    %1547 = vmatpush1.msra.mxu0 0.0
    %1548 = vmatprep.subr.mxu0 0.0
    %1549 = vmatpush1.msra.mxu0 0.0
    %1550 = vmatprep.subr.mxu0 0.0
    %1551 = vmatpush1.msra.mxu0 0.0
    %1552 = vmatprep.subr.mxu0 0.0
    %1553 = vmatpush1.msra.mxu0 0.0
    %1554 = vmatprep.subr.mxu0 0.0
    %1555 = vmatpush1.msra.mxu0 0.0
    %1556 = vmatprep.subr.mxu0 0.0
    %1557 = vmatpush1.msra.mxu0 0.0
    %1558 = vmatprep.subr.mxu0 0.0
    %1559 = vmatpush1.msra.mxu0 0.0
    %1560 = vmatprep.subr.mxu0 0.0
    %1561 = vmatpush1.msra.mxu0 0.0
    %1562 = vmatprep.subr.mxu0 0.0
    %1563 = vmatpush1.msra.mxu0 0.0
    %1564 = vmatprep.subr.mxu0 0.0
    %1565 = vmatpush1.msra.mxu0 0.0
    %1566 = vmatprep.subr.mxu0 0.0
    %1567 = vmatpush1.msra.mxu0 0.0
    %1568 = vmatprep.subr.mxu0 0.0
    %1569 = vmatpush1.msra.mxu0 0.0
    %1570 = vmatprep.mubr.f32.mxu0 0.0
    %1571 = vmatmul.mubr.f32.gmra.mrb[0].mxu0 %v1427
    %v1572 = vpop.f32.mrb[0].mxu0
    %v1573 = vadd.f32 0.0, %v1572
    %v1574 = vpop.f32.mrb[0].mxu0
    %1575 = vdwg.mxu0
    %1576 = vmatprep.subr.mxu0 0.0
    %1577 = vmatpush1.msra.mxu0 %v192
    %1578 = vmatprep.subr.mxu0 0.0
    %1579 = vmatpush1.msra.mxu0 %v193
    %1580 = vmatprep.subr.mxu0 0.0
    %1581 = vmatpush1.msra.mxu0 %v194
    %1582 = vmatprep.subr.mxu0 0.0
    %1583 = vmatpush1.msra.mxu0 %v195
    %1584 = vmatprep.subr.mxu0 0.0
    %1585 = vmatpush1.msra.mxu0 %v196
    %1586 = vmatprep.subr.mxu0 0.0
    %1587 = vmatpush1.msra.mxu0 %v197
    %1588 = vmatprep.subr.mxu0 0.0
    %1589 = vmatpush1.msra.mxu0 %v198
    %1590 = vmatprep.subr.mxu0 0.0
    %1591 = vmatpush1.msra.mxu0 %v199
    %1592 = vmatprep.subr.mxu0 0.0
    %1593 = vmatpush1.msra.mxu0 %v200
    %1594 = vmatprep.subr.mxu0 0.0
    %1595 = vmatpush1.msra.mxu0 %v201
    %1596 = vmatprep.subr.mxu0 0.0
    %1597 = vmatpush1.msra.mxu0 %v202
    %1598 = vmatprep.subr.mxu0 0.0
    %1599 = vmatpush1.msra.mxu0 %v203
    %1600 = vmatprep.subr.mxu0 0.0
    %1601 = vmatpush1.msra.mxu0 %v204
    %1602 = vmatprep.subr.mxu0 0.0
    %1603 = vmatpush1.msra.mxu0 %v205
    %1604 = vmatprep.subr.mxu0 0.0
    %1605 = vmatpush1.msra.mxu0 %v206
    %1606 = vmatprep.subr.mxu0 0.0
    %1607 = vmatpush1.msra.mxu0 %v207
    %1608 = vmatprep.subr.mxu0 0.0
    %1609 = vmatpush1.msra.mxu0 0.0
    %1610 = vmatprep.subr.mxu0 0.0
    %1611 = vmatpush1.msra.mxu0 0.0
    %1612 = vmatprep.subr.mxu0 0.0
    %1613 = vmatpush1.msra.mxu0 0.0
    %1614 = vmatprep.subr.mxu0 0.0
    %1615 = vmatpush1.msra.mxu0 0.0
    %1616 = vmatprep.subr.mxu0 0.0
    %1617 = vmatpush1.msra.mxu0 0.0
    %1618 = vmatprep.subr.mxu0 0.0
    %1619 = vmatpush1.msra.mxu0 0.0
    %1620 = vmatprep.subr.mxu0 0.0
    %1621 = vmatpush1.msra.mxu0 0.0
    %1622 = vmatprep.subr.mxu0 0.0
    %1623 = vmatpush1.msra.mxu0 0.0
    %1624 = vmatprep.subr.mxu0 0.0
    %1625 = vmatpush1.msra.mxu0 0.0
    %1626 = vmatprep.subr.mxu0 0.0
    %1627 = vmatpush1.msra.mxu0 0.0
    %1628 = vmatprep.subr.mxu0 0.0
    %1629 = vmatpush1.msra.mxu0 0.0
    %1630 = vmatprep.subr.mxu0 0.0
    %1631 = vmatpush1.msra.mxu0 0.0
    %1632 = vmatprep.subr.mxu0 0.0
    %1633 = vmatpush1.msra.mxu0 0.0
    %1634 = vmatprep.subr.mxu0 0.0
    %1635 = vmatpush1.msra.mxu0 0.0
    %1636 = vmatprep.subr.mxu0 0.0
    %1637 = vmatpush1.msra.mxu0 0.0
    %1638 = vmatprep.subr.mxu0 0.0
    %1639 = vmatpush1.msra.mxu0 0.0
    %1640 = vmatprep.mubr.f32.mxu0 0.0
    %1641 = vmatmul.mubr.f32.gmra.mrb[0].mxu0 %v1505
    %v1642 = vpop.f32.mrb[0].mxu0
    %v1643 = vadd.f32 %v1573, %v1642
    %v1644 = vpop.f32.mrb[0].mxu0
    %1645 = vdwg.mxu0
    %v1646 = vadd.f32 %v1643, %v544
    %v1647 = vtanh.pop %v1646
    %1648 = vset.pattern.permute.xlu0 6
    %1649 = vperm.xlu0 %1648, %v172
    %v1650 = vpop.permute.xlu0 %1649
    %v1652 = vmul.f32 %v1650, %v318
    %v1653 = vadd.f32 %v1652, %v325
    %1654 = vmatprep.subr.mxu0 0.0
    %1655 = vmatpush1.msra.mxu0 %v176
    %1656 = vmatprep.subr.mxu0 0.0
    %1657 = vmatpush1.msra.mxu0 %v177
    %1658 = vmatprep.subr.mxu0 0.0
    %1659 = vmatpush1.msra.mxu0 %v178
    %1660 = vmatprep.subr.mxu0 0.0
    %1661 = vmatpush1.msra.mxu0 %v179
    %1662 = vmatprep.subr.mxu0 0.0
    %1663 = vmatpush1.msra.mxu0 %v180
    %1664 = vmatprep.subr.mxu0 0.0
    %1665 = vmatpush1.msra.mxu0 %v181
    %1666 = vmatprep.subr.mxu0 0.0
    %1667 = vmatpush1.msra.mxu0 %v182
    %1668 = vmatprep.subr.mxu0 0.0
    %1669 = vmatpush1.msra.mxu0 %v183
    %1670 = vmatprep.subr.mxu0 0.0
    %1671 = vmatpush1.msra.mxu0 %v184
    %1672 = vmatprep.subr.mxu0 0.0
    %1673 = vmatpush1.msra.mxu0 %v185
    %1674 = vmatprep.subr.mxu0 0.0
    %1675 = vmatpush1.msra.mxu0 %v186
    %1676 = vmatprep.subr.mxu0 0.0
    %1677 = vmatpush1.msra.mxu0 %v187
    %1678 = vmatprep.subr.mxu0 0.0
    %1679 = vmatpush1.msra.mxu0 %v188
    %1680 = vmatprep.subr.mxu0 0.0
    %1681 = vmatpush1.msra.mxu0 %v189
    %1682 = vmatprep.subr.mxu0 0.0
    %1683 = vmatpush1.msra.mxu0 %v190
    %1684 = vmatprep.subr.mxu0 0.0
    %1685 = vmatpush1.msra.mxu0 %v191
    %1686 = vmatprep.subr.mxu0 0.0
    %1687 = vmatpush1.msra.mxu0 0.0
    %1688 = vmatprep.subr.mxu0 0.0
    %1689 = vmatpush1.msra.mxu0 0.0
    %1690 = vmatprep.subr.mxu0 0.0
    %1691 = vmatpush1.msra.mxu0 0.0
    %1692 = vmatprep.subr.mxu0 0.0
    %1693 = vmatpush1.msra.mxu0 0.0
    %1694 = vmatprep.subr.mxu0 0.0
    %1695 = vmatpush1.msra.mxu0 0.0
    %1696 = vmatprep.subr.mxu0 0.0
    %1697 = vmatpush1.msra.mxu0 0.0
    %1698 = vmatprep.subr.mxu0 0.0
    %1699 = vmatpush1.msra.mxu0 0.0
    %1700 = vmatprep.subr.mxu0 0.0
    %1701 = vmatpush1.msra.mxu0 0.0
    %1702 = vmatprep.subr.mxu0 0.0
    %1703 = vmatpush1.msra.mxu0 0.0
    %1704 = vmatprep.subr.mxu0 0.0
    %1705 = vmatpush1.msra.mxu0 0.0
    %1706 = vmatprep.subr.mxu0 0.0
    %1707 = vmatpush1.msra.mxu0 0.0
    %1708 = vmatprep.subr.mxu0 0.0
    %1709 = vmatpush1.msra.mxu0 0.0
    %1710 = vmatprep.subr.mxu0 0.0
    %1711 = vmatpush1.msra.mxu0 0.0
    %1712 = vmatprep.subr.mxu0 0.0
    %1713 = vmatpush1.msra.mxu0 0.0
    %1714 = vmatprep.subr.mxu0 0.0
    %1715 = vmatpush1.msra.mxu0 0.0
    %1716 = vmatprep.subr.mxu0 0.0
    %1717 = vmatpush1.msra.mxu0 0.0
    %1718 = vmatprep.mubr.f32.mxu0 0.0
    %1719 = vmatmul.mubr.f32.gmra.mrb[0].mxu0 %v1505
    %v1720 = vpop.f32.mrb[0].mxu0
    %v1721 = vadd.f32 0.0, %v1720
    %v1722 = vpop.f32.mrb[0].mxu0
    %1723 = vdwg.mxu0
    %v1724 = vadd.f32 %v1653, %v1721
    %v1725 = vtanh.pop %v1724
    %1726 = vmatprep.subr.mxu0 0.0
    %1727 = vmatpush1.msra.mxu0 %v208
    %1728 = vmatprep.subr.mxu0 0.0
    %1729 = vmatpush1.msra.mxu0 %v209
    %1730 = vmatprep.subr.mxu0 0.0
    %1731 = vmatpush1.msra.mxu0 %v210
    %1732 = vmatprep.subr.mxu0 0.0
    %1733 = vmatpush1.msra.mxu0 %v211
    %1734 = vmatprep.subr.mxu0 0.0
    %1735 = vmatpush1.msra.mxu0 %v212
    %1736 = vmatprep.subr.mxu0 0.0
    %1737 = vmatpush1.msra.mxu0 %v213
    %1738 = vmatprep.subr.mxu0 0.0
    %1739 = vmatpush1.msra.mxu0 %v214
    %1740 = vmatprep.subr.mxu0 0.0
    %1741 = vmatpush1.msra.mxu0 %v215
    %1742 = vmatprep.subr.mxu0 0.0
    %1743 = vmatpush1.msra.mxu0 %v216
    %1744 = vmatprep.subr.mxu0 0.0
    %1745 = vmatpush1.msra.mxu0 %v217
    %1746 = vmatprep.subr.mxu0 0.0
    %1747 = vmatpush1.msra.mxu0 %v218
    %1748 = vmatprep.subr.mxu0 0.0
    %1749 = vmatpush1.msra.mxu0 %v219
    %1750 = vmatprep.subr.mxu0 0.0
    %1751 = vmatpush1.msra.mxu0 %v220
    %1752 = vmatprep.subr.mxu0 0.0
    %1753 = vmatpush1.msra.mxu0 %v221
    %1754 = vmatprep.subr.mxu0 0.0
    %1755 = vmatpush1.msra.mxu0 %v222
    %1756 = vmatprep.subr.mxu0 0.0
    %1757 = vmatpush1.msra.mxu0 %v223
    %1758 = vmatprep.subr.mxu0 0.0
    %1759 = vmatpush1.msra.mxu0 0.0
    %1760 = vmatprep.subr.mxu0 0.0
    %1761 = vmatpush1.msra.mxu0 0.0
    %1762 = vmatprep.subr.mxu0 0.0
    %1763 = vmatpush1.msra.mxu0 0.0
    %1764 = vmatprep.subr.mxu0 0.0
    %1765 = vmatpush1.msra.mxu0 0.0
    %1766 = vmatprep.subr.mxu0 0.0
    %1767 = vmatpush1.msra.mxu0 0.0
    %1768 = vmatprep.subr.mxu0 0.0
    %1769 = vmatpush1.msra.mxu0 0.0
    %1770 = vmatprep.subr.mxu0 0.0
    %1771 = vmatpush1.msra.mxu0 0.0
    %1772 = vmatprep.subr.mxu0 0.0
    %1773 = vmatpush1.msra.mxu0 0.0
    %1774 = vmatprep.subr.mxu0 0.0
    %1775 = vmatpush1.msra.mxu0 0.0
    %1776 = vmatprep.subr.mxu0 0.0
    %1777 = vmatpush1.msra.mxu0 0.0
    %1778 = vmatprep.subr.mxu0 0.0
    %1779 = vmatpush1.msra.mxu0 0.0
    %1780 = vmatprep.subr.mxu0 0.0
    %1781 = vmatpush1.msra.mxu0 0.0
    %1782 = vmatprep.subr.mxu0 0.0
    %1783 = vmatpush1.msra.mxu0 0.0
    %1784 = vmatprep.subr.mxu0 0.0
    %1785 = vmatpush1.msra.mxu0 0.0
    %1786 = vmatprep.subr.mxu0 0.0
    %1787 = vmatpush1.msra.mxu0 0.0
    %1788 = vmatprep.subr.mxu0 0.0
    %1789 = vmatpush1.msra.mxu0 0.0
    %1790 = vmatprep.mubr.f32.mxu0 0.0
    %1791 = vmatmul.mubr.f32.gmra.mrb[0].mxu0 %v1647
    %v1792 = vpop.f32.mrb[0].mxu0
    %v1793 = vadd.f32 0.0, %v1792
    %v1794 = vpop.f32.mrb[0].mxu0
    %1795 = vdwg.mxu0
    %1796 = vmatprep.subr.mxu0 0.0
    %1797 = vmatpush1.msra.mxu0 %v192
    %1798 = vmatprep.subr.mxu0 0.0
    %1799 = vmatpush1.msra.mxu0 %v193
    %1800 = vmatprep.subr.mxu0 0.0
    %1801 = vmatpush1.msra.mxu0 %v194
    %1802 = vmatprep.subr.mxu0 0.0
    %1803 = vmatpush1.msra.mxu0 %v195
    %1804 = vmatprep.subr.mxu0 0.0
    %1805 = vmatpush1.msra.mxu0 %v196
    %1806 = vmatprep.subr.mxu0 0.0
    %1807 = vmatpush1.msra.mxu0 %v197
    %1808 = vmatprep.subr.mxu0 0.0
    %1809 = vmatpush1.msra.mxu0 %v198
    %1810 = vmatprep.subr.mxu0 0.0
    %1811 = vmatpush1.msra.mxu0 %v199
    %1812 = vmatprep.subr.mxu0 0.0
    %1813 = vmatpush1.msra.mxu0 %v200
    %1814 = vmatprep.subr.mxu0 0.0
    %1815 = vmatpush1.msra.mxu0 %v201
    %1816 = vmatprep.subr.mxu0 0.0
    %1817 = vmatpush1.msra.mxu0 %v202
    %1818 = vmatprep.subr.mxu0 0.0
    %1819 = vmatpush1.msra.mxu0 %v203
    %1820 = vmatprep.subr.mxu0 0.0
    %1821 = vmatpush1.msra.mxu0 %v204
    %1822 = vmatprep.subr.mxu0 0.0
    %1823 = vmatpush1.msra.mxu0 %v205
    %1824 = vmatprep.subr.mxu0 0.0
    %1825 = vmatpush1.msra.mxu0 %v206
    %1826 = vmatprep.subr.mxu0 0.0
    %1827 = vmatpush1.msra.mxu0 %v207
    %1828 = vmatprep.subr.mxu0 0.0
    %1829 = vmatpush1.msra.mxu0 0.0
    %1830 = vmatprep.subr.mxu0 0.0
    %1831 = vmatpush1.msra.mxu0 0.0
    %1832 = vmatprep.subr.mxu0 0.0
    %1833 = vmatpush1.msra.mxu0 0.0
    %1834 = vmatprep.subr.mxu0 0.0
    %1835 = vmatpush1.msra.mxu0 0.0
    %1836 = vmatprep.subr.mxu0 0.0
    %1837 = vmatpush1.msra.mxu0 0.0
    %1838 = vmatprep.subr.mxu0 0.0
    %1839 = vmatpush1.msra.mxu0 0.0
    %1840 = vmatprep.subr.mxu0 0.0
    %1841 = vmatpush1.msra.mxu0 0.0
    %1842 = vmatprep.subr.mxu0 0.0
    %1843 = vmatpush1.msra.mxu0 0.0
    %1844 = vmatprep.subr.mxu0 0.0
    %1845 = vmatpush1.msra.mxu0 0.0
    %1846 = vmatprep.subr.mxu0 0.0
    %1847 = vmatpush1.msra.mxu0 0.0
    %1848 = vmatprep.subr.mxu0 0.0
    %1849 = vmatpush1.msra.mxu0 0.0
    %1850 = vmatprep.subr.mxu0 0.0
    %1851 = vmatpush1.msra.mxu0 0.0
    %1852 = vmatprep.subr.mxu0 0.0
    %1853 = vmatpush1.msra.mxu0 0.0
    %1854 = vmatprep.subr.mxu0 0.0
    %1855 = vmatpush1.msra.mxu0 0.0
    %1856 = vmatprep.subr.mxu0 0.0
    %1857 = vmatpush1.msra.mxu0 0.0
    %1858 = vmatprep.subr.mxu0 0.0
    %1859 = vmatpush1.msra.mxu0 0.0
    %1860 = vmatprep.mubr.f32.mxu0 0.0
    %1861 = vmatmul.mubr.f32.gmra.mrb[0].mxu0 %v1725
    %v1862 = vpop.f32.mrb[0].mxu0
    %v1863 = vadd.f32 %v1793, %v1862
    %v1864 = vpop.f32.mrb[0].mxu0
    %1865 = vdwg.mxu0
    %v1866 = vadd.f32 %v1863, %v544
    %v1867 = vtanh.pop %v1866
    %1868 = vset.pattern.permute.xlu0 7
    %1869 = vperm.xlu0 %1868, %v172
    %v1870 = vpop.permute.xlu0 %1869
    %v1872 = vmul.f32 %v1870, %v318
    %v1873 = vadd.f32 %v1872, %v325
    %1874 = vmatprep.subr.mxu0 0.0
    %1875 = vmatpush1.msra.mxu0 %v176
    %1876 = vmatprep.subr.mxu0 0.0
    %1877 = vmatpush1.msra.mxu0 %v177
    %1878 = vmatprep.subr.mxu0 0.0
    %1879 = vmatpush1.msra.mxu0 %v178
    %1880 = vmatprep.subr.mxu0 0.0
    %1881 = vmatpush1.msra.mxu0 %v179
    %1882 = vmatprep.subr.mxu0 0.0
    %1883 = vmatpush1.msra.mxu0 %v180
    %1884 = vmatprep.subr.mxu0 0.0
    %1885 = vmatpush1.msra.mxu0 %v181
    %1886 = vmatprep.subr.mxu0 0.0
    %1887 = vmatpush1.msra.mxu0 %v182
    %1888 = vmatprep.subr.mxu0 0.0
    %1889 = vmatpush1.msra.mxu0 %v183
    %1890 = vmatprep.subr.mxu0 0.0
    %1891 = vmatpush1.msra.mxu0 %v184
    %1892 = vmatprep.subr.mxu0 0.0
    %1893 = vmatpush1.msra.mxu0 %v185
    %1894 = vmatprep.subr.mxu0 0.0
    %1895 = vmatpush1.msra.mxu0 %v186
    %1896 = vmatprep.subr.mxu0 0.0
    %1897 = vmatpush1.msra.mxu0 %v187
    %1898 = vmatprep.subr.mxu0 0.0
    %1899 = vmatpush1.msra.mxu0 %v188
    %1900 = vmatprep.subr.mxu0 0.0
    %1901 = vmatpush1.msra.mxu0 %v189
    %1902 = vmatprep.subr.mxu0 0.0
    %1903 = vmatpush1.msra.mxu0 %v190
    %1904 = vmatprep.subr.mxu0 0.0
    %1905 = vmatpush1.msra.mxu0 %v191
    %1906 = vmatprep.subr.mxu0 0.0
    %1907 = vmatpush1.msra.mxu0 0.0
    %1908 = vmatprep.subr.mxu0 0.0
    %1909 = vmatpush1.msra.mxu0 0.0
    %1910 = vmatprep.subr.mxu0 0.0
    %1911 = vmatpush1.msra.mxu0 0.0
    %1912 = vmatprep.subr.mxu0 0.0
    %1913 = vmatpush1.msra.mxu0 0.0
    %1914 = vmatprep.subr.mxu0 0.0
    %1915 = vmatpush1.msra.mxu0 0.0
    %1916 = vmatprep.subr.mxu0 0.0
    %1917 = vmatpush1.msra.mxu0 0.0
    %1918 = vmatprep.subr.mxu0 0.0
    %1919 = vmatpush1.msra.mxu0 0.0
    %1920 = vmatprep.subr.mxu0 0.0
    %1921 = vmatpush1.msra.mxu0 0.0
    %1922 = vmatprep.subr.mxu0 0.0
    %1923 = vmatpush1.msra.mxu0 0.0
    %1924 = vmatprep.subr.mxu0 0.0
    %1925 = vmatpush1.msra.mxu0 0.0
    %1926 = vmatprep.subr.mxu0 0.0
    %1927 = vmatpush1.msra.mxu0 0.0
    %1928 = vmatprep.subr.mxu0 0.0
    %1929 = vmatpush1.msra.mxu0 0.0
    %1930 = vmatprep.subr.mxu0 0.0
    %1931 = vmatpush1.msra.mxu0 0.0
    %1932 = vmatprep.subr.mxu0 0.0
    %1933 = vmatpush1.msra.mxu0 0.0
    %1934 = vmatprep.subr.mxu0 0.0
    %1935 = vmatpush1.msra.mxu0 0.0
    %1936 = vmatprep.subr.mxu0 0.0
    %1937 = vmatpush1.msra.mxu0 0.0
    %1938 = vmatprep.mubr.f32.mxu0 0.0
    %1939 = vmatmul.mubr.f32.gmra.mrb[0].mxu0 %v1725
    %v1940 = vpop.f32.mrb[0].mxu0
    %v1941 = vadd.f32 0.0, %v1940
    %v1942 = vpop.f32.mrb[0].mxu0
    %1943 = vdwg.mxu0
    %v1944 = vadd.f32 %v1873, %v1941
    %v1945 = vtanh.pop %v1944
    %1946 = vmatprep.subr.mxu0 0.0
    %1947 = vmatpush1.msra.mxu0 %v208
    %1948 = vmatprep.subr.mxu0 0.0
    %1949 = vmatpush1.msra.mxu0 %v209
    %1950 = vmatprep.subr.mxu0 0.0
    %1951 = vmatpush1.msra.mxu0 %v210
    %1952 = vmatprep.subr.mxu0 0.0
    %1953 = vmatpush1.msra.mxu0 %v211
    %1954 = vmatprep.subr.mxu0 0.0
    %1955 = vmatpush1.msra.mxu0 %v212
    %1956 = vmatprep.subr.mxu0 0.0
    %1957 = vmatpush1.msra.mxu0 %v213
    %1958 = vmatprep.subr.mxu0 0.0
    %1959 = vmatpush1.msra.mxu0 %v214
    %1960 = vmatprep.subr.mxu0 0.0
    %1961 = vmatpush1.msra.mxu0 %v215
    %1962 = vmatprep.subr.mxu0 0.0
    %1963 = vmatpush1.msra.mxu0 %v216
    %1964 = vmatprep.subr.mxu0 0.0
    %1965 = vmatpush1.msra.mxu0 %v217
    %1966 = vmatprep.subr.mxu0 0.0
    %1967 = vmatpush1.msra.mxu0 %v218
    %1968 = vmatprep.subr.mxu0 0.0
    %1969 = vmatpush1.msra.mxu0 %v219
    %1970 = vmatprep.subr.mxu0 0.0
    %1971 = vmatpush1.msra.mxu0 %v220
    %1972 = vmatprep.subr.mxu0 0.0
    %1973 = vmatpush1.msra.mxu0 %v221
    %1974 = vmatprep.subr.mxu0 0.0
    %1975 = vmatpush1.msra.mxu0 %v222
    %1976 = vmatprep.subr.mxu0 0.0
    %1977 = vmatpush1.msra.mxu0 %v223
    %1978 = vmatprep.subr.mxu0 0.0
    %1979 = vmatpush1.msra.mxu0 0.0
    %1980 = vmatprep.subr.mxu0 0.0
    %1981 = vmatpush1.msra.mxu0 0.0
    %1982 = vmatprep.subr.mxu0 0.0
    %1983 = vmatpush1.msra.mxu0 0.0
    %1984 = vmatprep.subr.mxu0 0.0
    %1985 = vmatpush1.msra.mxu0 0.0
    %1986 = vmatprep.subr.mxu0 0.0
    %1987 = vmatpush1.msra.mxu0 0.0
    %1988 = vmatprep.subr.mxu0 0.0
    %1989 = vmatpush1.msra.mxu0 0.0
    %1990 = vmatprep.subr.mxu0 0.0
    %1991 = vmatpush1.msra.mxu0 0.0
    %1992 = vmatprep.subr.mxu0 0.0
    %1993 = vmatpush1.msra.mxu0 0.0
    %1994 = vmatprep.subr.mxu0 0.0
    %1995 = vmatpush1.msra.mxu0 0.0
    %1996 = vmatprep.subr.mxu0 0.0
    %1997 = vmatpush1.msra.mxu0 0.0
    %1998 = vmatprep.subr.mxu0 0.0
    %1999 = vmatpush1.msra.mxu0 0.0
    %2000 = vmatprep.subr.mxu0 0.0
    %2001 = vmatpush1.msra.mxu0 0.0
    %2002 = vmatprep.subr.mxu0 0.0
    %2003 = vmatpush1.msra.mxu0 0.0
    %2004 = vmatprep.subr.mxu0 0.0
    %2005 = vmatpush1.msra.mxu0 0.0
    %2006 = vmatprep.subr.mxu0 0.0
    %2007 = vmatpush1.msra.mxu0 0.0
    %2008 = vmatprep.subr.mxu0 0.0
    %2009 = vmatpush1.msra.mxu0 0.0
    %2010 = vmatprep.mubr.f32.mxu0 0.0
    %2011 = vmatmul.mubr.f32.gmra.mrb[0].mxu0 %v1867
    %v2012 = vpop.f32.mrb[0].mxu0
    %v2013 = vadd.f32 0.0, %v2012
    %v2014 = vpop.f32.mrb[0].mxu0
    %2015 = vdwg.mxu0
    %2016 = vmatprep.subr.mxu0 0.0
    %2017 = vmatpush1.msra.mxu0 %v192
    %2018 = vmatprep.subr.mxu0 0.0
    %2019 = vmatpush1.msra.mxu0 %v193
    %2020 = vmatprep.subr.mxu0 0.0
    %2021 = vmatpush1.msra.mxu0 %v194
    %2022 = vmatprep.subr.mxu0 0.0
    %2023 = vmatpush1.msra.mxu0 %v195
    %2024 = vmatprep.subr.mxu0 0.0
    %2025 = vmatpush1.msra.mxu0 %v196
    %2026 = vmatprep.subr.mxu0 0.0
    %2027 = vmatpush1.msra.mxu0 %v197
    %2028 = vmatprep.subr.mxu0 0.0
    %2029 = vmatpush1.msra.mxu0 %v198
    %2030 = vmatprep.subr.mxu0 0.0
    %2031 = vmatpush1.msra.mxu0 %v199
    %2032 = vmatprep.subr.mxu0 0.0
    %2033 = vmatpush1.msra.mxu0 %v200
    %2034 = vmatprep.subr.mxu0 0.0
    %2035 = vmatpush1.msra.mxu0 %v201
    %2036 = vmatprep.subr.mxu0 0.0
    %2037 = vmatpush1.msra.mxu0 %v202
    %2038 = vmatprep.subr.mxu0 0.0
    %2039 = vmatpush1.msra.mxu0 %v203
    %2040 = vmatprep.subr.mxu0 0.0
    %2041 = vmatpush1.msra.mxu0 %v204
    %2042 = vmatprep.subr.mxu0 0.0
    %2043 = vmatpush1.msra.mxu0 %v205
    %2044 = vmatprep.subr.mxu0 0.0
    %2045 = vmatpush1.msra.mxu0 %v206
    %2046 = vmatprep.subr.mxu0 0.0
    %2047 = vmatpush1.msra.mxu0 %v207
    %2048 = vmatprep.subr.mxu0 0.0
    %2049 = vmatpush1.msra.mxu0 0.0
    %2050 = vmatprep.subr.mxu0 0.0
    %2051 = vmatpush1.msra.mxu0 0.0
    %2052 = vmatprep.subr.mxu0 0.0
    %2053 = vmatpush1.msra.mxu0 0.0
    %2054 = vmatprep.subr.mxu0 0.0
    %2055 = vmatpush1.msra.mxu0 0.0
    %2056 = vmatprep.subr.mxu0 0.0
    %2057 = vmatpush1.msra.mxu0 0.0
    %2058 = vmatprep.subr.mxu0 0.0
    %2059 = vmatpush1.msra.mxu0 0.0
    %2060 = vmatprep.subr.mxu0 0.0
    %2061 = vmatpush1.msra.mxu0 0.0
    %2062 = vmatprep.subr.mxu0 0.0
    %2063 = vmatpush1.msra.mxu0 0.0
    %2064 = vmatprep.subr.mxu0 0.0
    %2065 = vmatpush1.msra.mxu0 0.0
    %2066 = vmatprep.subr.mxu0 0.0
    %2067 = vmatpush1.msra.mxu0 0.0
    %2068 = vmatprep.subr.mxu0 0.0
    %2069 = vmatpush1.msra.mxu0 0.0
    %2070 = vmatprep.subr.mxu0 0.0
    %2071 = vmatpush1.msra.mxu0 0.0
    %2072 = vmatprep.subr.mxu0 0.0
    %2073 = vmatpush1.msra.mxu0 0.0
    %2074 = vmatprep.subr.mxu0 0.0
    %2075 = vmatpush1.msra.mxu0 0.0
    %2076 = vmatprep.subr.mxu0 0.0
    %2077 = vmatpush1.msra.mxu0 0.0
    %2078 = vmatprep.subr.mxu0 0.0
    %2079 = vmatpush1.msra.mxu0 0.0
    %2080 = vmatprep.mubr.f32.mxu0 0.0
    %2081 = vmatmul.mubr.f32.gmra.mrb[0].mxu0 %v1945
    %v2082 = vpop.f32.mrb[0].mxu0
    %v2083 = vadd.f32 %v2013, %v2082
    %v2084 = vpop.f32.mrb[0].mxu0
    %2085 = vdwg.mxu0
    %v2086 = vadd.f32 %v2083, %v544
    %v2087 = vtanh.pop %v2086
    %2089 = vset.pattern.permute.xlu0 0
    %2090 = vperm.xlu0 %2089, %v173
    %v2091 = vpop.permute.xlu0 %2090
    %v2094 = vlaneseq
    %v2095 = vshrl.u32 %v2094, 7
    %v2096 = vsub.s32 0, %v2095
    %v2097 = vrot.slane %v225, %v2096
    %v2099 = vmul.f32 %v2091, %v2097
    %v2101 = vlaneseq
    %v2102 = vshrl.u32 %v2101, 7
    %v2103 = vsub.s32 0, %v2102
    %v2104 = vrot.slane %v226, %v2103
    %v2106 = vadd.f32 %v2099, %v2104
    %2107 = vmatprep.subr.mxu0 0.0
    %2108 = vmatpush1.msra.mxu0 %v227
    %2109 = vmatprep.subr.mxu0 0.0
    %2110 = vmatpush1.msra.mxu0 %v228
    %2111 = vmatprep.subr.mxu0 0.0
    %2112 = vmatpush1.msra.mxu0 %v229
    %2113 = vmatprep.subr.mxu0 0.0
    %2114 = vmatpush1.msra.mxu0 %v230
    %2115 = vmatprep.subr.mxu0 0.0
    %2116 = vmatpush1.msra.mxu0 %v231
    %2117 = vmatprep.subr.mxu0 0.0
    %2118 = vmatpush1.msra.mxu0 %v232
    %2119 = vmatprep.subr.mxu0 0.0
    %2120 = vmatpush1.msra.mxu0 %v233
    %2121 = vmatprep.subr.mxu0 0.0
    %2122 = vmatpush1.msra.mxu0 %v234
    %2123 = vmatprep.subr.mxu0 0.0
    %2124 = vmatpush1.msra.mxu0 %v235
    %2125 = vmatprep.subr.mxu0 0.0
    %2126 = vmatpush1.msra.mxu0 %v236
    %2127 = vmatprep.subr.mxu0 0.0
    %2128 = vmatpush1.msra.mxu0 %v237
    %2129 = vmatprep.subr.mxu0 0.0
    %2130 = vmatpush1.msra.mxu0 %v238
    %2131 = vmatprep.subr.mxu0 0.0
    %2132 = vmatpush1.msra.mxu0 %v239
    %2133 = vmatprep.subr.mxu0 0.0
    %2134 = vmatpush1.msra.mxu0 %v240
    %2135 = vmatprep.subr.mxu0 0.0
    %2136 = vmatpush1.msra.mxu0 %v241
    %2137 = vmatprep.subr.mxu0 0.0
    %2138 = vmatpush1.msra.mxu0 %v242
    %2139 = vmatprep.subr.mxu0 0.0
    %2140 = vmatpush1.msra.mxu0 0.0
    %2141 = vmatprep.subr.mxu0 0.0
    %2142 = vmatpush1.msra.mxu0 0.0
    %2143 = vmatprep.subr.mxu0 0.0
    %2144 = vmatpush1.msra.mxu0 0.0
    %2145 = vmatprep.subr.mxu0 0.0
    %2146 = vmatpush1.msra.mxu0 0.0
    %2147 = vmatprep.subr.mxu0 0.0
    %2148 = vmatpush1.msra.mxu0 0.0
    %2149 = vmatprep.subr.mxu0 0.0
    %2150 = vmatpush1.msra.mxu0 0.0
    %2151 = vmatprep.subr.mxu0 0.0
    %2152 = vmatpush1.msra.mxu0 0.0
    %2153 = vmatprep.subr.mxu0 0.0
    %2154 = vmatpush1.msra.mxu0 0.0
    %2155 = vmatprep.subr.mxu0 0.0
    %2156 = vmatpush1.msra.mxu0 0.0
    %2157 = vmatprep.subr.mxu0 0.0
    %2158 = vmatpush1.msra.mxu0 0.0
    %2159 = vmatprep.subr.mxu0 0.0
    %2160 = vmatpush1.msra.mxu0 0.0
    %2161 = vmatprep.subr.mxu0 0.0
    %2162 = vmatpush1.msra.mxu0 0.0
    %2163 = vmatprep.subr.mxu0 0.0
    %2164 = vmatpush1.msra.mxu0 0.0
    %2165 = vmatprep.subr.mxu0 0.0
    %2166 = vmatpush1.msra.mxu0 0.0
    %2167 = vmatprep.subr.mxu0 0.0
    %2168 = vmatpush1.msra.mxu0 0.0
    %2169 = vmatprep.subr.mxu0 0.0
    %2170 = vmatpush1.msra.mxu0 0.0
    %2171 = vmatprep.mubr.f32.mxu0 0.0
    %2172 = vmatmul.mubr.f32.gmra.mrb[0].mxu0 %v1945
    %v2173 = vpop.f32.mrb[0].mxu0
    %v2174 = vadd.f32 0.0, %v2173
    %v2175 = vpop.f32.mrb[0].mxu0
    %2176 = vdwg.mxu0
    %v2177 = vadd.f32 %v2106, %v2174
    %v2178 = vtanh.pop %v2177
    %2179 = vmatprep.subr.mxu0 0.0
    %2180 = vmatpush1.msra.mxu0 %v259
    %2181 = vmatprep.subr.mxu0 0.0
    %2182 = vmatpush1.msra.mxu0 %v260
    %2183 = vmatprep.subr.mxu0 0.0
    %2184 = vmatpush1.msra.mxu0 %v261
    %2185 = vmatprep.subr.mxu0 0.0
    %2186 = vmatpush1.msra.mxu0 %v262
    %2187 = vmatprep.subr.mxu0 0.0
    %2188 = vmatpush1.msra.mxu0 %v263
    %2189 = vmatprep.subr.mxu0 0.0
    %2190 = vmatpush1.msra.mxu0 %v264
    %2191 = vmatprep.subr.mxu0 0.0
    %2192 = vmatpush1.msra.mxu0 %v265
    %2193 = vmatprep.subr.mxu0 0.0
    %2194 = vmatpush1.msra.mxu0 %v266
    %2195 = vmatprep.subr.mxu0 0.0
    %2196 = vmatpush1.msra.mxu0 %v267
    %2197 = vmatprep.subr.mxu0 0.0
    %2198 = vmatpush1.msra.mxu0 %v268
    %2199 = vmatprep.subr.mxu0 0.0
    %2200 = vmatpush1.msra.mxu0 %v269
    %2201 = vmatprep.subr.mxu0 0.0
    %2202 = vmatpush1.msra.mxu0 %v270
    %2203 = vmatprep.subr.mxu0 0.0
    %2204 = vmatpush1.msra.mxu0 %v271
    %2205 = vmatprep.subr.mxu0 0.0
    %2206 = vmatpush1.msra.mxu0 %v272
    %2207 = vmatprep.subr.mxu0 0.0
    %2208 = vmatpush1.msra.mxu0 %v273
    %2209 = vmatprep.subr.mxu0 0.0
    %2210 = vmatpush1.msra.mxu0 %v274
    %2211 = vmatprep.subr.mxu0 0.0
    %2212 = vmatpush1.msra.mxu0 0.0
    %2213 = vmatprep.subr.mxu0 0.0
    %2214 = vmatpush1.msra.mxu0 0.0
    %2215 = vmatprep.subr.mxu0 0.0
    %2216 = vmatpush1.msra.mxu0 0.0
    %2217 = vmatprep.subr.mxu0 0.0
    %2218 = vmatpush1.msra.mxu0 0.0
    %2219 = vmatprep.subr.mxu0 0.0
    %2220 = vmatpush1.msra.mxu0 0.0
    %2221 = vmatprep.subr.mxu0 0.0
    %2222 = vmatpush1.msra.mxu0 0.0
    %2223 = vmatprep.subr.mxu0 0.0
    %2224 = vmatpush1.msra.mxu0 0.0
    %2225 = vmatprep.subr.mxu0 0.0
    %2226 = vmatpush1.msra.mxu0 0.0
    %2227 = vmatprep.subr.mxu0 0.0
    %2228 = vmatpush1.msra.mxu0 0.0
    %2229 = vmatprep.subr.mxu0 0.0
    %2230 = vmatpush1.msra.mxu0 0.0
    %2231 = vmatprep.subr.mxu0 0.0
    %2232 = vmatpush1.msra.mxu0 0.0
    %2233 = vmatprep.subr.mxu0 0.0
    %2234 = vmatpush1.msra.mxu0 0.0
    %2235 = vmatprep.subr.mxu0 0.0
    %2236 = vmatpush1.msra.mxu0 0.0
    %2237 = vmatprep.subr.mxu0 0.0
    %2238 = vmatpush1.msra.mxu0 0.0
    %2239 = vmatprep.subr.mxu0 0.0
    %2240 = vmatpush1.msra.mxu0 0.0
    %2241 = vmatprep.subr.mxu0 0.0
    %2242 = vmatpush1.msra.mxu0 0.0
    %2243 = vmatprep.mubr.f32.mxu0 0.0
    %2244 = vmatmul.mubr.f32.gmra.mrb[0].mxu0 %v2087
    %v2245 = vpop.f32.mrb[0].mxu0
    %v2246 = vadd.f32 0.0, %v2245
    %v2247 = vpop.f32.mrb[0].mxu0
    %2248 = vdwg.mxu0
    %2249 = vmatprep.subr.mxu0 0.0
    %2250 = vmatpush1.msra.mxu0 %v243
    %2251 = vmatprep.subr.mxu0 0.0
    %2252 = vmatpush1.msra.mxu0 %v244
    %2253 = vmatprep.subr.mxu0 0.0
    %2254 = vmatpush1.msra.mxu0 %v245
    %2255 = vmatprep.subr.mxu0 0.0
    %2256 = vmatpush1.msra.mxu0 %v246
    %2257 = vmatprep.subr.mxu0 0.0
    %2258 = vmatpush1.msra.mxu0 %v247
    %2259 = vmatprep.subr.mxu0 0.0
    %2260 = vmatpush1.msra.mxu0 %v248
    %2261 = vmatprep.subr.mxu0 0.0
    %2262 = vmatpush1.msra.mxu0 %v249
    %2263 = vmatprep.subr.mxu0 0.0
    %2264 = vmatpush1.msra.mxu0 %v250
    %2265 = vmatprep.subr.mxu0 0.0
    %2266 = vmatpush1.msra.mxu0 %v251
    %2267 = vmatprep.subr.mxu0 0.0
    %2268 = vmatpush1.msra.mxu0 %v252
    %2269 = vmatprep.subr.mxu0 0.0
    %2270 = vmatpush1.msra.mxu0 %v253
    %2271 = vmatprep.subr.mxu0 0.0
    %2272 = vmatpush1.msra.mxu0 %v254
    %2273 = vmatprep.subr.mxu0 0.0
    %2274 = vmatpush1.msra.mxu0 %v255
    %2275 = vmatprep.subr.mxu0 0.0
    %2276 = vmatpush1.msra.mxu0 %v256
    %2277 = vmatprep.subr.mxu0 0.0
    %2278 = vmatpush1.msra.mxu0 %v257
    %2279 = vmatprep.subr.mxu0 0.0
    %2280 = vmatpush1.msra.mxu0 %v258
    %2281 = vmatprep.subr.mxu0 0.0
    %2282 = vmatpush1.msra.mxu0 0.0
    %2283 = vmatprep.subr.mxu0 0.0
    %2284 = vmatpush1.msra.mxu0 0.0
    %2285 = vmatprep.subr.mxu0 0.0
    %2286 = vmatpush1.msra.mxu0 0.0
    %2287 = vmatprep.subr.mxu0 0.0
    %2288 = vmatpush1.msra.mxu0 0.0
    %2289 = vmatprep.subr.mxu0 0.0
    %2290 = vmatpush1.msra.mxu0 0.0
    %2291 = vmatprep.subr.mxu0 0.0
    %2292 = vmatpush1.msra.mxu0 0.0
    %2293 = vmatprep.subr.mxu0 0.0
    %2294 = vmatpush1.msra.mxu0 0.0
    %2295 = vmatprep.subr.mxu0 0.0
    %2296 = vmatpush1.msra.mxu0 0.0
    %2297 = vmatprep.subr.mxu0 0.0
    %2298 = vmatpush1.msra.mxu0 0.0
    %2299 = vmatprep.subr.mxu0 0.0
    %2300 = vmatpush1.msra.mxu0 0.0
    %2301 = vmatprep.subr.mxu0 0.0
    %2302 = vmatpush1.msra.mxu0 0.0
    %2303 = vmatprep.subr.mxu0 0.0
    %2304 = vmatpush1.msra.mxu0 0.0
    %2305 = vmatprep.subr.mxu0 0.0
    %2306 = vmatpush1.msra.mxu0 0.0
    %2307 = vmatprep.subr.mxu0 0.0
    %2308 = vmatpush1.msra.mxu0 0.0
    %2309 = vmatprep.subr.mxu0 0.0
    %2310 = vmatpush1.msra.mxu0 0.0
    %2311 = vmatprep.subr.mxu0 0.0
    %2312 = vmatpush1.msra.mxu0 0.0
    %2313 = vmatprep.mubr.f32.mxu0 0.0
    %2314 = vmatmul.mubr.f32.gmra.mrb[0].mxu0 %v2178
    %v2315 = vpop.f32.mrb[0].mxu0
    %v2316 = vadd.f32 %v2246, %v2315
    %v2317 = vpop.f32.mrb[0].mxu0
    %2318 = vdwg.mxu0
    %v2320 = vlaneseq
    %v2321 = vshrl.u32 %v2320, 7
    %v2322 = vsub.s32 0, %v2321
    %v2323 = vrot.slane %v275, %v2322
    %v2325 = vadd.f32 %v2316, %v2323
    %v2326 = vtanh.pop %v2325
    %2327 = vst [vmem:[#allocation2] sm:$0xff] %v2326
    %2328 = vset.pattern.permute.xlu0 1
    %2329 = vperm.xlu0 %2328, %v173
    %v2330 = vpop.permute.xlu0 %2329
    %v2332 = vmul.f32 %v2330, %v2097
    %v2333 = vadd.f32 %v2332, %v2104
    %2334 = vmatprep.subr.mxu0 0.0
    %2335 = vmatpush1.msra.mxu0 %v227
    %2336 = vmatprep.subr.mxu0 0.0
    %2337 = vmatpush1.msra.mxu0 %v228
    %2338 = vmatprep.subr.mxu0 0.0
    %2339 = vmatpush1.msra.mxu0 %v229
    %2340 = vmatprep.subr.mxu0 0.0
    %2341 = vmatpush1.msra.mxu0 %v230
    %2342 = vmatprep.subr.mxu0 0.0
    %2343 = vmatpush1.msra.mxu0 %v231
    %2344 = vmatprep.subr.mxu0 0.0
    %2345 = vmatpush1.msra.mxu0 %v232
    %2346 = vmatprep.subr.mxu0 0.0
    %2347 = vmatpush1.msra.mxu0 %v233
    %2348 = vmatprep.subr.mxu0 0.0
    %2349 = vmatpush1.msra.mxu0 %v234
    %2350 = vmatprep.subr.mxu0 0.0
    %2351 = vmatpush1.msra.mxu0 %v235
    %2352 = vmatprep.subr.mxu0 0.0
    %2353 = vmatpush1.msra.mxu0 %v236
    %2354 = vmatprep.subr.mxu0 0.0
    %2355 = vmatpush1.msra.mxu0 %v237
    %2356 = vmatprep.subr.mxu0 0.0
    %2357 = vmatpush1.msra.mxu0 %v238
    %2358 = vmatprep.subr.mxu0 0.0
    %2359 = vmatpush1.msra.mxu0 %v239
    %2360 = vmatprep.subr.mxu0 0.0
    %2361 = vmatpush1.msra.mxu0 %v240
    %2362 = vmatprep.subr.mxu0 0.0
    %2363 = vmatpush1.msra.mxu0 %v241
    %2364 = vmatprep.subr.mxu0 0.0
    %2365 = vmatpush1.msra.mxu0 %v242
    %2366 = vmatprep.subr.mxu0 0.0
    %2367 = vmatpush1.msra.mxu0 0.0
    %2368 = vmatprep.subr.mxu0 0.0
    %2369 = vmatpush1.msra.mxu0 0.0
    %2370 = vmatprep.subr.mxu0 0.0
    %2371 = vmatpush1.msra.mxu0 0.0
    %2372 = vmatprep.subr.mxu0 0.0
    %2373 = vmatpush1.msra.mxu0 0.0
    %2374 = vmatprep.subr.mxu0 0.0
    %2375 = vmatpush1.msra.mxu0 0.0
    %2376 = vmatprep.subr.mxu0 0.0
    %2377 = vmatpush1.msra.mxu0 0.0
    %2378 = vmatprep.subr.mxu0 0.0
    %2379 = vmatpush1.msra.mxu0 0.0
    %2380 = vmatprep.subr.mxu0 0.0
    %2381 = vmatpush1.msra.mxu0 0.0
    %2382 = vmatprep.subr.mxu0 0.0
    %2383 = vmatpush1.msra.mxu0 0.0
    %2384 = vmatprep.subr.mxu0 0.0
    %2385 = vmatpush1.msra.mxu0 0.0
    %2386 = vmatprep.subr.mxu0 0.0
    %2387 = vmatpush1.msra.mxu0 0.0
    %2388 = vmatprep.subr.mxu0 0.0
    %2389 = vmatpush1.msra.mxu0 0.0
    %2390 = vmatprep.subr.mxu0 0.0
    %2391 = vmatpush1.msra.mxu0 0.0
    %2392 = vmatprep.subr.mxu0 0.0
    %2393 = vmatpush1.msra.mxu0 0.0
    %2394 = vmatprep.subr.mxu0 0.0
    %2395 = vmatpush1.msra.mxu0 0.0
    %2396 = vmatprep.subr.mxu0 0.0
    %2397 = vmatpush1.msra.mxu0 0.0
    %2398 = vmatprep.mubr.f32.mxu0 0.0
    %2399 = vmatmul.mubr.f32.gmra.mrb[0].mxu0 %v2178
    %v2400 = vpop.f32.mrb[0].mxu0
    %v2401 = vadd.f32 0.0, %v2400
    %v2402 = vpop.f32.mrb[0].mxu0
    %2403 = vdwg.mxu0
    %v2404 = vadd.f32 %v2333, %v2401
    %v2405 = vtanh.pop %v2404
    %2406 = vmatprep.subr.mxu0 0.0
    %2407 = vmatpush1.msra.mxu0 %v259
    %2408 = vmatprep.subr.mxu0 0.0
    %2409 = vmatpush1.msra.mxu0 %v260
    %2410 = vmatprep.subr.mxu0 0.0
    %2411 = vmatpush1.msra.mxu0 %v261
    %2412 = vmatprep.subr.mxu0 0.0
    %2413 = vmatpush1.msra.mxu0 %v262
    %2414 = vmatprep.subr.mxu0 0.0
    %2415 = vmatpush1.msra.mxu0 %v263
    %2416 = vmatprep.subr.mxu0 0.0
    %2417 = vmatpush1.msra.mxu0 %v264
    %2418 = vmatprep.subr.mxu0 0.0
    %2419 = vmatpush1.msra.mxu0 %v265
    %2420 = vmatprep.subr.mxu0 0.0
    %2421 = vmatpush1.msra.mxu0 %v266
    %2422 = vmatprep.subr.mxu0 0.0
    %2423 = vmatpush1.msra.mxu0 %v267
    %2424 = vmatprep.subr.mxu0 0.0
    %2425 = vmatpush1.msra.mxu0 %v268
    %2426 = vmatprep.subr.mxu0 0.0
    %2427 = vmatpush1.msra.mxu0 %v269
    %2428 = vmatprep.subr.mxu0 0.0
    %2429 = vmatpush1.msra.mxu0 %v270
    %2430 = vmatprep.subr.mxu0 0.0
    %2431 = vmatpush1.msra.mxu0 %v271
    %2432 = vmatprep.subr.mxu0 0.0
    %2433 = vmatpush1.msra.mxu0 %v272
    %2434 = vmatprep.subr.mxu0 0.0
    %2435 = vmatpush1.msra.mxu0 %v273
    %2436 = vmatprep.subr.mxu0 0.0
    %2437 = vmatpush1.msra.mxu0 %v274
    %2438 = vmatprep.subr.mxu0 0.0
    %2439 = vmatpush1.msra.mxu0 0.0
    %2440 = vmatprep.subr.mxu0 0.0
    %2441 = vmatpush1.msra.mxu0 0.0
    %2442 = vmatprep.subr.mxu0 0.0
    %2443 = vmatpush1.msra.mxu0 0.0
    %2444 = vmatprep.subr.mxu0 0.0
    %2445 = vmatpush1.msra.mxu0 0.0
    %2446 = vmatprep.subr.mxu0 0.0
    %2447 = vmatpush1.msra.mxu0 0.0
    %2448 = vmatprep.subr.mxu0 0.0
    %2449 = vmatpush1.msra.mxu0 0.0
    %2450 = vmatprep.subr.mxu0 0.0
    %2451 = vmatpush1.msra.mxu0 0.0
    %2452 = vmatprep.subr.mxu0 0.0
    %2453 = vmatpush1.msra.mxu0 0.0
    %2454 = vmatprep.subr.mxu0 0.0
    %2455 = vmatpush1.msra.mxu0 0.0
    %2456 = vmatprep.subr.mxu0 0.0
    %2457 = vmatpush1.msra.mxu0 0.0
    %2458 = vmatprep.subr.mxu0 0.0
    %2459 = vmatpush1.msra.mxu0 0.0
    %2460 = vmatprep.subr.mxu0 0.0
    %2461 = vmatpush1.msra.mxu0 0.0
    %2462 = vmatprep.subr.mxu0 0.0
    %2463 = vmatpush1.msra.mxu0 0.0
    %2464 = vmatprep.subr.mxu0 0.0
    %2465 = vmatpush1.msra.mxu0 0.0
    %2466 = vmatprep.subr.mxu0 0.0
    %2467 = vmatpush1.msra.mxu0 0.0
    %2468 = vmatprep.subr.mxu0 0.0
    %2469 = vmatpush1.msra.mxu0 0.0
    %2470 = vmatprep.mubr.f32.mxu0 0.0
    %2471 = vmatmul.mubr.f32.gmra.mrb[0].mxu0 %v2326
    %v2472 = vpop.f32.mrb[0].mxu0
    %v2473 = vadd.f32 0.0, %v2472
    %v2474 = vpop.f32.mrb[0].mxu0
    %2475 = vdwg.mxu0
    %2476 = vmatprep.subr.mxu0 0.0
    %2477 = vmatpush1.msra.mxu0 %v243
    %2478 = vmatprep.subr.mxu0 0.0
    %2479 = vmatpush1.msra.mxu0 %v244
    %2480 = vmatprep.subr.mxu0 0.0
    %2481 = vmatpush1.msra.mxu0 %v245
    %2482 = vmatprep.subr.mxu0 0.0
    %2483 = vmatpush1.msra.mxu0 %v246
    %2484 = vmatprep.subr.mxu0 0.0
    %2485 = vmatpush1.msra.mxu0 %v247
    %2486 = vmatprep.subr.mxu0 0.0
    %2487 = vmatpush1.msra.mxu0 %v248
    %2488 = vmatprep.subr.mxu0 0.0
    %2489 = vmatpush1.msra.mxu0 %v249
    %2490 = vmatprep.subr.mxu0 0.0
    %2491 = vmatpush1.msra.mxu0 %v250
    %2492 = vmatprep.subr.mxu0 0.0
    %2493 = vmatpush1.msra.mxu0 %v251
    %2494 = vmatprep.subr.mxu0 0.0
    %2495 = vmatpush1.msra.mxu0 %v252
    %2496 = vmatprep.subr.mxu0 0.0
    %2497 = vmatpush1.msra.mxu0 %v253
    %2498 = vmatprep.subr.mxu0 0.0
    %2499 = vmatpush1.msra.mxu0 %v254
    %2500 = vmatprep.subr.mxu0 0.0
    %2501 = vmatpush1.msra.mxu0 %v255
    %2502 = vmatprep.subr.mxu0 0.0
    %2503 = vmatpush1.msra.mxu0 %v256
    %2504 = vmatprep.subr.mxu0 0.0
    %2505 = vmatpush1.msra.mxu0 %v257
    %2506 = vmatprep.subr.mxu0 0.0
    %2507 = vmatpush1.msra.mxu0 %v258
    %2508 = vmatprep.subr.mxu0 0.0
    %2509 = vmatpush1.msra.mxu0 0.0
    %2510 = vmatprep.subr.mxu0 0.0
    %2511 = vmatpush1.msra.mxu0 0.0
    %2512 = vmatprep.subr.mxu0 0.0
    %2513 = vmatpush1.msra.mxu0 0.0
    %2514 = vmatprep.subr.mxu0 0.0
    %2515 = vmatpush1.msra.mxu0 0.0
    %2516 = vmatprep.subr.mxu0 0.0
    %2517 = vmatpush1.msra.mxu0 0.0
    %2518 = vmatprep.subr.mxu0 0.0
    %2519 = vmatpush1.msra.mxu0 0.0
    %2520 = vmatprep.subr.mxu0 0.0
    %2521 = vmatpush1.msra.mxu0 0.0
    %2522 = vmatprep.subr.mxu0 0.0
    %2523 = vmatpush1.msra.mxu0 0.0
    %2524 = vmatprep.subr.mxu0 0.0
    %2525 = vmatpush1.msra.mxu0 0.0
    %2526 = vmatprep.subr.mxu0 0.0
    %2527 = vmatpush1.msra.mxu0 0.0
    %2528 = vmatprep.subr.mxu0 0.0
    %2529 = vmatpush1.msra.mxu0 0.0
    %2530 = vmatprep.subr.mxu0 0.0
    %2531 = vmatpush1.msra.mxu0 0.0
    %2532 = vmatprep.subr.mxu0 0.0
    %2533 = vmatpush1.msra.mxu0 0.0
    %2534 = vmatprep.subr.mxu0 0.0
    %2535 = vmatpush1.msra.mxu0 0.0
    %2536 = vmatprep.subr.mxu0 0.0
    %2537 = vmatpush1.msra.mxu0 0.0
    %2538 = vmatprep.subr.mxu0 0.0
    %2539 = vmatpush1.msra.mxu0 0.0
    %2540 = vmatprep.mubr.f32.mxu0 0.0
    %2541 = vmatmul.mubr.f32.gmra.mrb[0].mxu0 %v2405
    %v2542 = vpop.f32.mrb[0].mxu0
    %v2543 = vadd.f32 %v2473, %v2542
    %v2544 = vpop.f32.mrb[0].mxu0
    %2545 = vdwg.mxu0
    %v2546 = vadd.f32 %v2543, %v2323
    %v2547 = vtanh.pop %v2546
    %2548 = vst [vmem:[#allocation2 + $0x8] sm:$0xff] %v2547
    %2549 = vset.pattern.permute.xlu0 2
    %2550 = vperm.xlu0 %2549, %v173
    %v2551 = vpop.permute.xlu0 %2550
    %v2553 = vmul.f32 %v2551, %v2097
    %v2554 = vadd.f32 %v2553, %v2104
    %2555 = vmatprep.subr.mxu0 0.0
    %2556 = vmatpush1.msra.mxu0 %v227
    %2557 = vmatprep.subr.mxu0 0.0
    %2558 = vmatpush1.msra.mxu0 %v228
    %2559 = vmatprep.subr.mxu0 0.0
    %2560 = vmatpush1.msra.mxu0 %v229
    %2561 = vmatprep.subr.mxu0 0.0
    %2562 = vmatpush1.msra.mxu0 %v230
    %2563 = vmatprep.subr.mxu0 0.0
    %2564 = vmatpush1.msra.mxu0 %v231
    %2565 = vmatprep.subr.mxu0 0.0
    %2566 = vmatpush1.msra.mxu0 %v232
    %2567 = vmatprep.subr.mxu0 0.0
    %2568 = vmatpush1.msra.mxu0 %v233
    %2569 = vmatprep.subr.mxu0 0.0
    %2570 = vmatpush1.msra.mxu0 %v234
    %2571 = vmatprep.subr.mxu0 0.0
    %2572 = vmatpush1.msra.mxu0 %v235
    %2573 = vmatprep.subr.mxu0 0.0
    %2574 = vmatpush1.msra.mxu0 %v236
    %2575 = vmatprep.subr.mxu0 0.0
    %2576 = vmatpush1.msra.mxu0 %v237
    %2577 = vmatprep.subr.mxu0 0.0
    %2578 = vmatpush1.msra.mxu0 %v238
    %2579 = vmatprep.subr.mxu0 0.0
    %2580 = vmatpush1.msra.mxu0 %v239
    %2581 = vmatprep.subr.mxu0 0.0
    %2582 = vmatpush1.msra.mxu0 %v240
    %2583 = vmatprep.subr.mxu0 0.0
    %2584 = vmatpush1.msra.mxu0 %v241
    %2585 = vmatprep.subr.mxu0 0.0
    %2586 = vmatpush1.msra.mxu0 %v242
    %2587 = vmatprep.subr.mxu0 0.0
    %2588 = vmatpush1.msra.mxu0 0.0
    %2589 = vmatprep.subr.mxu0 0.0
    %2590 = vmatpush1.msra.mxu0 0.0
    %2591 = vmatprep.subr.mxu0 0.0
    %2592 = vmatpush1.msra.mxu0 0.0
    %2593 = vmatprep.subr.mxu0 0.0
    %2594 = vmatpush1.msra.mxu0 0.0
    %2595 = vmatprep.subr.mxu0 0.0
    %2596 = vmatpush1.msra.mxu0 0.0
    %2597 = vmatprep.subr.mxu0 0.0
    %2598 = vmatpush1.msra.mxu0 0.0
    %2599 = vmatprep.subr.mxu0 0.0
    %2600 = vmatpush1.msra.mxu0 0.0
    %2601 = vmatprep.subr.mxu0 0.0
    %2602 = vmatpush1.msra.mxu0 0.0
    %2603 = vmatprep.subr.mxu0 0.0
    %2604 = vmatpush1.msra.mxu0 0.0
    %2605 = vmatprep.subr.mxu0 0.0
    %2606 = vmatpush1.msra.mxu0 0.0
    %2607 = vmatprep.subr.mxu0 0.0
    %2608 = vmatpush1.msra.mxu0 0.0
    %2609 = vmatprep.subr.mxu0 0.0
    %2610 = vmatpush1.msra.mxu0 0.0
    %2611 = vmatprep.subr.mxu0 0.0
    %2612 = vmatpush1.msra.mxu0 0.0
    %2613 = vmatprep.subr.mxu0 0.0
    %2614 = vmatpush1.msra.mxu0 0.0
    %2615 = vmatprep.subr.mxu0 0.0
    %2616 = vmatpush1.msra.mxu0 0.0
    %2617 = vmatprep.subr.mxu0 0.0
    %2618 = vmatpush1.msra.mxu0 0.0
    %2619 = vmatprep.mubr.f32.mxu0 0.0
    %2620 = vmatmul.mubr.f32.gmra.mrb[0].mxu0 %v2405
    %v2621 = vpop.f32.mrb[0].mxu0
    %v2622 = vadd.f32 0.0, %v2621
    %v2623 = vpop.f32.mrb[0].mxu0
    %2624 = vdwg.mxu0
    %v2625 = vadd.f32 %v2554, %v2622
    %v2626 = vtanh.pop %v2625
    %2627 = vmatprep.subr.mxu0 0.0
    %2628 = vmatpush1.msra.mxu0 %v259
    %2629 = vmatprep.subr.mxu0 0.0
    %2630 = vmatpush1.msra.mxu0 %v260
    %2631 = vmatprep.subr.mxu0 0.0
    %2632 = vmatpush1.msra.mxu0 %v261
    %2633 = vmatprep.subr.mxu0 0.0
    %2634 = vmatpush1.msra.mxu0 %v262
    %2635 = vmatprep.subr.mxu0 0.0
    %2636 = vmatpush1.msra.mxu0 %v263
    %2637 = vmatprep.subr.mxu0 0.0
    %2638 = vmatpush1.msra.mxu0 %v264
    %2639 = vmatprep.subr.mxu0 0.0
    %2640 = vmatpush1.msra.mxu0 %v265
    %2641 = vmatprep.subr.mxu0 0.0
    %2642 = vmatpush1.msra.mxu0 %v266
    %2643 = vmatprep.subr.mxu0 0.0
    %2644 = vmatpush1.msra.mxu0 %v267
    %2645 = vmatprep.subr.mxu0 0.0
    %2646 = vmatpush1.msra.mxu0 %v268
    %2647 = vmatprep.subr.mxu0 0.0
    %2648 = vmatpush1.msra.mxu0 %v269
    %2649 = vmatprep.subr.mxu0 0.0
    %2650 = vmatpush1.msra.mxu0 %v270
    %2651 = vmatprep.subr.mxu0 0.0
    %2652 = vmatpush1.msra.mxu0 %v271
    %2653 = vmatprep.subr.mxu0 0.0
    %2654 = vmatpush1.msra.mxu0 %v272
    %2655 = vmatprep.subr.mxu0 0.0
    %2656 = vmatpush1.msra.mxu0 %v273
    %2657 = vmatprep.subr.mxu0 0.0
    %2658 = vmatpush1.msra.mxu0 %v274
    %2659 = vmatprep.subr.mxu0 0.0
    %2660 = vmatpush1.msra.mxu0 0.0
    %2661 = vmatprep.subr.mxu0 0.0
    %2662 = vmatpush1.msra.mxu0 0.0
    %2663 = vmatprep.subr.mxu0 0.0
    %2664 = vmatpush1.msra.mxu0 0.0
    %2665 = vmatprep.subr.mxu0 0.0
    %2666 = vmatpush1.msra.mxu0 0.0
    %2667 = vmatprep.subr.mxu0 0.0
    %2668 = vmatpush1.msra.mxu0 0.0
    %2669 = vmatprep.subr.mxu0 0.0
    %2670 = vmatpush1.msra.mxu0 0.0
    %2671 = vmatprep.subr.mxu0 0.0
    %2672 = vmatpush1.msra.mxu0 0.0
    %2673 = vmatprep.subr.mxu0 0.0
    %2674 = vmatpush1.msra.mxu0 0.0
    %2675 = vmatprep.subr.mxu0 0.0
    %2676 = vmatpush1.msra.mxu0 0.0
    %2677 = vmatprep.subr.mxu0 0.0
    %2678 = vmatpush1.msra.mxu0 0.0
    %2679 = vmatprep.subr.mxu0 0.0
    %2680 = vmatpush1.msra.mxu0 0.0
    %2681 = vmatprep.subr.mxu0 0.0
    %2682 = vmatpush1.msra.mxu0 0.0
    %2683 = vmatprep.subr.mxu0 0.0
    %2684 = vmatpush1.msra.mxu0 0.0
    %2685 = vmatprep.subr.mxu0 0.0
    %2686 = vmatpush1.msra.mxu0 0.0
    %2687 = vmatprep.subr.mxu0 0.0
    %2688 = vmatpush1.msra.mxu0 0.0
    %2689 = vmatprep.subr.mxu0 0.0
    %2690 = vmatpush1.msra.mxu0 0.0
    %2691 = vmatprep.mubr.f32.mxu0 0.0
    %2692 = vmatmul.mubr.f32.gmra.mrb[0].mxu0 %v2547
    %v2693 = vpop.f32.mrb[0].mxu0
    %v2694 = vadd.f32 0.0, %v2693
    %v2695 = vpop.f32.mrb[0].mxu0
    %2696 = vdwg.mxu0
    %2697 = vmatprep.subr.mxu0 0.0
    %2698 = vmatpush1.msra.mxu0 %v243
    %2699 = vmatprep.subr.mxu0 0.0
    %2700 = vmatpush1.msra.mxu0 %v244
    %2701 = vmatprep.subr.mxu0 0.0
    %2702 = vmatpush1.msra.mxu0 %v245
    %2703 = vmatprep.subr.mxu0 0.0
    %2704 = vmatpush1.msra.mxu0 %v246
    %2705 = vmatprep.subr.mxu0 0.0
    %2706 = vmatpush1.msra.mxu0 %v247
    %2707 = vmatprep.subr.mxu0 0.0
    %2708 = vmatpush1.msra.mxu0 %v248
    %2709 = vmatprep.subr.mxu0 0.0
    %2710 = vmatpush1.msra.mxu0 %v249
    %2711 = vmatprep.subr.mxu0 0.0
    %2712 = vmatpush1.msra.mxu0 %v250
    %2713 = vmatprep.subr.mxu0 0.0
    %2714 = vmatpush1.msra.mxu0 %v251
    %2715 = vmatprep.subr.mxu0 0.0
    %2716 = vmatpush1.msra.mxu0 %v252
    %2717 = vmatprep.subr.mxu0 0.0
    %2718 = vmatpush1.msra.mxu0 %v253
    %2719 = vmatprep.subr.mxu0 0.0
    %2720 = vmatpush1.msra.mxu0 %v254
    %2721 = vmatprep.subr.mxu0 0.0
    %2722 = vmatpush1.msra.mxu0 %v255
    %2723 = vmatprep.subr.mxu0 0.0
    %2724 = vmatpush1.msra.mxu0 %v256
    %2725 = vmatprep.subr.mxu0 0.0
    %2726 = vmatpush1.msra.mxu0 %v257
    %2727 = vmatprep.subr.mxu0 0.0
    %2728 = vmatpush1.msra.mxu0 %v258
    %2729 = vmatprep.subr.mxu0 0.0
    %2730 = vmatpush1.msra.mxu0 0.0
    %2731 = vmatprep.subr.mxu0 0.0
    %2732 = vmatpush1.msra.mxu0 0.0
    %2733 = vmatprep.subr.mxu0 0.0
    %2734 = vmatpush1.msra.mxu0 0.0
    %2735 = vmatprep.subr.mxu0 0.0
    %2736 = vmatpush1.msra.mxu0 0.0
    %2737 = vmatprep.subr.mxu0 0.0
    %2738 = vmatpush1.msra.mxu0 0.0
    %2739 = vmatprep.subr.mxu0 0.0
    %2740 = vmatpush1.msra.mxu0 0.0
    %2741 = vmatprep.subr.mxu0 0.0
    %2742 = vmatpush1.msra.mxu0 0.0
    %2743 = vmatprep.subr.mxu0 0.0
    %2744 = vmatpush1.msra.mxu0 0.0
    %2745 = vmatprep.subr.mxu0 0.0
    %2746 = vmatpush1.msra.mxu0 0.0
    %2747 = vmatprep.subr.mxu0 0.0
    %2748 = vmatpush1.msra.mxu0 0.0
    %2749 = vmatprep.subr.mxu0 0.0
    %2750 = vmatpush1.msra.mxu0 0.0
    %2751 = vmatprep.subr.mxu0 0.0
    %2752 = vmatpush1.msra.mxu0 0.0
    %2753 = vmatprep.subr.mxu0 0.0
    %2754 = vmatpush1.msra.mxu0 0.0
    %2755 = vmatprep.subr.mxu0 0.0
    %2756 = vmatpush1.msra.mxu0 0.0
    %2757 = vmatprep.subr.mxu0 0.0
    %2758 = vmatpush1.msra.mxu0 0.0
    %2759 = vmatprep.subr.mxu0 0.0
    %2760 = vmatpush1.msra.mxu0 0.0
    %2761 = vmatprep.mubr.f32.mxu0 0.0
    %2762 = vmatmul.mubr.f32.gmra.mrb[0].mxu0 %v2626
    %v2763 = vpop.f32.mrb[0].mxu0
    %v2764 = vadd.f32 %v2694, %v2763
    %v2765 = vpop.f32.mrb[0].mxu0
    %2766 = vdwg.mxu0
    %v2767 = vadd.f32 %v2764, %v2323
    %v2768 = vtanh.pop %v2767
    %2769 = vst [vmem:[#allocation2 + $0x10] sm:$0xff] %v2768
    %2770 = vset.pattern.permute.xlu0 3
    %2771 = vperm.xlu0 %2770, %v173
    %v2772 = vpop.permute.xlu0 %2771
    %v2774 = vmul.f32 %v2772, %v2097
    %v2775 = vadd.f32 %v2774, %v2104
    %2776 = vmatprep.subr.mxu0 0.0
    %2777 = vmatpush1.msra.mxu0 %v227
    %2778 = vmatprep.subr.mxu0 0.0
    %2779 = vmatpush1.msra.mxu0 %v228
    %2780 = vmatprep.subr.mxu0 0.0
    %2781 = vmatpush1.msra.mxu0 %v229
    %2782 = vmatprep.subr.mxu0 0.0
    %2783 = vmatpush1.msra.mxu0 %v230
    %2784 = vmatprep.subr.mxu0 0.0
    %2785 = vmatpush1.msra.mxu0 %v231
    %2786 = vmatprep.subr.mxu0 0.0
    %2787 = vmatpush1.msra.mxu0 %v232
    %2788 = vmatprep.subr.mxu0 0.0
    %2789 = vmatpush1.msra.mxu0 %v233
    %2790 = vmatprep.subr.mxu0 0.0
    %2791 = vmatpush1.msra.mxu0 %v234
    %2792 = vmatprep.subr.mxu0 0.0
    %2793 = vmatpush1.msra.mxu0 %v235
    %2794 = vmatprep.subr.mxu0 0.0
    %2795 = vmatpush1.msra.mxu0 %v236
    %2796 = vmatprep.subr.mxu0 0.0
    %2797 = vmatpush1.msra.mxu0 %v237
    %2798 = vmatprep.subr.mxu0 0.0
    %2799 = vmatpush1.msra.mxu0 %v238
    %2800 = vmatprep.subr.mxu0 0.0
    %2801 = vmatpush1.msra.mxu0 %v239
    %2802 = vmatprep.subr.mxu0 0.0
    %2803 = vmatpush1.msra.mxu0 %v240
    %2804 = vmatprep.subr.mxu0 0.0
    %2805 = vmatpush1.msra.mxu0 %v241
    %2806 = vmatprep.subr.mxu0 0.0
    %2807 = vmatpush1.msra.mxu0 %v242
    %2808 = vmatprep.subr.mxu0 0.0
    %2809 = vmatpush1.msra.mxu0 0.0
    %2810 = vmatprep.subr.mxu0 0.0
    %2811 = vmatpush1.msra.mxu0 0.0
    %2812 = vmatprep.subr.mxu0 0.0
    %2813 = vmatpush1.msra.mxu0 0.0
    %2814 = vmatprep.subr.mxu0 0.0
    %2815 = vmatpush1.msra.mxu0 0.0
    %2816 = vmatprep.subr.mxu0 0.0
    %2817 = vmatpush1.msra.mxu0 0.0
    %2818 = vmatprep.subr.mxu0 0.0
    %2819 = vmatpush1.msra.mxu0 0.0
    %2820 = vmatprep.subr.mxu0 0.0
    %2821 = vmatpush1.msra.mxu0 0.0
    %2822 = vmatprep.subr.mxu0 0.0
    %2823 = vmatpush1.msra.mxu0 0.0
    %2824 = vmatprep.subr.mxu0 0.0
    %2825 = vmatpush1.msra.mxu0 0.0
    %2826 = vmatprep.subr.mxu0 0.0
    %2827 = vmatpush1.msra.mxu0 0.0
    %2828 = vmatprep.subr.mxu0 0.0
    %2829 = vmatpush1.msra.mxu0 0.0
    %2830 = vmatprep.subr.mxu0 0.0
    %2831 = vmatpush1.msra.mxu0 0.0
    %2832 = vmatprep.subr.mxu0 0.0
    %2833 = vmatpush1.msra.mxu0 0.0
    %2834 = vmatprep.subr.mxu0 0.0
    %2835 = vmatpush1.msra.mxu0 0.0
    %2836 = vmatprep.subr.mxu0 0.0
    %2837 = vmatpush1.msra.mxu0 0.0
    %2838 = vmatprep.subr.mxu0 0.0
    %2839 = vmatpush1.msra.mxu0 0.0
    %2840 = vmatprep.mubr.f32.mxu0 0.0
    %2841 = vmatmul.mubr.f32.gmra.mrb[0].mxu0 %v2626
    %v2842 = vpop.f32.mrb[0].mxu0
    %v2843 = vadd.f32 0.0, %v2842
    %v2844 = vpop.f32.mrb[0].mxu0
    %2845 = vdwg.mxu0
    %v2846 = vadd.f32 %v2775, %v2843
    %v2847 = vtanh.pop %v2846
    %2848 = vmatprep.subr.mxu0 0.0
    %2849 = vmatpush1.msra.mxu0 %v259
    %2850 = vmatprep.subr.mxu0 0.0
    %2851 = vmatpush1.msra.mxu0 %v260
    %2852 = vmatprep.subr.mxu0 0.0
    %2853 = vmatpush1.msra.mxu0 %v261
    %2854 = vmatprep.subr.mxu0 0.0
    %2855 = vmatpush1.msra.mxu0 %v262
    %2856 = vmatprep.subr.mxu0 0.0
    %2857 = vmatpush1.msra.mxu0 %v263
    %2858 = vmatprep.subr.mxu0 0.0
    %2859 = vmatpush1.msra.mxu0 %v264
    %2860 = vmatprep.subr.mxu0 0.0
    %2861 = vmatpush1.msra.mxu0 %v265
    %2862 = vmatprep.subr.mxu0 0.0
    %2863 = vmatpush1.msra.mxu0 %v266
    %2864 = vmatprep.subr.mxu0 0.0
    %2865 = vmatpush1.msra.mxu0 %v267
    %2866 = vmatprep.subr.mxu0 0.0
    %2867 = vmatpush1.msra.mxu0 %v268
    %2868 = vmatprep.subr.mxu0 0.0
    %2869 = vmatpush1.msra.mxu0 %v269
    %2870 = vmatprep.subr.mxu0 0.0
    %2871 = vmatpush1.msra.mxu0 %v270
    %2872 = vmatprep.subr.mxu0 0.0
    %2873 = vmatpush1.msra.mxu0 %v271
    %2874 = vmatprep.subr.mxu0 0.0
    %2875 = vmatpush1.msra.mxu0 %v272
    %2876 = vmatprep.subr.mxu0 0.0
    %2877 = vmatpush1.msra.mxu0 %v273
    %2878 = vmatprep.subr.mxu0 0.0
    %2879 = vmatpush1.msra.mxu0 %v274
    %2880 = vmatprep.subr.mxu0 0.0
    %2881 = vmatpush1.msra.mxu0 0.0
    %2882 = vmatprep.subr.mxu0 0.0
    %2883 = vmatpush1.msra.mxu0 0.0
    %2884 = vmatprep.subr.mxu0 0.0
    %2885 = vmatpush1.msra.mxu0 0.0
    %2886 = vmatprep.subr.mxu0 0.0
    %2887 = vmatpush1.msra.mxu0 0.0
    %2888 = vmatprep.subr.mxu0 0.0
    %2889 = vmatpush1.msra.mxu0 0.0
    %2890 = vmatprep.subr.mxu0 0.0
    %2891 = vmatpush1.msra.mxu0 0.0
    %2892 = vmatprep.subr.mxu0 0.0
    %2893 = vmatpush1.msra.mxu0 0.0
    %2894 = vmatprep.subr.mxu0 0.0
    %2895 = vmatpush1.msra.mxu0 0.0
    %2896 = vmatprep.subr.mxu0 0.0
    %2897 = vmatpush1.msra.mxu0 0.0
    %2898 = vmatprep.subr.mxu0 0.0
    %2899 = vmatpush1.msra.mxu0 0.0
    %2900 = vmatprep.subr.mxu0 0.0
    %2901 = vmatpush1.msra.mxu0 0.0
    %2902 = vmatprep.subr.mxu0 0.0
    %2903 = vmatpush1.msra.mxu0 0.0
    %2904 = vmatprep.subr.mxu0 0.0
    %2905 = vmatpush1.msra.mxu0 0.0
    %2906 = vmatprep.subr.mxu0 0.0
    %2907 = vmatpush1.msra.mxu0 0.0
    %2908 = vmatprep.subr.mxu0 0.0
    %2909 = vmatpush1.msra.mxu0 0.0
    %2910 = vmatprep.subr.mxu0 0.0
    %2911 = vmatpush1.msra.mxu0 0.0
    %2912 = vmatprep.mubr.f32.mxu0 0.0
    %2913 = vmatmul.mubr.f32.gmra.mrb[0].mxu0 %v2768
    %v2914 = vpop.f32.mrb[0].mxu0
    %v2915 = vadd.f32 0.0, %v2914
    %v2916 = vpop.f32.mrb[0].mxu0
    %2917 = vdwg.mxu0
    %2918 = vmatprep.subr.mxu0 0.0
    %2919 = vmatpush1.msra.mxu0 %v243
    %2920 = vmatprep.subr.mxu0 0.0
    %2921 = vmatpush1.msra.mxu0 %v244
    %2922 = vmatprep.subr.mxu0 0.0
    %2923 = vmatpush1.msra.mxu0 %v245
    %2924 = vmatprep.subr.mxu0 0.0
    %2925 = vmatpush1.msra.mxu0 %v246
    %2926 = vmatprep.subr.mxu0 0.0
    %2927 = vmatpush1.msra.mxu0 %v247
    %2928 = vmatprep.subr.mxu0 0.0
    %2929 = vmatpush1.msra.mxu0 %v248
    %2930 = vmatprep.subr.mxu0 0.0
    %2931 = vmatpush1.msra.mxu0 %v249
    %2932 = vmatprep.subr.mxu0 0.0
    %2933 = vmatpush1.msra.mxu0 %v250
    %2934 = vmatprep.subr.mxu0 0.0
    %2935 = vmatpush1.msra.mxu0 %v251
    %2936 = vmatprep.subr.mxu0 0.0
    %2937 = vmatpush1.msra.mxu0 %v252
    %2938 = vmatprep.subr.mxu0 0.0
    %2939 = vmatpush1.msra.mxu0 %v253
    %2940 = vmatprep.subr.mxu0 0.0
    %2941 = vmatpush1.msra.mxu0 %v254
    %2942 = vmatprep.subr.mxu0 0.0
    %2943 = vmatpush1.msra.mxu0 %v255
    %2944 = vmatprep.subr.mxu0 0.0
    %2945 = vmatpush1.msra.mxu0 %v256
    %2946 = vmatprep.subr.mxu0 0.0
    %2947 = vmatpush1.msra.mxu0 %v257
    %2948 = vmatprep.subr.mxu0 0.0
    %2949 = vmatpush1.msra.mxu0 %v258
    %2950 = vmatprep.subr.mxu0 0.0
    %2951 = vmatpush1.msra.mxu0 0.0
    %2952 = vmatprep.subr.mxu0 0.0
    %2953 = vmatpush1.msra.mxu0 0.0
    %2954 = vmatprep.subr.mxu0 0.0
    %2955 = vmatpush1.msra.mxu0 0.0
    %2956 = vmatprep.subr.mxu0 0.0
    %2957 = vmatpush1.msra.mxu0 0.0
    %2958 = vmatprep.subr.mxu0 0.0
    %2959 = vmatpush1.msra.mxu0 0.0
    %2960 = vmatprep.subr.mxu0 0.0
    %2961 = vmatpush1.msra.mxu0 0.0
    %2962 = vmatprep.subr.mxu0 0.0
    %2963 = vmatpush1.msra.mxu0 0.0
    %2964 = vmatprep.subr.mxu0 0.0
    %2965 = vmatpush1.msra.mxu0 0.0
    %2966 = vmatprep.subr.mxu0 0.0
    %2967 = vmatpush1.msra.mxu0 0.0
    %2968 = vmatprep.subr.mxu0 0.0
    %2969 = vmatpush1.msra.mxu0 0.0
    %2970 = vmatprep.subr.mxu0 0.0
    %2971 = vmatpush1.msra.mxu0 0.0
    %2972 = vmatprep.subr.mxu0 0.0
    %2973 = vmatpush1.msra.mxu0 0.0
    %2974 = vmatprep.subr.mxu0 0.0
    %2975 = vmatpush1.msra.mxu0 0.0
    %2976 = vmatprep.subr.mxu0 0.0
    %2977 = vmatpush1.msra.mxu0 0.0
    %2978 = vmatprep.subr.mxu0 0.0
    %2979 = vmatpush1.msra.mxu0 0.0
    %2980 = vmatprep.subr.mxu0 0.0
    %2981 = vmatpush1.msra.mxu0 0.0
    %2982 = vmatprep.mubr.f32.mxu0 0.0
    %2983 = vmatmul.mubr.f32.gmra.mrb[0].mxu0 %v2847
    %v2984 = vpop.f32.mrb[0].mxu0
    %v2985 = vadd.f32 %v2915, %v2984
    %v2986 = vpop.f32.mrb[0].mxu0
    %2987 = vdwg.mxu0
    %v2988 = vadd.f32 %v2985, %v2323
    %v2989 = vtanh.pop %v2988
    %2990 = vst [vmem:[#allocation2 + $0x18] sm:$0xff] %v2989
    %2991 = vset.pattern.permute.xlu0 4
    %2992 = vperm.xlu0 %2991, %v173
    %v2993 = vpop.permute.xlu0 %2992
    %v2995 = vmul.f32 %v2993, %v2097
    %v2996 = vadd.f32 %v2995, %v2104
    %2997 = vmatprep.subr.mxu0 0.0
    %2998 = vmatpush1.msra.mxu0 %v227
    %2999 = vmatprep.subr.mxu0 0.0
    %3000 = vmatpush1.msra.mxu0 %v228
    %3001 = vmatprep.subr.mxu0 0.0
    %3002 = vmatpush1.msra.mxu0 %v229
    %3003 = vmatprep.subr.mxu0 0.0
    %3004 = vmatpush1.msra.mxu0 %v230
    %3005 = vmatprep.subr.mxu0 0.0
    %3006 = vmatpush1.msra.mxu0 %v231
    %3007 = vmatprep.subr.mxu0 0.0
    %3008 = vmatpush1.msra.mxu0 %v232
    %3009 = vmatprep.subr.mxu0 0.0
    %3010 = vmatpush1.msra.mxu0 %v233
    %3011 = vmatprep.subr.mxu0 0.0
    %3012 = vmatpush1.msra.mxu0 %v234
    %3013 = vmatprep.subr.mxu0 0.0
    %3014 = vmatpush1.msra.mxu0 %v235
    %3015 = vmatprep.subr.mxu0 0.0
    %3016 = vmatpush1.msra.mxu0 %v236
    %3017 = vmatprep.subr.mxu0 0.0
    %3018 = vmatpush1.msra.mxu0 %v237
    %3019 = vmatprep.subr.mxu0 0.0
    %3020 = vmatpush1.msra.mxu0 %v238
    %3021 = vmatprep.subr.mxu0 0.0
    %3022 = vmatpush1.msra.mxu0 %v239
    %3023 = vmatprep.subr.mxu0 0.0
    %3024 = vmatpush1.msra.mxu0 %v240
    %3025 = vmatprep.subr.mxu0 0.0
    %3026 = vmatpush1.msra.mxu0 %v241
    %3027 = vmatprep.subr.mxu0 0.0
    %3028 = vmatpush1.msra.mxu0 %v242
    %3029 = vmatprep.subr.mxu0 0.0
    %3030 = vmatpush1.msra.mxu0 0.0
    %3031 = vmatprep.subr.mxu0 0.0
    %3032 = vmatpush1.msra.mxu0 0.0
    %3033 = vmatprep.subr.mxu0 0.0
    %3034 = vmatpush1.msra.mxu0 0.0
    %3035 = vmatprep.subr.mxu0 0.0
    %3036 = vmatpush1.msra.mxu0 0.0
    %3037 = vmatprep.subr.mxu0 0.0
    %3038 = vmatpush1.msra.mxu0 0.0
    %3039 = vmatprep.subr.mxu0 0.0
    %3040 = vmatpush1.msra.mxu0 0.0
    %3041 = vmatprep.subr.mxu0 0.0
    %3042 = vmatpush1.msra.mxu0 0.0
    %3043 = vmatprep.subr.mxu0 0.0
    %3044 = vmatpush1.msra.mxu0 0.0
    %3045 = vmatprep.subr.mxu0 0.0
    %3046 = vmatpush1.msra.mxu0 0.0
    %3047 = vmatprep.subr.mxu0 0.0
    %3048 = vmatpush1.msra.mxu0 0.0
    %3049 = vmatprep.subr.mxu0 0.0
    %3050 = vmatpush1.msra.mxu0 0.0
    %3051 = vmatprep.subr.mxu0 0.0
    %3052 = vmatpush1.msra.mxu0 0.0
    %3053 = vmatprep.subr.mxu0 0.0
    %3054 = vmatpush1.msra.mxu0 0.0
    %3055 = vmatprep.subr.mxu0 0.0
    %3056 = vmatpush1.msra.mxu0 0.0
    %3057 = vmatprep.subr.mxu0 0.0
    %3058 = vmatpush1.msra.mxu0 0.0
    %3059 = vmatprep.subr.mxu0 0.0
    %3060 = vmatpush1.msra.mxu0 0.0
    %3061 = vmatprep.mubr.f32.mxu0 0.0
    %3062 = vmatmul.mubr.f32.gmra.mrb[0].mxu0 %v2847
    %v3063 = vpop.f32.mrb[0].mxu0
    %v3064 = vadd.f32 0.0, %v3063
    %v3065 = vpop.f32.mrb[0].mxu0
    %3066 = vdwg.mxu0
    %v3067 = vadd.f32 %v2996, %v3064
    %v3068 = vtanh.pop %v3067
    %3069 = vmatprep.subr.mxu0 0.0
    %3070 = vmatpush1.msra.mxu0 %v259
    %3071 = vmatprep.subr.mxu0 0.0
    %3072 = vmatpush1.msra.mxu0 %v260
    %3073 = vmatprep.subr.mxu0 0.0
    %3074 = vmatpush1.msra.mxu0 %v261
    %3075 = vmatprep.subr.mxu0 0.0
    %3076 = vmatpush1.msra.mxu0 %v262
    %3077 = vmatprep.subr.mxu0 0.0
    %3078 = vmatpush1.msra.mxu0 %v263
    %3079 = vmatprep.subr.mxu0 0.0
    %3080 = vmatpush1.msra.mxu0 %v264
    %3081 = vmatprep.subr.mxu0 0.0
    %3082 = vmatpush1.msra.mxu0 %v265
    %3083 = vmatprep.subr.mxu0 0.0
    %3084 = vmatpush1.msra.mxu0 %v266
    %3085 = vmatprep.subr.mxu0 0.0
    %3086 = vmatpush1.msra.mxu0 %v267
    %3087 = vmatprep.subr.mxu0 0.0
    %3088 = vmatpush1.msra.mxu0 %v268
    %3089 = vmatprep.subr.mxu0 0.0
    %3090 = vmatpush1.msra.mxu0 %v269
    %3091 = vmatprep.subr.mxu0 0.0
    %3092 = vmatpush1.msra.mxu0 %v270
    %3093 = vmatprep.subr.mxu0 0.0
    %3094 = vmatpush1.msra.mxu0 %v271
    %3095 = vmatprep.subr.mxu0 0.0
    %3096 = vmatpush1.msra.mxu0 %v272
    %3097 = vmatprep.subr.mxu0 0.0
    %3098 = vmatpush1.msra.mxu0 %v273
    %3099 = vmatprep.subr.mxu0 0.0
    %3100 = vmatpush1.msra.mxu0 %v274
    %3101 = vmatprep.subr.mxu0 0.0
    %3102 = vmatpush1.msra.mxu0 0.0
    %3103 = vmatprep.subr.mxu0 0.0
    %3104 = vmatpush1.msra.mxu0 0.0
    %3105 = vmatprep.subr.mxu0 0.0
    %3106 = vmatpush1.msra.mxu0 0.0
    %3107 = vmatprep.subr.mxu0 0.0
    %3108 = vmatpush1.msra.mxu0 0.0
    %3109 = vmatprep.subr.mxu0 0.0
    %3110 = vmatpush1.msra.mxu0 0.0
    %3111 = vmatprep.subr.mxu0 0.0
    %3112 = vmatpush1.msra.mxu0 0.0
    %3113 = vmatprep.subr.mxu0 0.0
    %3114 = vmatpush1.msra.mxu0 0.0
    %3115 = vmatprep.subr.mxu0 0.0
    %3116 = vmatpush1.msra.mxu0 0.0
    %3117 = vmatprep.subr.mxu0 0.0
    %3118 = vmatpush1.msra.mxu0 0.0
    %3119 = vmatprep.subr.mxu0 0.0
    %3120 = vmatpush1.msra.mxu0 0.0
    %3121 = vmatprep.subr.mxu0 0.0
    %3122 = vmatpush1.msra.mxu0 0.0
    %3123 = vmatprep.subr.mxu0 0.0
    %3124 = vmatpush1.msra.mxu0 0.0
    %3125 = vmatprep.subr.mxu0 0.0
    %3126 = vmatpush1.msra.mxu0 0.0
    %3127 = vmatprep.subr.mxu0 0.0
    %3128 = vmatpush1.msra.mxu0 0.0
    %3129 = vmatprep.subr.mxu0 0.0
    %3130 = vmatpush1.msra.mxu0 0.0
    %3131 = vmatprep.subr.mxu0 0.0
    %3132 = vmatpush1.msra.mxu0 0.0
    %3133 = vmatprep.mubr.f32.mxu0 0.0
    %3134 = vmatmul.mubr.f32.gmra.mrb[0].mxu0 %v2989
    %v3135 = vpop.f32.mrb[0].mxu0
    %v3136 = vadd.f32 0.0, %v3135
    %v3137 = vpop.f32.mrb[0].mxu0
    %3138 = vdwg.mxu0
    %3139 = vmatprep.subr.mxu0 0.0
    %3140 = vmatpush1.msra.mxu0 %v243
    %3141 = vmatprep.subr.mxu0 0.0
    %3142 = vmatpush1.msra.mxu0 %v244
    %3143 = vmatprep.subr.mxu0 0.0
    %3144 = vmatpush1.msra.mxu0 %v245
    %3145 = vmatprep.subr.mxu0 0.0
    %3146 = vmatpush1.msra.mxu0 %v246
    %3147 = vmatprep.subr.mxu0 0.0
    %3148 = vmatpush1.msra.mxu0 %v247
    %3149 = vmatprep.subr.mxu0 0.0
    %3150 = vmatpush1.msra.mxu0 %v248
    %3151 = vmatprep.subr.mxu0 0.0
    %3152 = vmatpush1.msra.mxu0 %v249
    %3153 = vmatprep.subr.mxu0 0.0
    %3154 = vmatpush1.msra.mxu0 %v250
    %3155 = vmatprep.subr.mxu0 0.0
    %3156 = vmatpush1.msra.mxu0 %v251
    %3157 = vmatprep.subr.mxu0 0.0
    %3158 = vmatpush1.msra.mxu0 %v252
    %3159 = vmatprep.subr.mxu0 0.0
    %3160 = vmatpush1.msra.mxu0 %v253
    %3161 = vmatprep.subr.mxu0 0.0
    %3162 = vmatpush1.msra.mxu0 %v254
    %3163 = vmatprep.subr.mxu0 0.0
    %3164 = vmatpush1.msra.mxu0 %v255
    %3165 = vmatprep.subr.mxu0 0.0
    %3166 = vmatpush1.msra.mxu0 %v256
    %3167 = vmatprep.subr.mxu0 0.0
    %3168 = vmatpush1.msra.mxu0 %v257
    %3169 = vmatprep.subr.mxu0 0.0
    %3170 = vmatpush1.msra.mxu0 %v258
    %3171 = vmatprep.subr.mxu0 0.0
    %3172 = vmatpush1.msra.mxu0 0.0
    %3173 = vmatprep.subr.mxu0 0.0
    %3174 = vmatpush1.msra.mxu0 0.0
    %3175 = vmatprep.subr.mxu0 0.0
    %3176 = vmatpush1.msra.mxu0 0.0
    %3177 = vmatprep.subr.mxu0 0.0
    %3178 = vmatpush1.msra.mxu0 0.0
    %3179 = vmatprep.subr.mxu0 0.0
    %3180 = vmatpush1.msra.mxu0 0.0
    %3181 = vmatprep.subr.mxu0 0.0
    %3182 = vmatpush1.msra.mxu0 0.0
    %3183 = vmatprep.subr.mxu0 0.0
    %3184 = vmatpush1.msra.mxu0 0.0
    %3185 = vmatprep.subr.mxu0 0.0
    %3186 = vmatpush1.msra.mxu0 0.0
    %3187 = vmatprep.subr.mxu0 0.0
    %3188 = vmatpush1.msra.mxu0 0.0
    %3189 = vmatprep.subr.mxu0 0.0
    %3190 = vmatpush1.msra.mxu0 0.0
    %3191 = vmatprep.subr.mxu0 0.0
    %3192 = vmatpush1.msra.mxu0 0.0
    %3193 = vmatprep.subr.mxu0 0.0
    %3194 = vmatpush1.msra.mxu0 0.0
    %3195 = vmatprep.subr.mxu0 0.0
    %3196 = vmatpush1.msra.mxu0 0.0
    %3197 = vmatprep.subr.mxu0 0.0
    %3198 = vmatpush1.msra.mxu0 0.0
    %3199 = vmatprep.subr.mxu0 0.0
    %3200 = vmatpush1.msra.mxu0 0.0
    %3201 = vmatprep.subr.mxu0 0.0
    %3202 = vmatpush1.msra.mxu0 0.0
    %3203 = vmatprep.mubr.f32.mxu0 0.0
    %3204 = vmatmul.mubr.f32.gmra.mrb[0].mxu0 %v3068
    %v3205 = vpop.f32.mrb[0].mxu0
    %v3206 = vadd.f32 %v3136, %v3205
    %v3207 = vpop.f32.mrb[0].mxu0
    %3208 = vdwg.mxu0
    %v3209 = vadd.f32 %v3206, %v2323
    %v3210 = vtanh.pop %v3209
    %3211 = vst [vmem:[#allocation2 + $0x20] sm:$0xff] %v3210
    %3212 = vset.pattern.permute.xlu0 5
    %3213 = vperm.xlu0 %3212, %v173
    %v3214 = vpop.permute.xlu0 %3213
    %v3216 = vmul.f32 %v3214, %v2097
    %v3217 = vadd.f32 %v3216, %v2104
    %3218 = vmatprep.subr.mxu0 0.0
    %3219 = vmatpush1.msra.mxu0 %v227
    %3220 = vmatprep.subr.mxu0 0.0
    %3221 = vmatpush1.msra.mxu0 %v228
    %3222 = vmatprep.subr.mxu0 0.0
    %3223 = vmatpush1.msra.mxu0 %v229
    %3224 = vmatprep.subr.mxu0 0.0
    %3225 = vmatpush1.msra.mxu0 %v230
    %3226 = vmatprep.subr.mxu0 0.0
    %3227 = vmatpush1.msra.mxu0 %v231
    %3228 = vmatprep.subr.mxu0 0.0
    %3229 = vmatpush1.msra.mxu0 %v232
    %3230 = vmatprep.subr.mxu0 0.0
    %3231 = vmatpush1.msra.mxu0 %v233
    %3232 = vmatprep.subr.mxu0 0.0
    %3233 = vmatpush1.msra.mxu0 %v234
    %3234 = vmatprep.subr.mxu0 0.0
    %3235 = vmatpush1.msra.mxu0 %v235
    %3236 = vmatprep.subr.mxu0 0.0
    %3237 = vmatpush1.msra.mxu0 %v236
    %3238 = vmatprep.subr.mxu0 0.0
    %3239 = vmatpush1.msra.mxu0 %v237
    %3240 = vmatprep.subr.mxu0 0.0
    %3241 = vmatpush1.msra.mxu0 %v238
    %3242 = vmatprep.subr.mxu0 0.0
    %3243 = vmatpush1.msra.mxu0 %v239
    %3244 = vmatprep.subr.mxu0 0.0
    %3245 = vmatpush1.msra.mxu0 %v240
    %3246 = vmatprep.subr.mxu0 0.0
    %3247 = vmatpush1.msra.mxu0 %v241
    %3248 = vmatprep.subr.mxu0 0.0
    %3249 = vmatpush1.msra.mxu0 %v242
    %3250 = vmatprep.subr.mxu0 0.0
    %3251 = vmatpush1.msra.mxu0 0.0
    %3252 = vmatprep.subr.mxu0 0.0
    %3253 = vmatpush1.msra.mxu0 0.0
    %3254 = vmatprep.subr.mxu0 0.0
    %3255 = vmatpush1.msra.mxu0 0.0
    %3256 = vmatprep.subr.mxu0 0.0
    %3257 = vmatpush1.msra.mxu0 0.0
    %3258 = vmatprep.subr.mxu0 0.0
    %3259 = vmatpush1.msra.mxu0 0.0
    %3260 = vmatprep.subr.mxu0 0.0
    %3261 = vmatpush1.msra.mxu0 0.0
    %3262 = vmatprep.subr.mxu0 0.0
    %3263 = vmatpush1.msra.mxu0 0.0
    %3264 = vmatprep.subr.mxu0 0.0
    %3265 = vmatpush1.msra.mxu0 0.0
    %3266 = vmatprep.subr.mxu0 0.0
    %3267 = vmatpush1.msra.mxu0 0.0
    %3268 = vmatprep.subr.mxu0 0.0
    %3269 = vmatpush1.msra.mxu0 0.0
    %3270 = vmatprep.subr.mxu0 0.0
    %3271 = vmatpush1.msra.mxu0 0.0
    %3272 = vmatprep.subr.mxu0 0.0
    %3273 = vmatpush1.msra.mxu0 0.0
    %3274 = vmatprep.subr.mxu0 0.0
    %3275 = vmatpush1.msra.mxu0 0.0
    %3276 = vmatprep.subr.mxu0 0.0
    %3277 = vmatpush1.msra.mxu0 0.0
    %3278 = vmatprep.subr.mxu0 0.0
    %3279 = vmatpush1.msra.mxu0 0.0
    %3280 = vmatprep.subr.mxu0 0.0
    %3281 = vmatpush1.msra.mxu0 0.0
    %3282 = vmatprep.mubr.f32.mxu0 0.0
    %3283 = vmatmul.mubr.f32.gmra.mrb[0].mxu0 %v3068
    %v3284 = vpop.f32.mrb[0].mxu0
    %v3285 = vadd.f32 0.0, %v3284
    %v3286 = vpop.f32.mrb[0].mxu0
    %3287 = vdwg.mxu0
    %v3288 = vadd.f32 %v3217, %v3285
    %v3289 = vtanh.pop %v3288
    %3290 = vmatprep.subr.mxu0 0.0
    %3291 = vmatpush1.msra.mxu0 %v259
    %3292 = vmatprep.subr.mxu0 0.0
    %3293 = vmatpush1.msra.mxu0 %v260
    %3294 = vmatprep.subr.mxu0 0.0
    %3295 = vmatpush1.msra.mxu0 %v261
    %3296 = vmatprep.subr.mxu0 0.0
    %3297 = vmatpush1.msra.mxu0 %v262
    %3298 = vmatprep.subr.mxu0 0.0
    %3299 = vmatpush1.msra.mxu0 %v263
    %3300 = vmatprep.subr.mxu0 0.0
    %3301 = vmatpush1.msra.mxu0 %v264
    %3302 = vmatprep.subr.mxu0 0.0
    %3303 = vmatpush1.msra.mxu0 %v265
    %3304 = vmatprep.subr.mxu0 0.0
    %3305 = vmatpush1.msra.mxu0 %v266
    %3306 = vmatprep.subr.mxu0 0.0
    %3307 = vmatpush1.msra.mxu0 %v267
    %3308 = vmatprep.subr.mxu0 0.0
    %3309 = vmatpush1.msra.mxu0 %v268
    %3310 = vmatprep.subr.mxu0 0.0
    %3311 = vmatpush1.msra.mxu0 %v269
    %3312 = vmatprep.subr.mxu0 0.0
    %3313 = vmatpush1.msra.mxu0 %v270
    %3314 = vmatprep.subr.mxu0 0.0
    %3315 = vmatpush1.msra.mxu0 %v271
    %3316 = vmatprep.subr.mxu0 0.0
    %3317 = vmatpush1.msra.mxu0 %v272
    %3318 = vmatprep.subr.mxu0 0.0
    %3319 = vmatpush1.msra.mxu0 %v273
    %3320 = vmatprep.subr.mxu0 0.0
    %3321 = vmatpush1.msra.mxu0 %v274
    %3322 = vmatprep.subr.mxu0 0.0
    %3323 = vmatpush1.msra.mxu0 0.0
    %3324 = vmatprep.subr.mxu0 0.0
    %3325 = vmatpush1.msra.mxu0 0.0
    %3326 = vmatprep.subr.mxu0 0.0
    %3327 = vmatpush1.msra.mxu0 0.0
    %3328 = vmatprep.subr.mxu0 0.0
    %3329 = vmatpush1.msra.mxu0 0.0
    %3330 = vmatprep.subr.mxu0 0.0
    %3331 = vmatpush1.msra.mxu0 0.0
    %3332 = vmatprep.subr.mxu0 0.0
    %3333 = vmatpush1.msra.mxu0 0.0
    %3334 = vmatprep.subr.mxu0 0.0
    %3335 = vmatpush1.msra.mxu0 0.0
    %3336 = vmatprep.subr.mxu0 0.0
    %3337 = vmatpush1.msra.mxu0 0.0
    %3338 = vmatprep.subr.mxu0 0.0
    %3339 = vmatpush1.msra.mxu0 0.0
    %3340 = vmatprep.subr.mxu0 0.0
    %3341 = vmatpush1.msra.mxu0 0.0
    %3342 = vmatprep.subr.mxu0 0.0
    %3343 = vmatpush1.msra.mxu0 0.0
    %3344 = vmatprep.subr.mxu0 0.0
    %3345 = vmatpush1.msra.mxu0 0.0
    %3346 = vmatprep.subr.mxu0 0.0
    %3347 = vmatpush1.msra.mxu0 0.0
    %3348 = vmatprep.subr.mxu0 0.0
    %3349 = vmatpush1.msra.mxu0 0.0
    %3350 = vmatprep.subr.mxu0 0.0
    %3351 = vmatpush1.msra.mxu0 0.0
    %3352 = vmatprep.subr.mxu0 0.0
    %3353 = vmatpush1.msra.mxu0 0.0
    %3354 = vmatprep.mubr.f32.mxu0 0.0
    %3355 = vmatmul.mubr.f32.gmra.mrb[0].mxu0 %v3210
    %v3356 = vpop.f32.mrb[0].mxu0
    %v3357 = vadd.f32 0.0, %v3356
    %v3358 = vpop.f32.mrb[0].mxu0
    %3359 = vdwg.mxu0
    %3360 = vmatprep.subr.mxu0 0.0
    %3361 = vmatpush1.msra.mxu0 %v243
    %3362 = vmatprep.subr.mxu0 0.0
    %3363 = vmatpush1.msra.mxu0 %v244
    %3364 = vmatprep.subr.mxu0 0.0
    %3365 = vmatpush1.msra.mxu0 %v245
    %3366 = vmatprep.subr.mxu0 0.0
    %3367 = vmatpush1.msra.mxu0 %v246
    %3368 = vmatprep.subr.mxu0 0.0
    %3369 = vmatpush1.msra.mxu0 %v247
    %3370 = vmatprep.subr.mxu0 0.0
    %3371 = vmatpush1.msra.mxu0 %v248
    %3372 = vmatprep.subr.mxu0 0.0
    %3373 = vmatpush1.msra.mxu0 %v249
    %3374 = vmatprep.subr.mxu0 0.0
    %3375 = vmatpush1.msra.mxu0 %v250
    %3376 = vmatprep.subr.mxu0 0.0
    %3377 = vmatpush1.msra.mxu0 %v251
    %3378 = vmatprep.subr.mxu0 0.0
    %3379 = vmatpush1.msra.mxu0 %v252
    %3380 = vmatprep.subr.mxu0 0.0
    %3381 = vmatpush1.msra.mxu0 %v253
    %3382 = vmatprep.subr.mxu0 0.0
    %3383 = vmatpush1.msra.mxu0 %v254
    %3384 = vmatprep.subr.mxu0 0.0
    %3385 = vmatpush1.msra.mxu0 %v255
    %3386 = vmatprep.subr.mxu0 0.0
    %3387 = vmatpush1.msra.mxu0 %v256
    %3388 = vmatprep.subr.mxu0 0.0
    %3389 = vmatpush1.msra.mxu0 %v257
    %3390 = vmatprep.subr.mxu0 0.0
    %3391 = vmatpush1.msra.mxu0 %v258
    %3392 = vmatprep.subr.mxu0 0.0
    %3393 = vmatpush1.msra.mxu0 0.0
    %3394 = vmatprep.subr.mxu0 0.0
    %3395 = vmatpush1.msra.mxu0 0.0
    %3396 = vmatprep.subr.mxu0 0.0
    %3397 = vmatpush1.msra.mxu0 0.0
    %3398 = vmatprep.subr.mxu0 0.0
    %3399 = vmatpush1.msra.mxu0 0.0
    %3400 = vmatprep.subr.mxu0 0.0
    %3401 = vmatpush1.msra.mxu0 0.0
    %3402 = vmatprep.subr.mxu0 0.0
    %3403 = vmatpush1.msra.mxu0 0.0
    %3404 = vmatprep.subr.mxu0 0.0
    %3405 = vmatpush1.msra.mxu0 0.0
    %3406 = vmatprep.subr.mxu0 0.0
    %3407 = vmatpush1.msra.mxu0 0.0
    %3408 = vmatprep.subr.mxu0 0.0
    %3409 = vmatpush1.msra.mxu0 0.0
    %3410 = vmatprep.subr.mxu0 0.0
    %3411 = vmatpush1.msra.mxu0 0.0
    %3412 = vmatprep.subr.mxu0 0.0
    %3413 = vmatpush1.msra.mxu0 0.0
    %3414 = vmatprep.subr.mxu0 0.0
    %3415 = vmatpush1.msra.mxu0 0.0
    %3416 = vmatprep.subr.mxu0 0.0
    %3417 = vmatpush1.msra.mxu0 0.0
    %3418 = vmatprep.subr.mxu0 0.0
    %3419 = vmatpush1.msra.mxu0 0.0
    %3420 = vmatprep.subr.mxu0 0.0
    %3421 = vmatpush1.msra.mxu0 0.0
    %3422 = vmatprep.subr.mxu0 0.0
    %3423 = vmatpush1.msra.mxu0 0.0
    %3424 = vmatprep.mubr.f32.mxu0 0.0
    %3425 = vmatmul.mubr.f32.gmra.mrb[0].mxu0 %v3289
    %v3426 = vpop.f32.mrb[0].mxu0
    %v3427 = vadd.f32 %v3357, %v3426
    %v3428 = vpop.f32.mrb[0].mxu0
    %3429 = vdwg.mxu0
    %v3430 = vadd.f32 %v3427, %v2323
    %v3431 = vtanh.pop %v3430
    %3432 = vst [vmem:[#allocation2 + $0x28] sm:$0xff] %v3431
    %3433 = vset.pattern.permute.xlu0 6
    %3434 = vperm.xlu0 %3433, %v173
    %v3435 = vpop.permute.xlu0 %3434
    %v3437 = vmul.f32 %v3435, %v2097
    %v3438 = vadd.f32 %v3437, %v2104
    %3439 = vmatprep.subr.mxu0 0.0
    %3440 = vmatpush1.msra.mxu0 %v227
    %3441 = vmatprep.subr.mxu0 0.0
    %3442 = vmatpush1.msra.mxu0 %v228
    %3443 = vmatprep.subr.mxu0 0.0
    %3444 = vmatpush1.msra.mxu0 %v229
    %3445 = vmatprep.subr.mxu0 0.0
    %3446 = vmatpush1.msra.mxu0 %v230
    %3447 = vmatprep.subr.mxu0 0.0
    %3448 = vmatpush1.msra.mxu0 %v231
    %3449 = vmatprep.subr.mxu0 0.0
    %3450 = vmatpush1.msra.mxu0 %v232
    %3451 = vmatprep.subr.mxu0 0.0
    %3452 = vmatpush1.msra.mxu0 %v233
    %3453 = vmatprep.subr.mxu0 0.0
    %3454 = vmatpush1.msra.mxu0 %v234
    %3455 = vmatprep.subr.mxu0 0.0
    %3456 = vmatpush1.msra.mxu0 %v235
    %3457 = vmatprep.subr.mxu0 0.0
    %3458 = vmatpush1.msra.mxu0 %v236
    %3459 = vmatprep.subr.mxu0 0.0
    %3460 = vmatpush1.msra.mxu0 %v237
    %3461 = vmatprep.subr.mxu0 0.0
    %3462 = vmatpush1.msra.mxu0 %v238
    %3463 = vmatprep.subr.mxu0 0.0
    %3464 = vmatpush1.msra.mxu0 %v239
    %3465 = vmatprep.subr.mxu0 0.0
    %3466 = vmatpush1.msra.mxu0 %v240
    %3467 = vmatprep.subr.mxu0 0.0
    %3468 = vmatpush1.msra.mxu0 %v241
    %3469 = vmatprep.subr.mxu0 0.0
    %3470 = vmatpush1.msra.mxu0 %v242
    %3471 = vmatprep.subr.mxu0 0.0
    %3472 = vmatpush1.msra.mxu0 0.0
    %3473 = vmatprep.subr.mxu0 0.0
    %3474 = vmatpush1.msra.mxu0 0.0
    %3475 = vmatprep.subr.mxu0 0.0
    %3476 = vmatpush1.msra.mxu0 0.0
    %3477 = vmatprep.subr.mxu0 0.0
    %3478 = vmatpush1.msra.mxu0 0.0
    %3479 = vmatprep.subr.mxu0 0.0
    %3480 = vmatpush1.msra.mxu0 0.0
    %3481 = vmatprep.subr.mxu0 0.0
    %3482 = vmatpush1.msra.mxu0 0.0
    %3483 = vmatprep.subr.mxu0 0.0
    %3484 = vmatpush1.msra.mxu0 0.0
    %3485 = vmatprep.subr.mxu0 0.0
    %3486 = vmatpush1.msra.mxu0 0.0
    %3487 = vmatprep.subr.mxu0 0.0
    %3488 = vmatpush1.msra.mxu0 0.0
    %3489 = vmatprep.subr.mxu0 0.0
    %3490 = vmatpush1.msra.mxu0 0.0
    %3491 = vmatprep.subr.mxu0 0.0
    %3492 = vmatpush1.msra.mxu0 0.0
    %3493 = vmatprep.subr.mxu0 0.0
    %3494 = vmatpush1.msra.mxu0 0.0
    %3495 = vmatprep.subr.mxu0 0.0
    %3496 = vmatpush1.msra.mxu0 0.0
    %3497 = vmatprep.subr.mxu0 0.0
    %3498 = vmatpush1.msra.mxu0 0.0
    %3499 = vmatprep.subr.mxu0 0.0
    %3500 = vmatpush1.msra.mxu0 0.0
    %3501 = vmatprep.subr.mxu0 0.0
    %3502 = vmatpush1.msra.mxu0 0.0
    %3503 = vmatprep.mubr.f32.mxu0 0.0
    %3504 = vmatmul.mubr.f32.gmra.mrb[0].mxu0 %v3289
    %v3505 = vpop.f32.mrb[0].mxu0
    %v3506 = vadd.f32 0.0, %v3505
    %v3507 = vpop.f32.mrb[0].mxu0
    %3508 = vdwg.mxu0
    %v3509 = vadd.f32 %v3438, %v3506
    %v3510 = vtanh.pop %v3509
    %3511 = vmatprep.subr.mxu0 0.0
    %3512 = vmatpush1.msra.mxu0 %v259
    %3513 = vmatprep.subr.mxu0 0.0
    %3514 = vmatpush1.msra.mxu0 %v260
    %3515 = vmatprep.subr.mxu0 0.0
    %3516 = vmatpush1.msra.mxu0 %v261
    %3517 = vmatprep.subr.mxu0 0.0
    %3518 = vmatpush1.msra.mxu0 %v262
    %3519 = vmatprep.subr.mxu0 0.0
    %3520 = vmatpush1.msra.mxu0 %v263
    %3521 = vmatprep.subr.mxu0 0.0
    %3522 = vmatpush1.msra.mxu0 %v264
    %3523 = vmatprep.subr.mxu0 0.0
    %3524 = vmatpush1.msra.mxu0 %v265
    %3525 = vmatprep.subr.mxu0 0.0
    %3526 = vmatpush1.msra.mxu0 %v266
    %3527 = vmatprep.subr.mxu0 0.0
    %3528 = vmatpush1.msra.mxu0 %v267
    %3529 = vmatprep.subr.mxu0 0.0
    %3530 = vmatpush1.msra.mxu0 %v268
    %3531 = vmatprep.subr.mxu0 0.0
    %3532 = vmatpush1.msra.mxu0 %v269
    %3533 = vmatprep.subr.mxu0 0.0
    %3534 = vmatpush1.msra.mxu0 %v270
    %3535 = vmatprep.subr.mxu0 0.0
    %3536 = vmatpush1.msra.mxu0 %v271
    %3537 = vmatprep.subr.mxu0 0.0
    %3538 = vmatpush1.msra.mxu0 %v272
    %3539 = vmatprep.subr.mxu0 0.0
    %3540 = vmatpush1.msra.mxu0 %v273
    %3541 = vmatprep.subr.mxu0 0.0
    %3542 = vmatpush1.msra.mxu0 %v274
    %3543 = vmatprep.subr.mxu0 0.0
    %3544 = vmatpush1.msra.mxu0 0.0
    %3545 = vmatprep.subr.mxu0 0.0
    %3546 = vmatpush1.msra.mxu0 0.0
    %3547 = vmatprep.subr.mxu0 0.0
    %3548 = vmatpush1.msra.mxu0 0.0
    %3549 = vmatprep.subr.mxu0 0.0
    %3550 = vmatpush1.msra.mxu0 0.0
    %3551 = vmatprep.subr.mxu0 0.0
    %3552 = vmatpush1.msra.mxu0 0.0
    %3553 = vmatprep.subr.mxu0 0.0
    %3554 = vmatpush1.msra.mxu0 0.0
    %3555 = vmatprep.subr.mxu0 0.0
    %3556 = vmatpush1.msra.mxu0 0.0
    %3557 = vmatprep.subr.mxu0 0.0
    %3558 = vmatpush1.msra.mxu0 0.0
    %3559 = vmatprep.subr.mxu0 0.0
    %3560 = vmatpush1.msra.mxu0 0.0
    %3561 = vmatprep.subr.mxu0 0.0
    %3562 = vmatpush1.msra.mxu0 0.0
    %3563 = vmatprep.subr.mxu0 0.0
    %3564 = vmatpush1.msra.mxu0 0.0
    %3565 = vmatprep.subr.mxu0 0.0
    %3566 = vmatpush1.msra.mxu0 0.0
    %3567 = vmatprep.subr.mxu0 0.0
    %3568 = vmatpush1.msra.mxu0 0.0
    %3569 = vmatprep.subr.mxu0 0.0
    %3570 = vmatpush1.msra.mxu0 0.0
    %3571 = vmatprep.subr.mxu0 0.0
    %3572 = vmatpush1.msra.mxu0 0.0
    %3573 = vmatprep.subr.mxu0 0.0
    %3574 = vmatpush1.msra.mxu0 0.0
    %3575 = vmatprep.mubr.f32.mxu0 0.0
    %3576 = vmatmul.mubr.f32.gmra.mrb[0].mxu0 %v3431
    %v3577 = vpop.f32.mrb[0].mxu0
    %v3578 = vadd.f32 0.0, %v3577
    %v3579 = vpop.f32.mrb[0].mxu0
    %3580 = vdwg.mxu0
    %3581 = vmatprep.subr.mxu0 0.0
    %3582 = vmatpush1.msra.mxu0 %v243
    %3583 = vmatprep.subr.mxu0 0.0
    %3584 = vmatpush1.msra.mxu0 %v244
    %3585 = vmatprep.subr.mxu0 0.0
    %3586 = vmatpush1.msra.mxu0 %v245
    %3587 = vmatprep.subr.mxu0 0.0
    %3588 = vmatpush1.msra.mxu0 %v246
    %3589 = vmatprep.subr.mxu0 0.0
    %3590 = vmatpush1.msra.mxu0 %v247
    %3591 = vmatprep.subr.mxu0 0.0
    %3592 = vmatpush1.msra.mxu0 %v248
    %3593 = vmatprep.subr.mxu0 0.0
    %3594 = vmatpush1.msra.mxu0 %v249
    %3595 = vmatprep.subr.mxu0 0.0
    %3596 = vmatpush1.msra.mxu0 %v250
    %3597 = vmatprep.subr.mxu0 0.0
    %3598 = vmatpush1.msra.mxu0 %v251
    %3599 = vmatprep.subr.mxu0 0.0
    %3600 = vmatpush1.msra.mxu0 %v252
    %3601 = vmatprep.subr.mxu0 0.0
    %3602 = vmatpush1.msra.mxu0 %v253
    %3603 = vmatprep.subr.mxu0 0.0
    %3604 = vmatpush1.msra.mxu0 %v254
    %3605 = vmatprep.subr.mxu0 0.0
    %3606 = vmatpush1.msra.mxu0 %v255
    %3607 = vmatprep.subr.mxu0 0.0
    %3608 = vmatpush1.msra.mxu0 %v256
    %3609 = vmatprep.subr.mxu0 0.0
    %3610 = vmatpush1.msra.mxu0 %v257
    %3611 = vmatprep.subr.mxu0 0.0
    %3612 = vmatpush1.msra.mxu0 %v258
    %3613 = vmatprep.subr.mxu0 0.0
    %3614 = vmatpush1.msra.mxu0 0.0
    %3615 = vmatprep.subr.mxu0 0.0
    %3616 = vmatpush1.msra.mxu0 0.0
    %3617 = vmatprep.subr.mxu0 0.0
    %3618 = vmatpush1.msra.mxu0 0.0
    %3619 = vmatprep.subr.mxu0 0.0
    %3620 = vmatpush1.msra.mxu0 0.0
    %3621 = vmatprep.subr.mxu0 0.0
    %3622 = vmatpush1.msra.mxu0 0.0
    %3623 = vmatprep.subr.mxu0 0.0
    %3624 = vmatpush1.msra.mxu0 0.0
    %3625 = vmatprep.subr.mxu0 0.0
    %3626 = vmatpush1.msra.mxu0 0.0
    %3627 = vmatprep.subr.mxu0 0.0
    %3628 = vmatpush1.msra.mxu0 0.0
    %3629 = vmatprep.subr.mxu0 0.0
    %3630 = vmatpush1.msra.mxu0 0.0
    %3631 = vmatprep.subr.mxu0 0.0
    %3632 = vmatpush1.msra.mxu0 0.0
    %3633 = vmatprep.subr.mxu0 0.0
    %3634 = vmatpush1.msra.mxu0 0.0
    %3635 = vmatprep.subr.mxu0 0.0
    %3636 = vmatpush1.msra.mxu0 0.0
    %3637 = vmatprep.subr.mxu0 0.0
    %3638 = vmatpush1.msra.mxu0 0.0
    %3639 = vmatprep.subr.mxu0 0.0
    %3640 = vmatpush1.msra.mxu0 0.0
    %3641 = vmatprep.subr.mxu0 0.0
    %3642 = vmatpush1.msra.mxu0 0.0
    %3643 = vmatprep.subr.mxu0 0.0
    %3644 = vmatpush1.msra.mxu0 0.0
    %3645 = vmatprep.mubr.f32.mxu0 0.0
    %3646 = vmatmul.mubr.f32.gmra.mrb[0].mxu0 %v3510
    %v3647 = vpop.f32.mrb[0].mxu0
    %v3648 = vadd.f32 %v3578, %v3647
    %v3649 = vpop.f32.mrb[0].mxu0
    %3650 = vdwg.mxu0
    %v3651 = vadd.f32 %v3648, %v2323
    %v3652 = vtanh.pop %v3651
    %3653 = vst [vmem:[#allocation2 + $0x30] sm:$0xff] %v3652
    %3654 = vset.pattern.permute.xlu0 7
    %3655 = vperm.xlu0 %3654, %v173
    %v3656 = vpop.permute.xlu0 %3655
    %v3658 = vmul.f32 %v3656, %v2097
    %v3659 = vadd.f32 %v3658, %v2104
    %3660 = vmatprep.subr.mxu0 0.0
    %3661 = vmatpush1.msra.mxu0 %v227
    %3662 = vmatprep.subr.mxu0 0.0
    %3663 = vmatpush1.msra.mxu0 %v228
    %3664 = vmatprep.subr.mxu0 0.0
    %3665 = vmatpush1.msra.mxu0 %v229
    %3666 = vmatprep.subr.mxu0 0.0
    %3667 = vmatpush1.msra.mxu0 %v230
    %3668 = vmatprep.subr.mxu0 0.0
    %3669 = vmatpush1.msra.mxu0 %v231
    %3670 = vmatprep.subr.mxu0 0.0
    %3671 = vmatpush1.msra.mxu0 %v232
    %3672 = vmatprep.subr.mxu0 0.0
    %3673 = vmatpush1.msra.mxu0 %v233
    %3674 = vmatprep.subr.mxu0 0.0
    %3675 = vmatpush1.msra.mxu0 %v234
    %3676 = vmatprep.subr.mxu0 0.0
    %3677 = vmatpush1.msra.mxu0 %v235
    %3678 = vmatprep.subr.mxu0 0.0
    %3679 = vmatpush1.msra.mxu0 %v236
    %3680 = vmatprep.subr.mxu0 0.0
    %3681 = vmatpush1.msra.mxu0 %v237
    %3682 = vmatprep.subr.mxu0 0.0
    %3683 = vmatpush1.msra.mxu0 %v238
    %3684 = vmatprep.subr.mxu0 0.0
    %3685 = vmatpush1.msra.mxu0 %v239
    %3686 = vmatprep.subr.mxu0 0.0
    %3687 = vmatpush1.msra.mxu0 %v240
    %3688 = vmatprep.subr.mxu0 0.0
    %3689 = vmatpush1.msra.mxu0 %v241
    %3690 = vmatprep.subr.mxu0 0.0
    %3691 = vmatpush1.msra.mxu0 %v242
    %3692 = vmatprep.subr.mxu0 0.0
    %3693 = vmatpush1.msra.mxu0 0.0
    %3694 = vmatprep.subr.mxu0 0.0
    %3695 = vmatpush1.msra.mxu0 0.0
    %3696 = vmatprep.subr.mxu0 0.0
    %3697 = vmatpush1.msra.mxu0 0.0
    %3698 = vmatprep.subr.mxu0 0.0
    %3699 = vmatpush1.msra.mxu0 0.0
    %3700 = vmatprep.subr.mxu0 0.0
    %3701 = vmatpush1.msra.mxu0 0.0
    %3702 = vmatprep.subr.mxu0 0.0
    %3703 = vmatpush1.msra.mxu0 0.0
    %3704 = vmatprep.subr.mxu0 0.0
    %3705 = vmatpush1.msra.mxu0 0.0
    %3706 = vmatprep.subr.mxu0 0.0
    %3707 = vmatpush1.msra.mxu0 0.0
    %3708 = vmatprep.subr.mxu0 0.0
    %3709 = vmatpush1.msra.mxu0 0.0
    %3710 = vmatprep.subr.mxu0 0.0
    %3711 = vmatpush1.msra.mxu0 0.0
    %3712 = vmatprep.subr.mxu0 0.0
    %3713 = vmatpush1.msra.mxu0 0.0
    %3714 = vmatprep.subr.mxu0 0.0
    %3715 = vmatpush1.msra.mxu0 0.0
    %3716 = vmatprep.subr.mxu0 0.0
    %3717 = vmatpush1.msra.mxu0 0.0
    %3718 = vmatprep.subr.mxu0 0.0
    %3719 = vmatpush1.msra.mxu0 0.0
    %3720 = vmatprep.subr.mxu0 0.0
    %3721 = vmatpush1.msra.mxu0 0.0
    %3722 = vmatprep.subr.mxu0 0.0
    %3723 = vmatpush1.msra.mxu0 0.0
    %3724 = vmatprep.mubr.f32.mxu0 0.0
    %3725 = vmatmul.mubr.f32.gmra.mrb[0].mxu0 %v3510
    %v3726 = vpop.f32.mrb[0].mxu0
    %v3727 = vadd.f32 0.0, %v3726
    %v3728 = vpop.f32.mrb[0].mxu0
    %3729 = vdwg.mxu0
    %v3730 = vadd.f32 %v3659, %v3727
    %v3731 = vtanh.pop %v3730
    %3732 = vmatprep.subr.mxu0 0.0
    %3733 = vmatpush1.msra.mxu0 %v259
    %3734 = vmatprep.subr.mxu0 0.0
    %3735 = vmatpush1.msra.mxu0 %v260
    %3736 = vmatprep.subr.mxu0 0.0
    %3737 = vmatpush1.msra.mxu0 %v261
    %3738 = vmatprep.subr.mxu0 0.0
    %3739 = vmatpush1.msra.mxu0 %v262
    %3740 = vmatprep.subr.mxu0 0.0
    %3741 = vmatpush1.msra.mxu0 %v263
    %3742 = vmatprep.subr.mxu0 0.0
    %3743 = vmatpush1.msra.mxu0 %v264
    %3744 = vmatprep.subr.mxu0 0.0
    %3745 = vmatpush1.msra.mxu0 %v265
    %3746 = vmatprep.subr.mxu0 0.0
    %3747 = vmatpush1.msra.mxu0 %v266
    %3748 = vmatprep.subr.mxu0 0.0
    %3749 = vmatpush1.msra.mxu0 %v267
    %3750 = vmatprep.subr.mxu0 0.0
    %3751 = vmatpush1.msra.mxu0 %v268
    %3752 = vmatprep.subr.mxu0 0.0
    %3753 = vmatpush1.msra.mxu0 %v269
    %3754 = vmatprep.subr.mxu0 0.0
    %3755 = vmatpush1.msra.mxu0 %v270
    %3756 = vmatprep.subr.mxu0 0.0
    %3757 = vmatpush1.msra.mxu0 %v271
    %3758 = vmatprep.subr.mxu0 0.0
    %3759 = vmatpush1.msra.mxu0 %v272
    %3760 = vmatprep.subr.mxu0 0.0
    %3761 = vmatpush1.msra.mxu0 %v273
    %3762 = vmatprep.subr.mxu0 0.0
    %3763 = vmatpush1.msra.mxu0 %v274
    %3764 = vmatprep.subr.mxu0 0.0
    %3765 = vmatpush1.msra.mxu0 0.0
    %3766 = vmatprep.subr.mxu0 0.0
    %3767 = vmatpush1.msra.mxu0 0.0
    %3768 = vmatprep.subr.mxu0 0.0
    %3769 = vmatpush1.msra.mxu0 0.0
    %3770 = vmatprep.subr.mxu0 0.0
    %3771 = vmatpush1.msra.mxu0 0.0
    %3772 = vmatprep.subr.mxu0 0.0
    %3773 = vmatpush1.msra.mxu0 0.0
    %3774 = vmatprep.subr.mxu0 0.0
    %3775 = vmatpush1.msra.mxu0 0.0
    %3776 = vmatprep.subr.mxu0 0.0
    %3777 = vmatpush1.msra.mxu0 0.0
    %3778 = vmatprep.subr.mxu0 0.0
    %3779 = vmatpush1.msra.mxu0 0.0
    %3780 = vmatprep.subr.mxu0 0.0
    %3781 = vmatpush1.msra.mxu0 0.0
    %3782 = vmatprep.subr.mxu0 0.0
    %3783 = vmatpush1.msra.mxu0 0.0
    %3784 = vmatprep.subr.mxu0 0.0
    %3785 = vmatpush1.msra.mxu0 0.0
    %3786 = vmatprep.subr.mxu0 0.0
    %3787 = vmatpush1.msra.mxu0 0.0
    %3788 = vmatprep.subr.mxu0 0.0
    %3789 = vmatpush1.msra.mxu0 0.0
    %3790 = vmatprep.subr.mxu0 0.0
    %3791 = vmatpush1.msra.mxu0 0.0
    %3792 = vmatprep.subr.mxu0 0.0
    %3793 = vmatpush1.msra.mxu0 0.0
    %3794 = vmatprep.subr.mxu0 0.0
    %3795 = vmatpush1.msra.mxu0 0.0
    %3796 = vmatprep.mubr.f32.mxu0 0.0
    %3797 = vmatmul.mubr.f32.gmra.mrb[0].mxu0 %v3652
    %v3798 = vpop.f32.mrb[0].mxu0
    %v3799 = vadd.f32 0.0, %v3798
    %v3800 = vpop.f32.mrb[0].mxu0
    %3801 = vdwg.mxu0
    %3802 = vmatprep.subr.mxu0 0.0
    %3803 = vmatpush1.msra.mxu0 %v243
    %3804 = vmatprep.subr.mxu0 0.0
    %3805 = vmatpush1.msra.mxu0 %v244
    %3806 = vmatprep.subr.mxu0 0.0
    %3807 = vmatpush1.msra.mxu0 %v245
    %3808 = vmatprep.subr.mxu0 0.0
    %3809 = vmatpush1.msra.mxu0 %v246
    %3810 = vmatprep.subr.mxu0 0.0
    %3811 = vmatpush1.msra.mxu0 %v247
    %3812 = vmatprep.subr.mxu0 0.0
    %3813 = vmatpush1.msra.mxu0 %v248
    %3814 = vmatprep.subr.mxu0 0.0
    %3815 = vmatpush1.msra.mxu0 %v249
    %3816 = vmatprep.subr.mxu0 0.0
    %3817 = vmatpush1.msra.mxu0 %v250
    %3818 = vmatprep.subr.mxu0 0.0
    %3819 = vmatpush1.msra.mxu0 %v251
    %3820 = vmatprep.subr.mxu0 0.0
    %3821 = vmatpush1.msra.mxu0 %v252
    %3822 = vmatprep.subr.mxu0 0.0
    %3823 = vmatpush1.msra.mxu0 %v253
    %3824 = vmatprep.subr.mxu0 0.0
    %3825 = vmatpush1.msra.mxu0 %v254
    %3826 = vmatprep.subr.mxu0 0.0
    %3827 = vmatpush1.msra.mxu0 %v255
    %3828 = vmatprep.subr.mxu0 0.0
    %3829 = vmatpush1.msra.mxu0 %v256
    %3830 = vmatprep.subr.mxu0 0.0
    %3831 = vmatpush1.msra.mxu0 %v257
    %3832 = vmatprep.subr.mxu0 0.0
    %3833 = vmatpush1.msra.mxu0 %v258
    %3834 = vmatprep.subr.mxu0 0.0
    %3835 = vmatpush1.msra.mxu0 0.0
    %3836 = vmatprep.subr.mxu0 0.0
    %3837 = vmatpush1.msra.mxu0 0.0
    %3838 = vmatprep.subr.mxu0 0.0
    %3839 = vmatpush1.msra.mxu0 0.0
    %3840 = vmatprep.subr.mxu0 0.0
    %3841 = vmatpush1.msra.mxu0 0.0
    %3842 = vmatprep.subr.mxu0 0.0
    %3843 = vmatpush1.msra.mxu0 0.0
    %3844 = vmatprep.subr.mxu0 0.0
    %3845 = vmatpush1.msra.mxu0 0.0
    %3846 = vmatprep.subr.mxu0 0.0
    %3847 = vmatpush1.msra.mxu0 0.0
    %3848 = vmatprep.subr.mxu0 0.0
    %3849 = vmatpush1.msra.mxu0 0.0
    %3850 = vmatprep.subr.mxu0 0.0
    %3851 = vmatpush1.msra.mxu0 0.0
    %3852 = vmatprep.subr.mxu0 0.0
    %3853 = vmatpush1.msra.mxu0 0.0
    %3854 = vmatprep.subr.mxu0 0.0
    %3855 = vmatpush1.msra.mxu0 0.0
    %3856 = vmatprep.subr.mxu0 0.0
    %3857 = vmatpush1.msra.mxu0 0.0
    %3858 = vmatprep.subr.mxu0 0.0
    %3859 = vmatpush1.msra.mxu0 0.0
    %3860 = vmatprep.subr.mxu0 0.0
    %3861 = vmatpush1.msra.mxu0 0.0
    %3862 = vmatprep.subr.mxu0 0.0
    %3863 = vmatpush1.msra.mxu0 0.0
    %3864 = vmatprep.subr.mxu0 0.0
    %3865 = vmatpush1.msra.mxu0 0.0
    %3866 = vmatprep.mubr.f32.mxu0 0.0
    %3867 = vmatmul.mubr.f32.gmra.mrb[0].mxu0 %v3731
    %v3868 = vpop.f32.mrb[0].mxu0
    %v3869 = vadd.f32 %v3799, %v3868
    %v3870 = vpop.f32.mrb[0].mxu0
    %3871 = vdwg.mxu0
    %v3872 = vadd.f32 %v3869, %v2323
    %v3873 = vtanh.pop %v3872
    %3874 = vst [vmem:[#allocation2 + $0x38] sm:$0xff] %v3873
    %v3875 = vld [vmem:[#allocation2] sm:$0xff]
    %v3876 = vld [vmem:[#allocation2 + $0x8] sm:$0xff]
    %v3877 = vld [vmem:[#allocation2 + $0x10] sm:$0xff]
    %v3878 = vld [vmem:[#allocation2 + $0x18] sm:$0xff]
    %v3879 = vld [vmem:[#allocation2 + $0x20] sm:$0xff]
    %v3880 = vld [vmem:[#allocation2 + $0x28] sm:$0xff]
    %v3881 = vld [vmem:[#allocation2 + $0x30] sm:$0xff]
    %v3882 = vld [vmem:[#allocation2 + $0x38] sm:$0xff]
    %v3884 = vlaneseq
    %v3885 = vshrl.u32 %v3884, 7
    %v3886 = vsub.s32 0, %v3885
    %v3887 = vrot.slane %v308, %v3886
    %v3888 = vlaneseq
    %v3889 = vshrl.u32 %v3888, 7
    %v3890 = vsub.s32 1, %v3889
    %v3891 = vrot.slane %v308, %v3890
    %3894 = vmatprep.subr.mxu0 %v277
    %3895 = vmatpush1.msra.mxu0 %v276
    %3896 = vmatprep.subr.mxu0 %v279
    %3897 = vmatpush1.msra.mxu0 %v278
    %3898 = vmatprep.subr.mxu0 %v281
    %3899 = vmatpush1.msra.mxu0 %v280
    %3900 = vmatprep.subr.mxu0 %v283
    %3901 = vmatpush1.msra.mxu0 %v282
    %3902 = vmatprep.subr.mxu0 %v285
    %3903 = vmatpush1.msra.mxu0 %v284
    %3904 = vmatprep.subr.mxu0 %v287
    %3905 = vmatpush1.msra.mxu0 %v286
    %3906 = vmatprep.subr.mxu0 %v289
    %3907 = vmatpush1.msra.mxu0 %v288
    %3908 = vmatprep.subr.mxu0 %v291
    %3909 = vmatpush1.msra.mxu0 %v290
    %3910 = vmatprep.subr.mxu0 %v293
    %3911 = vmatpush1.msra.mxu0 %v292
    %3912 = vmatprep.subr.mxu0 %v295
    %3913 = vmatpush1.msra.mxu0 %v294
    %3914 = vmatprep.subr.mxu0 %v297
    %3915 = vmatpush1.msra.mxu0 %v296
    %3916 = vmatprep.subr.mxu0 %v299
    %3917 = vmatpush1.msra.mxu0 %v298
    %3918 = vmatprep.subr.mxu0 %v301
    %3919 = vmatpush1.msra.mxu0 %v300
    %3920 = vmatprep.subr.mxu0 %v303
    %3921 = vmatpush1.msra.mxu0 %v302
    %3922 = vmatprep.subr.mxu0 %v305
    %3923 = vmatpush1.msra.mxu0 %v304
    %3924 = vmatprep.subr.mxu0 %v307
    %3925 = vmatpush1.msra.mxu0 %v306
    %3926 = vmatprep.subr.mxu0 0.0
    %3927 = vmatpush1.msra.mxu0 0.0
    %3928 = vmatprep.subr.mxu0 0.0
    %3929 = vmatpush1.msra.mxu0 0.0
    %3930 = vmatprep.subr.mxu0 0.0
    %3931 = vmatpush1.msra.mxu0 0.0
    %3932 = vmatprep.subr.mxu0 0.0
    %3933 = vmatpush1.msra.mxu0 0.0
    %3934 = vmatprep.subr.mxu0 0.0
    %3935 = vmatpush1.msra.mxu0 0.0
    %3936 = vmatprep.subr.mxu0 0.0
    %3937 = vmatpush1.msra.mxu0 0.0
    %3938 = vmatprep.subr.mxu0 0.0
    %3939 = vmatpush1.msra.mxu0 0.0
    %3940 = vmatprep.subr.mxu0 0.0
    %3941 = vmatpush1.msra.mxu0 0.0
    %3942 = vmatprep.subr.mxu0 0.0
    %3943 = vmatpush1.msra.mxu0 0.0
    %3944 = vmatprep.subr.mxu0 0.0
    %3945 = vmatpush1.msra.mxu0 0.0
    %3946 = vmatprep.subr.mxu0 0.0
    %3947 = vmatpush1.msra.mxu0 0.0
    %3948 = vmatprep.subr.mxu0 0.0
    %3949 = vmatpush1.msra.mxu0 0.0
    %3950 = vmatprep.subr.mxu0 0.0
    %3951 = vmatpush1.msra.mxu0 0.0
    %3952 = vmatprep.subr.mxu0 0.0
    %3953 = vmatpush1.msra.mxu0 0.0
    %3954 = vmatprep.subr.mxu0 0.0
    %3955 = vmatpush1.msra.mxu0 0.0
    %3956 = vmatprep.subr.mxu0 0.0
    %3957 = vmatpush1.msra.mxu0 0.0
    %3958 = vmatprep.mubr.f32.mxu0 0.0
    %3959 = vmatmul.mubr.f32.gmra.mrb[0].mxu0 %v3875
    %v3960 = vpop.f32.mrb[0].mxu0
    %v3961 = vadd.f32 %v3887, %v3960
    %v3962 = vpop.f32.mrb[0].mxu0
    %v3963 = vadd.f32 %v3891, %v3962
    %3964 = vmatprep.mubr.f32.mxu0 0.0
    %3965 = vmatmul.mubr.f32.gmra.mrb[0].mxu0 %v3876
    %v3966 = vpop.f32.mrb[0].mxu0
    %v3967 = vadd.f32 %v3887, %v3966
    %v3968 = vpop.f32.mrb[0].mxu0
    %v3969 = vadd.f32 %v3891, %v3968
    %3970 = vmatprep.mubr.f32.mxu0 0.0
    %3971 = vmatmul.mubr.f32.gmra.mrb[0].mxu0 %v3877
    %v3972 = vpop.f32.mrb[0].mxu0
    %v3973 = vadd.f32 %v3887, %v3972
    %v3974 = vpop.f32.mrb[0].mxu0
    %v3975 = vadd.f32 %v3891, %v3974
    %3976 = vmatprep.mubr.f32.mxu0 0.0
    %3977 = vmatmul.mubr.f32.gmra.mrb[0].mxu0 %v3878
    %v3978 = vpop.f32.mrb[0].mxu0
    %v3979 = vadd.f32 %v3887, %v3978
    %v3980 = vpop.f32.mrb[0].mxu0
    %v3981 = vadd.f32 %v3891, %v3980
    %3982 = vmatprep.mubr.f32.mxu0 0.0
    %3983 = vmatmul.mubr.f32.gmra.mrb[0].mxu0 %v3879
    %v3984 = vpop.f32.mrb[0].mxu0
    %v3985 = vadd.f32 %v3887, %v3984
    %v3986 = vpop.f32.mrb[0].mxu0
    %v3987 = vadd.f32 %v3891, %v3986
    %3988 = vmatprep.mubr.f32.mxu0 0.0
    %3989 = vmatmul.mubr.f32.gmra.mrb[0].mxu0 %v3880
    %v3990 = vpop.f32.mrb[0].mxu0
    %v3991 = vadd.f32 %v3887, %v3990
    %v3992 = vpop.f32.mrb[0].mxu0
    %v3993 = vadd.f32 %v3891, %v3992
    %3994 = vmatprep.mubr.f32.mxu0 0.0
    %3995 = vmatmul.mubr.f32.gmra.mrb[0].mxu0 %v3881
    %v3996 = vpop.f32.mrb[0].mxu0
    %v3997 = vadd.f32 %v3887, %v3996
    %v3998 = vpop.f32.mrb[0].mxu0
    %v3999 = vadd.f32 %v3891, %v3998
    %4000 = vmatprep.mubr.f32.mxu0 0.0
    %4001 = vmatmul.mubr.f32.gmra.mrb[0].mxu0 %v3882
    %v4002 = vpop.f32.mrb[0].mxu0
    %v4003 = vadd.f32 %v3887, %v4002
    %v4004 = vpop.f32.mrb[0].mxu0
    %v4005 = vadd.f32 %v3891, %v4004
    %4006 = vdwg.mxu0
    %4007 = vst [vmem:[#allocation18] sm:$0xff] %v3961
    %4008 = vst [vmem:[#allocation18 + $0x8] sm:$0xff] %v3963
    %4009 = vst [vmem:[#allocation18 + $0x10] sm:$0xff] %v3967
    %4010 = vst [vmem:[#allocation18 + $0x18] sm:$0xff] %v3969
    %4011 = vst [vmem:[#allocation18 + $0x20] sm:$0xff] %v3973
    %4012 = vst [vmem:[#allocation18 + $0x28] sm:$0xff] %v3975
    %4013 = vst [vmem:[#allocation18 + $0x30] sm:$0xff] %v3979
    %4014 = vst [vmem:[#allocation18 + $0x38] sm:$0xff] %v3981
    %4015 = vst [vmem:[#allocation18 + $0x40] sm:$0xff] %v3985
    %4016 = vst [vmem:[#allocation18 + $0x48] sm:$0xff] %v3987
    %4017 = vst [vmem:[#allocation18 + $0x50] sm:$0xff] %v3991
    %4018 = vst [vmem:[#allocation18 + $0x58] sm:$0xff] %v3993
    %4019 = vst [vmem:[#allocation18 + $0x60] sm:$0xff] %v3997
    %4020 = vst [vmem:[#allocation18 + $0x68] sm:$0xff] %v3999
    %4021 = vst [vmem:[#allocation18 + $0x70] sm:$0xff] %v4003
    %4022 = vst [vmem:[#allocation18 + $0x78] sm:$0xff] %v4005
    // Predicated region
    $region102: #{tpu_custom_call.1} parent=1 // pred_check
      _
    $region103: #{tpu_custom_call.1} parent=1 // pred_check_branch
      %4024 = sbr.rel (0) target = $region105
    $region104: #{tpu_custom_call.1} parent=1 // pred_region
      %s4026 = ssub.s32 2048, 2048
      %4027 = vsyncadd [#allocation5], %s4026
      %s4028 = sshll.u32 [#allocation18], 4
      %s4029 = int_to_ptr.vmem [resolvable:$true] %s4028
      %4034 = dma.vmem_to_hbm [thread:$0]  %s4029, 2048, %s16, [#allocation5], 256, 256, 16
    $region105: #{tpu_custom_call.1} parent=1 // pred_fallthru
      _
    // Predicated region
    $region106: #{tpu_custom_call.1} parent=1 // pred_check
      _
    $region107: #{tpu_custom_call.1} parent=1 // pred_check_branch
      %4036 = sbr.rel (0) target = $region109
    $region108: #{tpu_custom_call.1} parent=1 // pred_region
      %4037 = dma.done [#allocation5], 2048
    $region109: #{tpu_custom_call.1} parent=1 // pred_fallthru
      _
    %4038 = vsyncpa [#allocation4], 1
    %4039 = vsyncpa [#allocation7], 1
    %4040 = vsyncpa [#allocation10], 1
    %4041 = vsyncpa [#allocation13], 1
    %4042 = vsyncpa [#allocation16], 1
    %4043 = vsyncpa [#allocation5], 1

</llo_original>
